<compile_context>
chip_gen: v7x
topology: tpu7x:2x2x1
jax: 0.10.0
libtpu: 0.0.40
codegen_flags: <defaults>
</compile_context>

<pallas_src>
import jax
import jax.numpy as jnp
from jax.experimental import pallas as pl
from jax.experimental.pallas import tpu as pltpu

# ----- model dimensions (small, TPU-friendly) -------------------------------
B, S, D = 2, 8, 256          # batch, seqlen, hidden
H, DH = 2, 128               # attention heads, head_dim (H * DH == D)
I = 512                      # MLP intermediate size
L = 14                       # layers[7:21] -> 14 decoder layers
LP = 2                       # layers processed per grid step
EPS = 1e-6
ROPE_THETA = 10000.0

WCOLS = 3 * D + D + 2 * I    # packed weight columns: qkv | o | gate,up


def _rmsnorm(x, w):
    var = jnp.mean(x * x, axis=-1, keepdims=True)
    return x * jax.lax.rsqrt(var + EPS) * w


def decoder_pair_kernel(hidden_ref, cos_ref, sin_ref, mask_ref,
                        ln_ref, wbig_ref, wd_ref,
                        out_ref, acc_ref):
    step = pl.program_id(0)

    # Seed the resident VMEM accumulator with the stage input on step 0.
    @pl.when(step == 0)
    def _():
        acc_ref[...] = hidden_ref[...]

    cos = cos_ref[...]                     # (B*S, DH) f32
    sin = sin_ref[...]                     # (B*S, DH) f32, rotate_half sign folded in
    mask = mask_ref[...]                   # (B*S, B*S) block-diag causal additive mask

    x = acc_ref[...]                       # carried hidden state, (B*S, D) f32

    for j in range(LP):                    # trace-time unrolled: 2 layers / step
        ln1 = ln_ref[j, 0:1, :]            # (1, D) f32
        ln2 = ln_ref[j, 1:2, :]
        # Packed bf16 weight slab, column slices are 128-lane aligned views.
        wqkv = wbig_ref[j, :, 0:3 * D]             # (D, 3D), q columns pre-scaled
        wo = wbig_ref[j, :, 3 * D:4 * D]           # (D, D)
        wgu = wbig_ref[j, :, 4 * D:WCOLS]          # (D, 2I)
        wd = wd_ref[j]                             # (I, D)

        # ---------------- self-attention ----------------
        xn = _rmsnorm(x, ln1)
        qkv = jnp.dot(xn.astype(jnp.bfloat16), wqkv,
                      preferred_element_type=jnp.float32)       # (B*S, 3D) f32

        head_outs = []
        for h in range(H):                 # trace-time unrolled (H == 2)
            lo = h * DH
            q_h = qkv[:, lo:lo + DH]
            k_h = qkv[:, D + lo:D + lo + DH]
            v_h = qkv[:, 2 * D + lo:2 * D + lo + DH]

            # RoPE: x*cos + rotate_half(x)*sin, rotate_half via lane roll; the
            # +-1 sign of rotate_half is folded into `sin` host-side.
            q_h = q_h * cos + pltpu.roll(q_h, shift=DH // 2, axis=1) * sin
            k_h = k_h * cos + pltpu.roll(k_h, shift=DH // 2, axis=1) * sin

            # Batch-merged attention: (16,128)x(16,128)^T -> (16,16) scores,
            # cross-batch entries killed by the block-diagonal mask.
            # 1/sqrt(DH) already folded into Wq.
            scores = jax.lax.dot_general(
                q_h, k_h, (((1,), (1,)), ((), ())),
                preferred_element_type=jnp.float32)              # (B*S, B*S)
            scores = scores + mask
            m = jnp.max(scores, axis=-1, keepdims=True)
            p = jnp.exp(scores - m)
            p = p * pl.reciprocal(jnp.sum(p, axis=-1, keepdims=True), approx=True)
            head_outs.append(jnp.dot(p, v_h,
                                     preferred_element_type=jnp.float32))

        attn = jnp.concatenate(head_outs, axis=-1)               # (B*S, D)
        attn = jnp.dot(attn.astype(jnp.bfloat16), wo,
                       preferred_element_type=jnp.float32)
        x = x + attn

        # ---------------- MLP (SwiGLU) ----------------
        xn2 = _rmsnorm(x, ln2)
        gu = jnp.dot(xn2.astype(jnp.bfloat16), wgu,
                     preferred_element_type=jnp.float32)         # (B*S, 2I) f32
        g = gu[:, :I]
        u = gu[:, I:]
        mlp = (g * jax.nn.sigmoid(g)) * u                        # SiLU(gate) * up
        mlp = jnp.dot(mlp.astype(jnp.bfloat16), wd,
                      preferred_element_type=jnp.float32)
        x = x + mlp

    acc_ref[...] = x

    # Output window has a constant block index -> written back to HBM once;
    # only fill it on the last step.
    @pl.when(step == pl.num_programs(0) - 1)
    def _():
        out_ref[...] = x


def make_params(key):
    # Deterministic synthetic weights (the real module wraps a checkpoint).
    keys = jax.random.split(key, 7)

    def init(k, shape):
        return jax.random.normal(k, shape, jnp.float32) * 0.02

    scale = 1.0 / (DH ** 0.5)
    wq = init(keys[0], (L, D, D)) * scale          # fold attention scale into Wq
    wk = init(keys[1], (L, D, D))
    wv = init(keys[2], (L, D, D))
    wo = init(keys[3], (L, D, D))
    wg = init(keys[4], (L, D, I))
    wu = init(keys[5], (L, D, I))

    # Single packed bf16 slab per layer: columns [qkv | o | gate,up].
    wbig = jnp.concatenate([wq, wk, wv, wo, wg, wu], axis=-1)    # (L, D, WCOLS)
    ln = jnp.ones((L, 2, D), jnp.float32)                        # [ln1; ln2]

    return dict(
        ln=ln,
        wbig=wbig.astype(jnp.bfloat16),
        wd=init(keys[6], (L, I, D)).astype(jnp.bfloat16),
    )


def rope_tables():
    # Standard HF LLaMA rotary embedding: emb = cat(freqs, freqs)
    inv_freq = 1.0 / (ROPE_THETA ** (jnp.arange(0, DH, 2, dtype=jnp.float32) / DH))
    pos = jnp.arange(S, dtype=jnp.float32)            # position_ids = arange(S)
    freqs = jnp.einsum('s,f->sf', pos, inv_freq)      # (S, DH/2)
    emb = jnp.concatenate([freqs, freqs], axis=-1)    # (S, DH)
    cos, sin = jnp.cos(emb), jnp.sin(emb)
    cos_bs = jnp.tile(cos, (B, 1))                    # (B*S, DH), rows = b*S + s
    sin_bs = jnp.tile(sin, (B, 1))
    # rotate_half(x) == roll(x, DH/2) * sign with sign = [-1]*half ++ [+1]*half;
    # fold the sign into sin so the kernel does a single multiply.
    half = DH // 2
    sign = jnp.concatenate([-jnp.ones((half,), jnp.float32),
                            jnp.ones((half,), jnp.float32)])
    sin_signed = sin_bs * sign[None, :]
    return cos_bs, sin_signed


def block_diag_causal_mask():
    # (B*S, B*S) additive mask: causal within each batch block, -inf across
    # batches. Equivalent to adding the (S,S) causal mask per batch.
    idx = jnp.arange(B * S)
    same_batch = (idx[:, None] // S) == (idx[None, :] // S)
    causal = (idx[:, None] % S) >= (idx[None, :] % S)
    return jnp.where(same_batch & causal, 0.0, float('-inf')).astype(jnp.float32)


def build_forward():
    def const2(shape):
        return pl.BlockSpec(shape, lambda l: (0, 0))

    def layer3(shape):
        return pl.BlockSpec(shape, lambda l: (l, 0, 0))

    kernel = pl.pallas_call(
        decoder_pair_kernel,
        out_shape=jax.ShapeDtypeStruct((B * S, D), jnp.float32),
        grid_spec=pltpu.PrefetchScalarGridSpec(
            num_scalar_prefetch=0,
            grid=(L // LP,),
            in_specs=[
                const2((B * S, D)),            # hidden (used only at step 0)
                const2((B * S, DH)),           # cos
                const2((B * S, DH)),           # sin (sign-folded)
                const2((B * S, B * S)),        # block-diagonal causal mask
                layer3((LP, 2, D)),            # [input_ln; post_attn_ln]
                layer3((LP, D, WCOLS)),        # packed qkv|o|gate,up (bf16)
                layer3((LP, I, D)),            # down_proj (bf16)
            ],
            out_specs=pl.BlockSpec((B * S, D), lambda l: (0, 0)),
            scratch_shapes=[pltpu.VMEM((B * S, D), jnp.float32)],
        ),
        compiler_params=pltpu.CompilerParams(
            dimension_semantics=("arbitrary",),
            vmem_limit_bytes=32 * 1024 * 1024),
    )

    @jax.jit
    def fwd(hidden, params, cos_bs, sin_signed, mask_bd, mask2d):
        h2d = hidden.reshape(B * S, D)
        out2d = kernel(h2d, cos_bs, sin_signed, mask_bd,
                       params['ln'], params['wbig'], params['wd'])
        hidden_out = out2d.reshape(B, S, D)
        # Module returns (hidden.contiguous(), attn_mask) with the 2-D mask
        # expanded to (bsz, 1, S, S).
        attn_mask = jnp.broadcast_to(mask2d[None, None, :, :], (B, 1, S, S))
        return hidden_out, attn_mask

    return fwd


if __name__ == "__main__":
    key = jax.random.PRNGKey(0)
    k_hidden, k_params = jax.random.split(key)

    hidden = jax.random.normal(k_hidden, (B, S, D), jnp.float32)
    # 2-D attn_mask input path of the PyTorch module -> rebuild causal mask.
    mask2d = jnp.triu(jnp.full((S, S), float('-inf'), jnp.float32), k=1)
    mask_bd = block_diag_causal_mask()

    params = make_params(k_params)
    cos_bs, sin_signed = rope_tables()

    fwd = build_forward()
    out_hidden, out_mask = fwd(hidden, params, cos_bs, sin_signed, mask_bd, mask2d)
    jax.block_until_ready(out_hidden)
    jax.block_until_ready(out_mask)
    print("KERNEL_OK")
</pallas_src>

<mosaic_0001>
module attributes {stable_mosaic.version = 11 : i64} {
  func.func @decoder_pair_kernel(%arg0: i32, %arg1: memref<16x256xf32, #tpu.memory_space<vmem>>, %arg2: memref<16x128xf32, #tpu.memory_space<vmem>>, %arg3: memref<16x128xf32, #tpu.memory_space<vmem>>, %arg4: memref<16x16xf32, #tpu.memory_space<vmem>>, %arg5: memref<2x2x256xf32, #tpu.memory_space<vmem>>, %arg6: memref<2x256x2048xbf16, #tpu.memory_space<vmem>>, %arg7: memref<2x512x256xbf16, #tpu.memory_space<vmem>>, %arg8: memref<16x256xf32, #tpu.memory_space<vmem>>, %arg9: memref<16x256xf32, #tpu.memory_space<vmem>>) attributes {dimension_semantics = [#tpu.dimension_semantics<arbitrary>], iteration_bounds = array<i64: 7>, scalar_prefetch = 0 : i64, scratch_operands = 1 : i64, tpu.core_type = #tpu.core_type<tc>, window_params = [{pipeline_mode = #tpu.pipeline_mode<synchronous>, transform_indices = @transform_0, window_bounds = array<i64: 16, 256>}, {pipeline_mode = #tpu.pipeline_mode<synchronous>, transform_indices = @transform_1, window_bounds = array<i64: 16, 128>}, {pipeline_mode = #tpu.pipeline_mode<synchronous>, transform_indices = @transform_2, window_bounds = array<i64: 16, 128>}, {pipeline_mode = #tpu.pipeline_mode<synchronous>, transform_indices = @transform_3, window_bounds = array<i64: 16, 16>}, {transform_indices = @transform_4, window_bounds = array<i64: 2, 2, 256>}, {transform_indices = @transform_5, window_bounds = array<i64: 2, 256, 2048>}, {transform_indices = @transform_6, window_bounds = array<i64: 2, 512, 256>}, {pipeline_mode = #tpu.pipeline_mode<synchronous>, transform_indices = @transform_7, window_bounds = array<i64: 16, 256>}]} {
    %c0_i32 = arith.constant 0 : i32
    %0 = arith.cmpi eq, %arg0, %c0_i32 : i32
    %1 = arith.extui %0 : i1 to i32
    %c0_i32_0 = arith.constant 0 : i32
    %2 = arith.cmpi ne, %1, %c0_i32_0 : i32
    scf.if %2 {
      %c0_88 = arith.constant 0 : index
      %c0_89 = arith.constant 0 : index
      %219 = vector.load %arg1[%c0_88, %c0_89] : memref<16x256xf32, #tpu.memory_space<vmem>>, vector<16x256xf32>
      %c0_90 = arith.constant 0 : index
      %c0_91 = arith.constant 0 : index
      %220 = vector.load %arg9[%c0_90, %c0_91] : memref<16x256xf32, #tpu.memory_space<vmem>>, vector<16x256xf32>
      tpu.vector_store %arg9[%c0_90, %c0_91], %219 {strides = array<i32>} : memref<16x256xf32, #tpu.memory_space<vmem>>, vector<16x256xf32>,
    } else {
    }
    %c0 = arith.constant 0 : index
    %c0_1 = arith.constant 0 : index
    %3 = vector.load %arg2[%c0, %c0_1] : memref<16x128xf32, #tpu.memory_space<vmem>>, vector<16x128xf32>
    %c0_2 = arith.constant 0 : index
    %c0_3 = arith.constant 0 : index
    %4 = vector.load %arg3[%c0_2, %c0_3] : memref<16x128xf32, #tpu.memory_space<vmem>>, vector<16x128xf32>
    %c0_4 = arith.constant 0 : index
    %c0_5 = arith.constant 0 : index
    %5 = vector.load %arg4[%c0_4, %c0_5] : memref<16x16xf32, #tpu.memory_space<vmem>>, vector<16x16xf32>
    %c0_6 = arith.constant 0 : index
    %c0_7 = arith.constant 0 : index
    %6 = vector.load %arg9[%c0_6, %c0_7] : memref<16x256xf32, #tpu.memory_space<vmem>>, vector<16x256xf32>
    %c0_8 = arith.constant 0 : index
    %c0_9 = arith.constant 0 : index
    %c0_10 = arith.constant 0 : index
    %7 = vector.load %arg5[%c0_8, %c0_9, %c0_10] : memref<2x2x256xf32, #tpu.memory_space<vmem>>, vector<1x1x256xf32>
    %8 = vector.shape_cast %7 : vector<1x1x256xf32> to vector<1x256xf32>
    %c0_11 = arith.constant 0 : index
    %c1 = arith.constant 1 : index
    %c0_12 = arith.constant 0 : index
    %9 = vector.load %arg5[%c0_11, %c1, %c0_12] : memref<2x2x256xf32, #tpu.memory_space<vmem>>, vector<1x1x256xf32>
    %10 = vector.shape_cast %9 : vector<1x1x256xf32> to vector<1x256xf32>
    %c0_13 = arith.constant 0 : index
    %c0_14 = arith.constant 0 : index
    %c0_15 = arith.constant 0 : index
    %11 = vector.load %arg6[%c0_13, %c0_14, %c0_15] : memref<2x256x2048xbf16, #tpu.memory_space<vmem>>, vector<1x256x768xbf16>
    %12 = vector.shape_cast %11 : vector<1x256x768xbf16> to vector<256x768xbf16>
    %c0_16 = arith.constant 0 : index
    %c0_17 = arith.constant 0 : index
    %c768 = arith.constant 768 : index
    %13 = vector.load %arg6[%c0_16, %c0_17, %c768] : memref<2x256x2048xbf16, #tpu.memory_space<vmem>>, vector<1x256x256xbf16>
    %14 = vector.shape_cast %13 : vector<1x256x256xbf16> to vector<256x256xbf16>
    %c0_18 = arith.constant 0 : index
    %c0_19 = arith.constant 0 : index
    %c1024 = arith.constant 1024 : index
    %15 = vector.load %arg6[%c0_18, %c0_19, %c1024] : memref<2x256x2048xbf16, #tpu.memory_space<vmem>>, vector<1x256x1024xbf16>
    %16 = vector.shape_cast %15 : vector<1x256x1024xbf16> to vector<256x1024xbf16>
    %c0_20 = arith.constant 0 : index
    %c0_21 = arith.constant 0 : index
    %c0_22 = arith.constant 0 : index
    %17 = vector.load %arg7[%c0_20, %c0_21, %c0_22] : memref<2x512x256xbf16, #tpu.memory_space<vmem>>, vector<1x512x256xbf16>
    %18 = vector.shape_cast %17 : vector<1x512x256xbf16> to vector<512x256xbf16>
    %19 = arith.mulf %6, %6 : vector<16x256xf32>
    %cst = arith.constant dense<0.000000e+00> : vector<16xf32>
    %20 = vector.multi_reduction <add>, %19, %cst [1] : vector<16x256xf32> to vector<16xf32>
    %21 = vector.shape_cast %20 : vector<16xf32> to vector<16x1xf32>
    %cst_23 = arith.constant 2.560000e+02 : f32
    %22 = vector.broadcast %cst_23 : f32 to vector<16x1xf32>
    %23 = arith.divf %21, %22 : vector<16x1xf32>
    %cst_24 = arith.constant 9.99999997E-7 : f32
    %24 = vector.broadcast %cst_24 : f32 to vector<16x1xf32>
    %25 = arith.addf %23, %24 : vector<16x1xf32>
    %26 = math.rsqrt %25 : vector<16x1xf32>
    %27 = vector.broadcast %26 : vector<16x1xf32> to vector<16x256xf32>
    %28 = arith.mulf %6, %27 : vector<16x256xf32>
    %29 = vector.broadcast %8 : vector<1x256xf32> to vector<16x256xf32>
    %30 = arith.mulf %28, %29 : vector<16x256xf32>
    %31 = arith.truncf %30 : vector<16x256xf32> to vector<16x256xbf16>
    %cst_25 = arith.constant dense<0.000000e+00> : vector<16x768xf32>
    %32 = tpu.matmul %31, %12, %cst_25 {dimension_numbers = #tpu.dot_dimension_numbers<[1], [0], [0], [1], [0, 0, 1, 1], [], []>} : vector<16x256xbf16>, vector<256x768xbf16>, vector<16x768xf32> -> vector<16x768xf32>
    %33 = vector.extract_strided_slice %32 {offsets = [0, 0], sizes = [16, 128], strides = [1, 1]} : vector<16x768xf32> to vector<16x128xf32>
    %34 = vector.extract_strided_slice %32 {offsets = [0, 256], sizes = [16, 128], strides = [1, 1]} : vector<16x768xf32> to vector<16x128xf32>
    %35 = vector.extract_strided_slice %32 {offsets = [0, 512], sizes = [16, 128], strides = [1, 1]} : vector<16x768xf32> to vector<16x128xf32>
    %36 = arith.mulf %33, %3 : vector<16x128xf32>
    %c64_i32 = arith.constant 64 : i32
    %37 = tpu.dynamic_rotate %33 by %c64_i32 dim 1 : vector<16x128xf32>, i32 -> vector<16x128xf32>
    %38 = arith.mulf %37, %4 : vector<16x128xf32>
    %39 = arith.addf %36, %38 : vector<16x128xf32>
    %40 = arith.mulf %34, %3 : vector<16x128xf32>
    %c64_i32_26 = arith.constant 64 : i32
    %41 = tpu.dynamic_rotate %34 by %c64_i32_26 dim 1 : vector<16x128xf32>, i32 -> vector<16x128xf32>
    %42 = arith.mulf %41, %4 : vector<16x128xf32>
    %43 = arith.addf %40, %42 : vector<16x128xf32>
    %cst_27 = arith.constant dense<0.000000e+00> : vector<16x16xf32>
    %44 = tpu.matmul %39, %43, %cst_27 {dimension_numbers = #tpu.dot_dimension_numbers<[1], [1], [0], [0], [0, 0, 1, 0], [], []>} : vector<16x128xf32>, vector<16x128xf32>, vector<16x16xf32> -> vector<16x16xf32>
    %45 = arith.addf %44, %5 : vector<16x16xf32>
    %cst_28 = arith.constant dense<0xFF800000> : vector<16xf32>
    %46 = vector.multi_reduction <maximumf>, %45, %cst_28 [1] : vector<16x16xf32> to vector<16xf32>
    %47 = vector.shape_cast %46 : vector<16xf32> to vector<16x1xf32>
    %48 = vector.broadcast %47 : vector<16x1xf32> to vector<16x16xf32>
    %49 = arith.subf %45, %48 : vector<16x16xf32>
    %50 = math.exp %49 : vector<16x16xf32>
    %cst_29 = arith.constant dense<0.000000e+00> : vector<16xf32>
    %51 = vector.multi_reduction <add>, %50, %cst_29 [1] : vector<16x16xf32> to vector<16xf32>
    %52 = vector.shape_cast %51 : vector<16xf32> to vector<16x1xf32>
    %53 = tpu.reciprocal %52 {approx = true} : vector<16x1xf32> -> vector<16x1xf32>
    %54 = vector.broadcast %53 : vector<16x1xf32> to vector<16x16xf32>
    %55 = arith.mulf %50, %54 : vector<16x16xf32>
    %cst_30 = arith.constant dense<0.000000e+00> : vector<16x128xf32>
    %56 = tpu.matmul %55, %35, %cst_30 {dimension_numbers = #tpu.dot_dimension_numbers<[1], [0], [0], [1], [0, 0, 1, 1], [], []>} : vector<16x16xf32>, vector<16x128xf32>, vector<16x128xf32> -> vector<16x128xf32>
    %57 = vector.extract_strided_slice %32 {offsets = [0, 128], sizes = [16, 128], strides = [1, 1]} : vector<16x768xf32> to vector<16x128xf32>
    %58 = vector.extract_strided_slice %32 {offsets = [0, 384], sizes = [16, 128], strides = [1, 1]} : vector<16x768xf32> to vector<16x128xf32>
    %59 = vector.extract_strided_slice %32 {offsets = [0, 640], sizes = [16, 128], strides = [1, 1]} : vector<16x768xf32> to vector<16x128xf32>
    %60 = arith.mulf %57, %3 : vector<16x128xf32>
    %c64_i32_31 = arith.constant 64 : i32
    %61 = tpu.dynamic_rotate %57 by %c64_i32_31 dim 1 : vector<16x128xf32>, i32 -> vector<16x128xf32>
    %62 = arith.mulf %61, %4 : vector<16x128xf32>
    %63 = arith.addf %60, %62 : vector<16x128xf32>
    %64 = arith.mulf %58, %3 : vector<16x128xf32>
    %c64_i32_32 = arith.constant 64 : i32
    %65 = tpu.dynamic_rotate %58 by %c64_i32_32 dim 1 : vector<16x128xf32>, i32 -> vector<16x128xf32>
    %66 = arith.mulf %65, %4 : vector<16x128xf32>
    %67 = arith.addf %64, %66 : vector<16x128xf32>
    %cst_33 = arith.constant dense<0.000000e+00> : vector<16x16xf32>
    %68 = tpu.matmul %63, %67, %cst_33 {dimension_numbers = #tpu.dot_dimension_numbers<[1], [1], [0], [0], [0, 0, 1, 0], [], []>} : vector<16x128xf32>, vector<16x128xf32>, vector<16x16xf32> -> vector<16x16xf32>
    %69 = arith.addf %68, %5 : vector<16x16xf32>
    %cst_34 = arith.constant dense<0xFF800000> : vector<16xf32>
    %70 = vector.multi_reduction <maximumf>, %69, %cst_34 [1] : vector<16x16xf32> to vector<16xf32>
    %71 = vector.shape_cast %70 : vector<16xf32> to vector<16x1xf32>
    %72 = vector.broadcast %71 : vector<16x1xf32> to vector<16x16xf32>
    %73 = arith.subf %69, %72 : vector<16x16xf32>
    %74 = math.exp %73 : vector<16x16xf32>
    %cst_35 = arith.constant dense<0.000000e+00> : vector<16xf32>
    %75 = vector.multi_reduction <add>, %74, %cst_35 [1] : vector<16x16xf32> to vector<16xf32>
    %76 = vector.shape_cast %75 : vector<16xf32> to vector<16x1xf32>
    %77 = tpu.reciprocal %76 {approx = true} : vector<16x1xf32> -> vector<16x1xf32>
    %78 = vector.broadcast %77 : vector<16x1xf32> to vector<16x16xf32>
    %79 = arith.mulf %74, %78 : vector<16x16xf32>
    %cst_36 = arith.constant dense<0.000000e+00> : vector<16x128xf32>
    %80 = tpu.matmul %79, %59, %cst_36 {dimension_numbers = #tpu.dot_dimension_numbers<[1], [0], [0], [1], [0, 0, 1, 1], [], []>} : vector<16x16xf32>, vector<16x128xf32>, vector<16x128xf32> -> vector<16x128xf32>
    %81 = tpu.concatenate %56, %80 in 1 : vector<16x128xf32>, vector<16x128xf32> -> vector<16x256xf32>
    %82 = arith.truncf %81 : vector<16x256xf32> to vector<16x256xbf16>
    %cst_37 = arith.constant dense<0.000000e+00> : vector<16x256xf32>
    %83 = tpu.matmul %82, %14, %cst_37 {dimension_numbers = #tpu.dot_dimension_numbers<[1], [0], [0], [1], [0, 0, 1, 1], [], []>} : vector<16x256xbf16>, vector<256x256xbf16>, vector<16x256xf32> -> vector<16x256xf32>
    %84 = arith.addf %6, %83 : vector<16x256xf32>
    %85 = arith.mulf %84, %84 : vector<16x256xf32>
    %cst_38 = arith.constant dense<0.000000e+00> : vector<16xf32>
    %86 = vector.multi_reduction <add>, %85, %cst_38 [1] : vector<16x256xf32> to vector<16xf32>
    %87 = vector.shape_cast %86 : vector<16xf32> to vector<16x1xf32>
    %cst_39 = arith.constant 2.560000e+02 : f32
    %88 = vector.broadcast %cst_39 : f32 to vector<16x1xf32>
    %89 = arith.divf %87, %88 : vector<16x1xf32>
    %cst_40 = arith.constant 9.99999997E-7 : f32
    %90 = vector.broadcast %cst_40 : f32 to vector<16x1xf32>
    %91 = arith.addf %89, %90 : vector<16x1xf32>
    %92 = math.rsqrt %91 : vector<16x1xf32>
    %93 = vector.broadcast %92 : vector<16x1xf32> to vector<16x256xf32>
    %94 = arith.mulf %84, %93 : vector<16x256xf32>
    %95 = vector.broadcast %10 : vector<1x256xf32> to vector<16x256xf32>
    %96 = arith.mulf %94, %95 : vector<16x256xf32>
    %97 = arith.truncf %96 : vector<16x256xf32> to vector<16x256xbf16>
    %cst_41 = arith.constant dense<0.000000e+00> : vector<16x1024xf32>
    %98 = tpu.matmul %97, %16, %cst_41 {dimension_numbers = #tpu.dot_dimension_numbers<[1], [0], [0], [1], [0, 0, 1, 1], [], []>} : vector<16x256xbf16>, vector<256x1024xbf16>, vector<16x1024xf32> -> vector<16x1024xf32>
    %99 = vector.extract_strided_slice %98 {offsets = [0, 0], sizes = [16, 512], strides = [1, 1]} : vector<16x1024xf32> to vector<16x512xf32>
    %100 = vector.extract_strided_slice %98 {offsets = [0, 512], sizes = [16, 512], strides = [1, 1]} : vector<16x1024xf32> to vector<16x512xf32>
    %101 = arith.negf %99 : vector<16x512xf32>
    %102 = math.exp %101 : vector<16x512xf32>
    %cst_42 = arith.constant 1.000000e+00 : f32
    %103 = vector.broadcast %cst_42 : f32 to vector<16x512xf32>
    %104 = arith.addf %103, %102 : vector<16x512xf32>
    %105 = arith.divf %103, %104 : vector<16x512xf32>
    %106 = arith.mulf %99, %105 : vector<16x512xf32>
    %107 = arith.mulf %106, %100 : vector<16x512xf32>
    %108 = arith.truncf %107 : vector<16x512xf32> to vector<16x512xbf16>
    %cst_43 = arith.constant dense<0.000000e+00> : vector<16x256xf32>
    %109 = tpu.matmul %108, %18, %cst_43 {dimension_numbers = #tpu.dot_dimension_numbers<[1], [0], [0], [1], [0, 0, 1, 1], [], []>} : vector<16x512xbf16>, vector<512x256xbf16>, vector<16x256xf32> -> vector<16x256xf32>
    %110 = arith.addf %84, %109 : vector<16x256xf32>
    %c1_44 = arith.constant 1 : index
    %c0_45 = arith.constant 0 : index
    %c0_46 = arith.constant 0 : index
    %111 = vector.load %arg5[%c1_44, %c0_45, %c0_46] : memref<2x2x256xf32, #tpu.memory_space<vmem>>, vector<1x1x256xf32>
    %112 = vector.shape_cast %111 : vector<1x1x256xf32> to vector<1x256xf32>
    %c1_47 = arith.constant 1 : index
    %c1_48 = arith.constant 1 : index
    %c0_49 = arith.constant 0 : index
    %113 = vector.load %arg5[%c1_47, %c1_48, %c0_49] : memref<2x2x256xf32, #tpu.memory_space<vmem>>, vector<1x1x256xf32>
    %114 = vector.shape_cast %113 : vector<1x1x256xf32> to vector<1x256xf32>
    %c1_50 = arith.constant 1 : index
    %c0_51 = arith.constant 0 : index
    %c0_52 = arith.constant 0 : index
    %115 = vector.load %arg6[%c1_50, %c0_51, %c0_52] : memref<2x256x2048xbf16, #tpu.memory_space<vmem>>, vector<1x256x768xbf16>
    %116 = vector.shape_cast %115 : vector<1x256x768xbf16> to vector<256x768xbf16>
    %c1_53 = arith.constant 1 : index
    %c0_54 = arith.constant 0 : index
    %c768_55 = arith.constant 768 : index
    %117 = vector.load %arg6[%c1_53, %c0_54, %c768_55] : memref<2x256x2048xbf16, #tpu.memory_space<vmem>>, vector<1x256x256xbf16>
    %118 = vector.shape_cast %117 : vector<1x256x256xbf16> to vector<256x256xbf16>
    %c1_56 = arith.constant 1 : index
    %c0_57 = arith.constant 0 : index
    %c1024_58 = arith.constant 1024 : index
    %119 = vector.load %arg6[%c1_56, %c0_57, %c1024_58] : memref<2x256x2048xbf16, #tpu.memory_space<vmem>>, vector<1x256x1024xbf16>
    %120 = vector.shape_cast %119 : vector<1x256x1024xbf16> to vector<256x1024xbf16>
    %c1_59 = arith.constant 1 : index
    %c0_60 = arith.constant 0 : index
    %c0_61 = arith.constant 0 : index
    %121 = vector.load %arg7[%c1_59, %c0_60, %c0_61] : memref<2x512x256xbf16, #tpu.memory_space<vmem>>, vector<1x512x256xbf16>
    %122 = vector.shape_cast %121 : vector<1x512x256xbf16> to vector<512x256xbf16>
    %123 = arith.mulf %110, %110 : vector<16x256xf32>
    %cst_62 = arith.constant dense<0.000000e+00> : vector<16xf32>
    %124 = vector.multi_reduction <add>, %123, %cst_62 [1] : vector<16x256xf32> to vector<16xf32>
    %125 = vector.shape_cast %124 : vector<16xf32> to vector<16x1xf32>
    %cst_63 = arith.constant 2.560000e+02 : f32
    %126 = vector.broadcast %cst_63 : f32 to vector<16x1xf32>
    %127 = arith.divf %125, %126 : vector<16x1xf32>
    %cst_64 = arith.constant 9.99999997E-7 : f32
    %128 = vector.broadcast %cst_64 : f32 to vector<16x1xf32>
    %129 = arith.addf %127, %128 : vector<16x1xf32>
    %130 = math.rsqrt %129 : vector<16x1xf32>
    %131 = vector.broadcast %130 : vector<16x1xf32> to vector<16x256xf32>
    %132 = arith.mulf %110, %131 : vector<16x256xf32>
    %133 = vector.broadcast %112 : vector<1x256xf32> to vector<16x256xf32>
    %134 = arith.mulf %132, %133 : vector<16x256xf32>
    %135 = arith.truncf %134 : vector<16x256xf32> to vector<16x256xbf16>
    %cst_65 = arith.constant dense<0.000000e+00> : vector<16x768xf32>
    %136 = tpu.matmul %135, %116, %cst_65 {dimension_numbers = #tpu.dot_dimension_numbers<[1], [0], [0], [1], [0, 0, 1, 1], [], []>} : vector<16x256xbf16>, vector<256x768xbf16>, vector<16x768xf32> -> vector<16x768xf32>
    %137 = vector.extract_strided_slice %136 {offsets = [0, 0], sizes = [16, 128], strides = [1, 1]} : vector<16x768xf32> to vector<16x128xf32>
    %138 = vector.extract_strided_slice %136 {offsets = [0, 256], sizes = [16, 128], strides = [1, 1]} : vector<16x768xf32> to vector<16x128xf32>
    %139 = vector.extract_strided_slice %136 {offsets = [0, 512], sizes = [16, 128], strides = [1, 1]} : vector<16x768xf32> to vector<16x128xf32>
    %140 = arith.mulf %137, %3 : vector<16x128xf32>
    %c64_i32_66 = arith.constant 64 : i32
    %141 = tpu.dynamic_rotate %137 by %c64_i32_66 dim 1 : vector<16x128xf32>, i32 -> vector<16x128xf32>
    %142 = arith.mulf %141, %4 : vector<16x128xf32>
    %143 = arith.addf %140, %142 : vector<16x128xf32>
    %144 = arith.mulf %138, %3 : vector<16x128xf32>
    %c64_i32_67 = arith.constant 64 : i32
    %145 = tpu.dynamic_rotate %138 by %c64_i32_67 dim 1 : vector<16x128xf32>, i32 -> vector<16x128xf32>
    %146 = arith.mulf %145, %4 : vector<16x128xf32>
    %147 = arith.addf %144, %146 : vector<16x128xf32>
    %cst_68 = arith.constant dense<0.000000e+00> : vector<16x16xf32>
    %148 = tpu.matmul %143, %147, %cst_68 {dimension_numbers = #tpu.dot_dimension_numbers<[1], [1], [0], [0], [0, 0, 1, 0], [], []>} : vector<16x128xf32>, vector<16x128xf32>, vector<16x16xf32> -> vector<16x16xf32>
    %149 = arith.addf %148, %5 : vector<16x16xf32>
    %cst_69 = arith.constant dense<0xFF800000> : vector<16xf32>
    %150 = vector.multi_reduction <maximumf>, %149, %cst_69 [1] : vector<16x16xf32> to vector<16xf32>
    %151 = vector.shape_cast %150 : vector<16xf32> to vector<16x1xf32>
    %152 = vector.broadcast %151 : vector<16x1xf32> to vector<16x16xf32>
    %153 = arith.subf %149, %152 : vector<16x16xf32>
    %154 = math.exp %153 : vector<16x16xf32>
    %cst_70 = arith.constant dense<0.000000e+00> : vector<16xf32>
    %155 = vector.multi_reduction <add>, %154, %cst_70 [1] : vector<16x16xf32> to vector<16xf32>
    %156 = vector.shape_cast %155 : vector<16xf32> to vector<16x1xf32>
    %157 = tpu.reciprocal %156 {approx = true} : vector<16x1xf32> -> vector<16x1xf32>
    %158 = vector.broadcast %157 : vector<16x1xf32> to vector<16x16xf32>
    %159 = arith.mulf %154, %158 : vector<16x16xf32>
    %cst_71 = arith.constant dense<0.000000e+00> : vector<16x128xf32>
    %160 = tpu.matmul %159, %139, %cst_71 {dimension_numbers = #tpu.dot_dimension_numbers<[1], [0], [0], [1], [0, 0, 1, 1], [], []>} : vector<16x16xf32>, vector<16x128xf32>, vector<16x128xf32> -> vector<16x128xf32>
    %161 = vector.extract_strided_slice %136 {offsets = [0, 128], sizes = [16, 128], strides = [1, 1]} : vector<16x768xf32> to vector<16x128xf32>
    %162 = vector.extract_strided_slice %136 {offsets = [0, 384], sizes = [16, 128], strides = [1, 1]} : vector<16x768xf32> to vector<16x128xf32>
    %163 = vector.extract_strided_slice %136 {offsets = [0, 640], sizes = [16, 128], strides = [1, 1]} : vector<16x768xf32> to vector<16x128xf32>
    %164 = arith.mulf %161, %3 : vector<16x128xf32>
    %c64_i32_72 = arith.constant 64 : i32
    %165 = tpu.dynamic_rotate %161 by %c64_i32_72 dim 1 : vector<16x128xf32>, i32 -> vector<16x128xf32>
    %166 = arith.mulf %165, %4 : vector<16x128xf32>
    %167 = arith.addf %164, %166 : vector<16x128xf32>
    %168 = arith.mulf %162, %3 : vector<16x128xf32>
    %c64_i32_73 = arith.constant 64 : i32
    %169 = tpu.dynamic_rotate %162 by %c64_i32_73 dim 1 : vector<16x128xf32>, i32 -> vector<16x128xf32>
    %170 = arith.mulf %169, %4 : vector<16x128xf32>
    %171 = arith.addf %168, %170 : vector<16x128xf32>
    %cst_74 = arith.constant dense<0.000000e+00> : vector<16x16xf32>
    %172 = tpu.matmul %167, %171, %cst_74 {dimension_numbers = #tpu.dot_dimension_numbers<[1], [1], [0], [0], [0, 0, 1, 0], [], []>} : vector<16x128xf32>, vector<16x128xf32>, vector<16x16xf32> -> vector<16x16xf32>
    %173 = arith.addf %172, %5 : vector<16x16xf32>
    %cst_75 = arith.constant dense<0xFF800000> : vector<16xf32>
    %174 = vector.multi_reduction <maximumf>, %173, %cst_75 [1] : vector<16x16xf32> to vector<16xf32>
    %175 = vector.shape_cast %174 : vector<16xf32> to vector<16x1xf32>
    %176 = vector.broadcast %175 : vector<16x1xf32> to vector<16x16xf32>
    %177 = arith.subf %173, %176 : vector<16x16xf32>
    %178 = math.exp %177 : vector<16x16xf32>
    %cst_76 = arith.constant dense<0.000000e+00> : vector<16xf32>
    %179 = vector.multi_reduction <add>, %178, %cst_76 [1] : vector<16x16xf32> to vector<16xf32>
    %180 = vector.shape_cast %179 : vector<16xf32> to vector<16x1xf32>
    %181 = tpu.reciprocal %180 {approx = true} : vector<16x1xf32> -> vector<16x1xf32>
    %182 = vector.broadcast %181 : vector<16x1xf32> to vector<16x16xf32>
    %183 = arith.mulf %178, %182 : vector<16x16xf32>
    %cst_77 = arith.constant dense<0.000000e+00> : vector<16x128xf32>
    %184 = tpu.matmul %183, %163, %cst_77 {dimension_numbers = #tpu.dot_dimension_numbers<[1], [0], [0], [1], [0, 0, 1, 1], [], []>} : vector<16x16xf32>, vector<16x128xf32>, vector<16x128xf32> -> vector<16x128xf32>
    %185 = tpu.concatenate %160, %184 in 1 : vector<16x128xf32>, vector<16x128xf32> -> vector<16x256xf32>
    %186 = arith.truncf %185 : vector<16x256xf32> to vector<16x256xbf16>
    %cst_78 = arith.constant dense<0.000000e+00> : vector<16x256xf32>
    %187 = tpu.matmul %186, %118, %cst_78 {dimension_numbers = #tpu.dot_dimension_numbers<[1], [0], [0], [1], [0, 0, 1, 1], [], []>} : vector<16x256xbf16>, vector<256x256xbf16>, vector<16x256xf32> -> vector<16x256xf32>
    %188 = arith.addf %110, %187 : vector<16x256xf32>
    %189 = arith.mulf %188, %188 : vector<16x256xf32>
    %cst_79 = arith.constant dense<0.000000e+00> : vector<16xf32>
    %190 = vector.multi_reduction <add>, %189, %cst_79 [1] : vector<16x256xf32> to vector<16xf32>
    %191 = vector.shape_cast %190 : vector<16xf32> to vector<16x1xf32>
    %cst_80 = arith.constant 2.560000e+02 : f32
    %192 = vector.broadcast %cst_80 : f32 to vector<16x1xf32>
    %193 = arith.divf %191, %192 : vector<16x1xf32>
    %cst_81 = arith.constant 9.99999997E-7 : f32
    %194 = vector.broadcast %cst_81 : f32 to vector<16x1xf32>
    %195 = arith.addf %193, %194 : vector<16x1xf32>
    %196 = math.rsqrt %195 : vector<16x1xf32>
    %197 = vector.broadcast %196 : vector<16x1xf32> to vector<16x256xf32>
    %198 = arith.mulf %188, %197 : vector<16x256xf32>
    %199 = vector.broadcast %114 : vector<1x256xf32> to vector<16x256xf32>
    %200 = arith.mulf %198, %199 : vector<16x256xf32>
    %201 = arith.truncf %200 : vector<16x256xf32> to vector<16x256xbf16>
    %cst_82 = arith.constant dense<0.000000e+00> : vector<16x1024xf32>
    %202 = tpu.matmul %201, %120, %cst_82 {dimension_numbers = #tpu.dot_dimension_numbers<[1], [0], [0], [1], [0, 0, 1, 1], [], []>} : vector<16x256xbf16>, vector<256x1024xbf16>, vector<16x1024xf32> -> vector<16x1024xf32>
    %203 = vector.extract_strided_slice %202 {offsets = [0, 0], sizes = [16, 512], strides = [1, 1]} : vector<16x1024xf32> to vector<16x512xf32>
    %204 = vector.extract_strided_slice %202 {offsets = [0, 512], sizes = [16, 512], strides = [1, 1]} : vector<16x1024xf32> to vector<16x512xf32>
    %205 = arith.negf %203 : vector<16x512xf32>
    %206 = math.exp %205 : vector<16x512xf32>
    %cst_83 = arith.constant 1.000000e+00 : f32
    %207 = vector.broadcast %cst_83 : f32 to vector<16x512xf32>
    %208 = arith.addf %207, %206 : vector<16x512xf32>
    %209 = arith.divf %207, %208 : vector<16x512xf32>
    %210 = arith.mulf %203, %209 : vector<16x512xf32>
    %211 = arith.mulf %210, %204 : vector<16x512xf32>
    %212 = arith.truncf %211 : vector<16x512xf32> to vector<16x512xbf16>
    %cst_84 = arith.constant dense<0.000000e+00> : vector<16x256xf32>
    %213 = tpu.matmul %212, %122, %cst_84 {dimension_numbers = #tpu.dot_dimension_numbers<[1], [0], [0], [1], [0, 0, 1, 1], [], []>} : vector<16x512xbf16>, vector<512x256xbf16>, vector<16x256xf32> -> vector<16x256xf32>
    %214 = arith.addf %188, %213 : vector<16x256xf32>
    %c0_85 = arith.constant 0 : index
    %c0_86 = arith.constant 0 : index
    %215 = vector.load %arg9[%c0_85, %c0_86] : memref<16x256xf32, #tpu.memory_space<vmem>>, vector<16x256xf32>
    tpu.vector_store %arg9[%c0_85, %c0_86], %214 {strides = array<i32>} : memref<16x256xf32, #tpu.memory_space<vmem>>, vector<16x256xf32>,
    %c6_i32 = arith.constant 6 : i32
    %216 = arith.cmpi eq, %arg0, %c6_i32 : i32
    %217 = arith.extui %216 : i1 to i32
    %c0_i32_87 = arith.constant 0 : i32
    %218 = arith.cmpi ne, %217, %c0_i32_87 : i32
    scf.if %218 {
      %c0_88 = arith.constant 0 : index
      %c0_89 = arith.constant 0 : index
      %219 = vector.load %arg8[%c0_88, %c0_89] : memref<16x256xf32, #tpu.memory_space<vmem>>, vector<16x256xf32>
      tpu.vector_store %arg8[%c0_88, %c0_89], %214 {strides = array<i32>} : memref<16x256xf32, #tpu.memory_space<vmem>>, vector<16x256xf32>,
    } else {
    }
    return
  }
  func.func @transform_0(%arg0: i32) -> (i32, i32) {
    %c0_i32 = arith.constant 0 : i32
    %c0_i32_0 = arith.constant 0 : i32
    %c0_i32_1 = arith.constant 0 : i32
    return %c0_i32, %c0_i32_0 : i32, i32
  }
  func.func @transform_1(%arg0: i32) -> (i32, i32) {
    %c0_i32 = arith.constant 0 : i32
    %c0_i32_0 = arith.constant 0 : i32
    %c0_i32_1 = arith.constant 0 : i32
    return %c0_i32, %c0_i32_0 : i32, i32
  }
  func.func @transform_2(%arg0: i32) -> (i32, i32) {
    %c0_i32 = arith.constant 0 : i32
    %c0_i32_0 = arith.constant 0 : i32
    %c0_i32_1 = arith.constant 0 : i32
    return %c0_i32, %c0_i32_0 : i32, i32
  }
  func.func @transform_3(%arg0: i32) -> (i32, i32) {
    %c0_i32 = arith.constant 0 : i32
    %c0_i32_0 = arith.constant 0 : i32
    %c0_i32_1 = arith.constant 0 : i32
    return %c0_i32, %c0_i32_0 : i32, i32
  }
  func.func @transform_4(%arg0: i32) -> (i32, i32, i32) {
    %c0_i32 = arith.constant 0 : i32
    %c0_i32_0 = arith.constant 0 : i32
    %c0_i32_1 = arith.constant 0 : i32
    return %arg0, %c0_i32, %c0_i32_0 : i32, i32, i32
  }
  func.func @transform_5(%arg0: i32) -> (i32, i32, i32) {
    %c0_i32 = arith.constant 0 : i32
    %c0_i32_0 = arith.constant 0 : i32
    %c0_i32_1 = arith.constant 0 : i32
    return %arg0, %c0_i32, %c0_i32_0 : i32, i32, i32
  }
  func.func @transform_6(%arg0: i32) -> (i32, i32, i32) {
    %c0_i32 = arith.constant 0 : i32
    %c0_i32_0 = arith.constant 0 : i32
    %c0_i32_1 = arith.constant 0 : i32
    return %arg0, %c0_i32, %c0_i32_0 : i32, i32, i32
  }
  func.func @transform_7(%arg0: i32) -> (i32, i32) {
    %c0_i32 = arith.constant 0 : i32
    %c0_i32_0 = arith.constant 0 : i32
    %c0_i32_1 = arith.constant 0 : i32
    return %c0_i32, %c0_i32_0 : i32, i32
  }
}

</mosaic_0001>

<llo_original>
// kernel: fwd.1
$region0: #{fwd.1}
  #allocation0 [shape = 'u32[]', space=smem, size = 0x4, offset = 0x4, fixed_abs, tag = 'smem constant byte address 0x4 - core index']
  #allocation1 [shape = 'u32[144,128]{1,0:T(1,128)}', space=vmem, size = 0x12000, scoped, tag = 'internal scratch']
  #allocation2 [shape = 'f32[16,256]{1,0:T(8,128)}', space=vmem, size = 0x4000, scoped, tag = 'scratch operand']
  %s0 = inlined_call_operand.hbm [shape: f32[16,256], index: 0, kind: input, shape index: {}]
  %s1 = inlined_call_operand.hbm [shape: f32[16,128], index: 1, kind: input, shape index: {}]
  %s2 = inlined_call_operand.hbm [shape: f32[16,128], index: 2, kind: input, shape index: {}]
  %s3 = inlined_call_operand.hbm [shape: f32[16,16], index: 3, kind: input, shape index: {}]
  %s4 = inlined_call_operand.hbm [shape: f32[14,2,256], index: 4, kind: input, shape index: {}]
  %s5 = inlined_call_operand.hbm [shape: bf16[14,256,2048], index: 5, kind: input, shape index: {}]
  %s6 = inlined_call_operand.hbm [shape: bf16[14,512,256], index: 6, kind: input, shape index: {}]
  %s7 = inlined_call_operand.hbm [shape: f32[16,256], index: 7, kind: output, shape index: {}]
  %s8 = sld [smem:[#allocation0]]
  $region97: #{fwd.1} parent=0
    _
  %s10 = ssub.s32 1, %s8
  %s11 = scalar_select 0, %s10, %s8
  $region1: #{fwd.1} parent=0
    #allocation3 [shape = 'u8[16384]{0}', space=vmem, size = 0x4000, scoped, tag = 'input window, operand 0, single buffered']
    #allocation4 [shape = 's32[2]{0}', space=sflag, size = 0x8, scoped, tag = 'scoped memory for fwd.1']
    #allocation5 [shape = 's32[2]{0}', space=sflag, size = 0x8, scoped, tag = 'scoped memory for fwd.1']
    #allocation6 [shape = 'u8[8192]{0}', space=vmem, size = 0x2000, scoped, tag = 'input window, operand 1, single buffered']
    #allocation7 [shape = 's32[1]{0}', space=sflag, size = 0x4, scoped, tag = 'scoped memory for fwd.1']
    #allocation8 [shape = 'u8[8192]{0}', space=vmem, size = 0x2000, scoped, tag = 'input window, operand 2, single buffered']
    #allocation9 [shape = 'u8[8192]{0}', space=vmem, size = 0x2000, scoped, tag = 'input window, operand 3, single buffered']
    #allocation10 [shape = 's32[1]{0}', space=sflag, size = 0x4, scoped, tag = 'scoped memory for fwd.1']
    #allocation11 [shape = 'u8[8192]{0}', space=vmem, size = 0x2000, scoped, tag = 'input window, operand 4']
    #allocation12 [shape = 'u8[4194304]{0}', space=vmem, size = 0x400000, scoped, tag = 'input window, operand 5']
    #allocation13 [shape = 'u8[1048576]{0}', space=vmem, size = 0x100000, scoped, tag = 'input window, operand 6']
    #allocation14 [shape = 'u8[16384]{0}', space=vmem, size = 0x4000, scoped, tag = 'output window, operand 0, single buffered']
    %12 = vsyncpa [#allocation4], 0
    %13 = vsyncpa [#allocation7], 0
    %14 = vsyncpa [#allocation10], 0
    %15 = vsyncpa [#allocation5], 0
    loop: start=0, step=1, limit=9
    $region2: #{fwd.1} parent=1 // loop_pre_header
      _
    $region3: #{fwd.1} parent=1 // loop_header
      %s17 = sphi 0, %s21
      %p18 = scmp.ge.s32.totalorder %s17, 9
      %s25 = sphi 0, %s25
      %s27 = sphi 0, %s25
      %s28 = sphi 0, %s27
      %s42 = sphi 0, %s28
      %s46 = sphi 0, %s46
      %s48 = sphi 0, %s46
      %s49 = sphi 0, %s48
      %s63 = sphi 0, %s49
      %s67 = sphi 0, %s67
      %s69 = sphi 0, %s67
      %s70 = sphi 0, %s69
      %s84 = sphi 0, %s70
      %s88 = sphi 0, %s88
      %s90 = sphi 0, %s88
      %s91 = sphi 0, %s90
      %s105 = sphi 0, %s91
      %s111 = sphi 0, %s113
      %s114 = sphi 0, %s111
      %s115 = sphi 0, %s114
      %s131 = sphi 0, %s115
      %s137 = sphi 0, %s139
      %s140 = sphi 0, %s137
      %s141 = sphi 0, %s140
      %s157 = sphi 0, %s141
      %s163 = sphi 0, %s165
      %s166 = sphi 0, %s163
      %s167 = sphi 0, %s166
      %s183 = sphi 0, %s167
      %s187 = sphi 0, %s187
      %s189 = sphi 0, %s187
      %s190 = sphi 0, %s189
      %s204 = sphi 0, %s190
    $region4: #{fwd.1} parent=1 // loop_header_branch
      %20 = sbr.rel (%p18) target = $region8
    $region5: #{fwd.1} parent=1 // loop_body
      %s22 = ssub.s32 %s17, 1
      %s23 = ssub.s32 %s17, 2
      %s24 = sadd.s32 %s17, 1
      %s26 = sadd.s32 %s25, 1
      %p29 = scmp.eq.s32.totalorder %s17, 6
      %p30 = scmp.ne.s32.totalorder %s25, %s27
      %p31 = scmp.eq.s32.totalorder %s17, 0
      %p32 = por %p30, %p31
      %p33 = scmp.ne.s32.totalorder %s25, %s27
      %p34 = scmp.eq.s32.totalorder %s22, 6
      %p35 = por %p33, %p34
      %p36 = scmp.ne.s32.totalorder %s27, %s28
      %p37 = scmp.eq.s32.totalorder %s22, 0
      %p38 = por %p36, %p37
      %p39 = scmp.ne.s32.totalorder %s27, %s28
      %p40 = scmp.eq.s32.totalorder %s23, 6
      %p41 = por %p39, %p40
      %p43 = scmp.ne.s32.totalorder %s28, %s42
      %p44 = scmp.eq.s32.totalorder %s23, 0
      %p45 = por %p43, %p44
      %s47 = sadd.s32 %s46, 1
      %p50 = scmp.eq.s32.totalorder %s17, 6
      %p51 = scmp.ne.s32.totalorder %s46, %s48
      %p52 = scmp.eq.s32.totalorder %s17, 0
      %p53 = por %p51, %p52
      %p54 = scmp.ne.s32.totalorder %s46, %s48
      %p55 = scmp.eq.s32.totalorder %s22, 6
      %p56 = por %p54, %p55
      %p57 = scmp.ne.s32.totalorder %s48, %s49
      %p58 = scmp.eq.s32.totalorder %s22, 0
      %p59 = por %p57, %p58
      %p60 = scmp.ne.s32.totalorder %s48, %s49
      %p61 = scmp.eq.s32.totalorder %s23, 6
      %p62 = por %p60, %p61
      %p64 = scmp.ne.s32.totalorder %s49, %s63
      %p65 = scmp.eq.s32.totalorder %s23, 0
      %p66 = por %p64, %p65
      %s68 = sadd.s32 %s67, 1
      %p71 = scmp.eq.s32.totalorder %s17, 6
      %p72 = scmp.ne.s32.totalorder %s67, %s69
      %p73 = scmp.eq.s32.totalorder %s17, 0
      %p74 = por %p72, %p73
      %p75 = scmp.ne.s32.totalorder %s67, %s69
      %p76 = scmp.eq.s32.totalorder %s22, 6
      %p77 = por %p75, %p76
      %p78 = scmp.ne.s32.totalorder %s69, %s70
      %p79 = scmp.eq.s32.totalorder %s22, 0
      %p80 = por %p78, %p79
      %p81 = scmp.ne.s32.totalorder %s69, %s70
      %p82 = scmp.eq.s32.totalorder %s23, 6
      %p83 = por %p81, %p82
      %p85 = scmp.ne.s32.totalorder %s70, %s84
      %p86 = scmp.eq.s32.totalorder %s23, 0
      %p87 = por %p85, %p86
      %s89 = sadd.s32 %s88, 1
      %p92 = scmp.eq.s32.totalorder %s17, 6
      %p93 = scmp.ne.s32.totalorder %s88, %s90
      %p94 = scmp.eq.s32.totalorder %s17, 0
      %p95 = por %p93, %p94
      %p96 = scmp.ne.s32.totalorder %s88, %s90
      %p97 = scmp.eq.s32.totalorder %s22, 6
      %p98 = por %p96, %p97
      %p99 = scmp.ne.s32.totalorder %s90, %s91
      %p100 = scmp.eq.s32.totalorder %s22, 0
      %p101 = por %p99, %p100
      %p102 = scmp.ne.s32.totalorder %s90, %s91
      %p103 = scmp.eq.s32.totalorder %s23, 6
      %p104 = por %p102, %p103
      %p106 = scmp.ne.s32.totalorder %s91, %s105
      %p107 = scmp.eq.s32.totalorder %s23, 0
      %p108 = por %p106, %p107
      %s109 = ssub.s32 %s17, %s24
      %p110 = scmp.eq.s32.totalorder %s109, 0
      %s112 = sadd.s32 %s111, 1
      %s113 = scalar_select %p110, %s111, %s112
      %p116 = pneg %p110
      %p117 = scmp.eq.s32.totalorder %s17, 6
      %p118 = por %p116, %p117
      %p119 = scmp.ne.s32.totalorder %s111, %s114
      %p120 = scmp.eq.s32.totalorder %s17, 0
      %p121 = por %p119, %p120
      %p122 = scmp.ne.s32.totalorder %s111, %s114
      %p123 = scmp.eq.s32.totalorder %s22, 6
      %p124 = por %p122, %p123
      %p125 = scmp.ne.s32.totalorder %s114, %s115
      %p126 = scmp.eq.s32.totalorder %s22, 0
      %p127 = por %p125, %p126
      %p128 = scmp.ne.s32.totalorder %s114, %s115
      %p129 = scmp.eq.s32.totalorder %s23, 6
      %p130 = por %p128, %p129
      %p132 = scmp.ne.s32.totalorder %s115, %s131
      %p133 = scmp.eq.s32.totalorder %s23, 0
      %p134 = por %p132, %p133
      %s135 = ssub.s32 %s17, %s24
      %p136 = scmp.eq.s32.totalorder %s135, 0
      %s138 = sadd.s32 %s137, 1
      %s139 = scalar_select %p136, %s137, %s138
      %p142 = pneg %p136
      %p143 = scmp.eq.s32.totalorder %s17, 6
      %p144 = por %p142, %p143
      %p145 = scmp.ne.s32.totalorder %s137, %s140
      %p146 = scmp.eq.s32.totalorder %s17, 0
      %p147 = por %p145, %p146
      %p148 = scmp.ne.s32.totalorder %s137, %s140
      %p149 = scmp.eq.s32.totalorder %s22, 6
      %p150 = por %p148, %p149
      %p151 = scmp.ne.s32.totalorder %s140, %s141
      %p152 = scmp.eq.s32.totalorder %s22, 0
      %p153 = por %p151, %p152
      %p154 = scmp.ne.s32.totalorder %s140, %s141
      %p155 = scmp.eq.s32.totalorder %s23, 6
      %p156 = por %p154, %p155
      %p158 = scmp.ne.s32.totalorder %s141, %s157
      %p159 = scmp.eq.s32.totalorder %s23, 0
      %p160 = por %p158, %p159
      %s161 = ssub.s32 %s17, %s24
      %p162 = scmp.eq.s32.totalorder %s161, 0
      %s164 = sadd.s32 %s163, 1
      %s165 = scalar_select %p162, %s163, %s164
      %p168 = pneg %p162
      %p169 = scmp.eq.s32.totalorder %s17, 6
      %p170 = por %p168, %p169
      %p171 = scmp.ne.s32.totalorder %s163, %s166
      %p172 = scmp.eq.s32.totalorder %s17, 0
      %p173 = por %p171, %p172
      %p174 = scmp.ne.s32.totalorder %s163, %s166
      %p175 = scmp.eq.s32.totalorder %s22, 6
      %p176 = por %p174, %p175
      %p177 = scmp.ne.s32.totalorder %s166, %s167
      %p178 = scmp.eq.s32.totalorder %s22, 0
      %p179 = por %p177, %p178
      %p180 = scmp.ne.s32.totalorder %s166, %s167
      %p181 = scmp.eq.s32.totalorder %s23, 6
      %p182 = por %p180, %p181
      %p184 = scmp.ne.s32.totalorder %s167, %s183
      %p185 = scmp.eq.s32.totalorder %s23, 0
      %p186 = por %p184, %p185
      %s188 = sadd.s32 %s187, 1
      %p191 = scmp.eq.s32.totalorder %s17, 6
      %p192 = scmp.ne.s32.totalorder %s187, %s189
      %p193 = scmp.eq.s32.totalorder %s17, 0
      %p194 = por %p192, %p193
      %p195 = scmp.ne.s32.totalorder %s187, %s189
      %p196 = scmp.eq.s32.totalorder %s22, 6
      %p197 = por %p195, %p196
      %p198 = scmp.ne.s32.totalorder %s189, %s190
      %p199 = scmp.eq.s32.totalorder %s22, 0
      %p200 = por %p198, %p199
      %p201 = scmp.ne.s32.totalorder %s189, %s190
      %p202 = scmp.eq.s32.totalorder %s23, 6
      %p203 = por %p201, %p202
      %p205 = scmp.ne.s32.totalorder %s190, %s204
      %p206 = scmp.eq.s32.totalorder %s23, 0
      %p207 = por %p205, %p206
      %p208 = scmp.le.s32.totalorder 1, %s17
      %p209 = scmp.lt.s32.totalorder %s17, 8
      %p210 = pnand %p208, %p209
      %p211 = pneg %p210
      // Predicated region
      $region9: #{fwd.1} parent=5 // pred_check
        _
      $region10: #{fwd.1} parent=5 // pred_check_branch
        %213 = sbr.rel (%p210) target = $region12
      $region11: #{fwd.1} parent=5 // pred_region
        %s214 = ssub.s32 %s17, 1
        // Predicated region
        $region13: #{fwd.1} parent=11 // pred_check
          %p215 = pneg %p38
        $region14: #{fwd.1} parent=11 // pred_check_branch
          %217 = sbr.rel (%p215) target = $region16
        $region15: #{fwd.1} parent=11 // pred_region
          %s219 = ssub.s32 512, 512
          %220 = vsyncadd [#allocation4], %s219
          %s221 = sshll.u32 [#allocation3], 4
          %s222 = int_to_ptr.vmem [resolvable:$true] %s221
          %227 = dma.hbm_to_vmem [thread:$0]  %s0, 512, %s222, [#allocation4], 256, 256, 16
        $region16: #{fwd.1} parent=11 // pred_fallthru
          _
        // Predicated region
        $region17: #{fwd.1} parent=11 // pred_check
          %p228 = pneg %p59
        $region18: #{fwd.1} parent=11 // pred_check_branch
          %230 = sbr.rel (%p228) target = $region20
        $region19: #{fwd.1} parent=11 // pred_region
          %s232 = ssub.s32 256, 256
          %233 = vsyncadd [#allocation7], %s232
          %s234 = sshll.u32 [#allocation6], 4
          %s235 = int_to_ptr.vmem [resolvable:$true] %s234
          %240 = dma.hbm_to_vmem [thread:$0]  %s1, 256, %s235, [#allocation7], 128, 128, 8
        $region20: #{fwd.1} parent=11 // pred_fallthru
          _
        // Predicated region
        $region21: #{fwd.1} parent=11 // pred_check
          %p241 = pneg %p80
        $region22: #{fwd.1} parent=11 // pred_check_branch
          %243 = sbr.rel (%p241) target = $region24
        $region23: #{fwd.1} parent=11 // pred_region
          %s245 = ssub.s32 256, 256
          %246 = vsyncadd [#allocation7], %s245
          %s247 = sshll.u32 [#allocation8], 4
          %s248 = int_to_ptr.vmem [resolvable:$true] %s247
          %253 = dma.hbm_to_vmem [thread:$0]  %s2, 256, %s248, [#allocation7], 128, 128, 8
        $region24: #{fwd.1} parent=11 // pred_fallthru
          _
        // Predicated region
        $region25: #{fwd.1} parent=11 // pred_check
          %p254 = pneg %p101
        $region26: #{fwd.1} parent=11 // pred_check_branch
          %256 = sbr.rel (%p254) target = $region28
        $region27: #{fwd.1} parent=11 // pred_region
          %s258 = ssub.s32 256, 256
          %259 = vsyncadd [#allocation10], %s258
          %s260 = sshll.u32 [#allocation9], 4
          %s261 = int_to_ptr.vmem [resolvable:$true] %s260
          %266 = dma.hbm_to_vmem [thread:$0]  %s3, 256, %s261, [#allocation10], 128, 128, 8
        $region28: #{fwd.1} parent=11 // pred_fallthru
          _
      $region12: #{fwd.1} parent=5 // pred_fallthru
        _
      %p267 = scmp.lt.s32.totalorder %s17, 7
      // Predicated region
      $region29: #{fwd.1} parent=5 // pred_check
        %p268 = pneg %p267
      $region30: #{fwd.1} parent=5 // pred_check_branch
        %270 = sbr.rel (%p268) target = $region32
      $region31: #{fwd.1} parent=5 // pred_region
        // Predicated region
        $region33: #{fwd.1} parent=31 // pred_check
          %p271 = pneg %p121
        $region34: #{fwd.1} parent=31 // pred_check_branch
          %273 = sbr.rel (%p271) target = $region36
        $region35: #{fwd.1} parent=31 // pred_region
          %s274 = sand.u32 %s17, 1
          %s275 = scalar_lea.sflag [#allocation4], %s274
          %s276 = sand.u32 %s111, 1
          %s277 = smul.addr %s276, 8
          %s278 = scalar_lea.vmem [#allocation11], %s277
          %s279 = smul.u32 2, %s17
          %s281 = ssub.s32 128, 128
          %282 = vsyncadd %s275, %s281
          %s283 = smul.addr %s279, 2
          %s284 = smul.addr %s283, 32
          %s285 = scalar_lea.hbm %s4, %s284
          %s286 = sshll.u32 %s278, 4
          %s287 = int_to_ptr.vmem [resolvable:$true] %s286
          %292 = dma.hbm_to_vmem [thread:$0]  %s285, 128, %s287, %s275, 64, 64, 4
        $region36: #{fwd.1} parent=31 // pred_fallthru
          _
        // Predicated region
        $region37: #{fwd.1} parent=31 // pred_check
          %p293 = pneg %p147
        $region38: #{fwd.1} parent=31 // pred_check_branch
          %295 = sbr.rel (%p293) target = $region40
        $region39: #{fwd.1} parent=31 // pred_region
          %s296 = sand.u32 %s17, 1
          %s297 = scalar_lea.sflag [#allocation4], %s296
          %s298 = sand.u32 %s137, 1
          %s299 = smul.addr %s298, 4096
          %s300 = scalar_lea.vmem [#allocation12], %s299
          %s301 = smul.u32 2, %s17
          %s303 = ssub.s32 65536, 65536
          %304 = vsyncadd %s297, %s303
          %s305 = smul.addr %s301, 512
          %s306 = smul.addr %s305, 64
          %s307 = scalar_lea.hbm %s5, %s306
          %s308 = sshll.u32 %s300, 4
          %s309 = int_to_ptr.vmem [resolvable:$true] %s308
          %314 = dma.hbm_to_vmem [thread:$0]  %s307, 65536, %s309, %s297, 1024, 1024, 64
        $region40: #{fwd.1} parent=31 // pred_fallthru
          _
        // Predicated region
        $region41: #{fwd.1} parent=31 // pred_check
          %p315 = pneg %p173
        $region42: #{fwd.1} parent=31 // pred_check_branch
          %317 = sbr.rel (%p315) target = $region44
        $region43: #{fwd.1} parent=31 // pred_region
          %s318 = sand.u32 %s17, 1
          %s319 = scalar_lea.sflag [#allocation4], %s318
          %s320 = sand.u32 %s163, 1
          %s321 = smul.addr %s320, 1024
          %s322 = scalar_lea.vmem [#allocation13], %s321
          %s323 = smul.u32 2, %s17
          %s325 = ssub.s32 16384, 16384
          %326 = vsyncadd %s319, %s325
          %s327 = smul.addr %s323, 128
          %s328 = smul.addr %s327, 64
          %s329 = scalar_lea.hbm %s6, %s328
          %s330 = sshll.u32 %s322, 4
          %s331 = int_to_ptr.vmem [resolvable:$true] %s330
          %336 = dma.hbm_to_vmem [thread:$0]  %s329, 16384, %s331, %s319, 128, 128, 8
        $region44: #{fwd.1} parent=31 // pred_fallthru
          _
      $region32: #{fwd.1} parent=5 // pred_fallthru
        _
      %p337 = scmp.le.s32.totalorder 1, %s17
      %p338 = scmp.lt.s32.totalorder %s17, 8
      %p339 = pnand %p337, %p338
      %p340 = pneg %p339
      // Predicated region
      $region45: #{fwd.1} parent=5 // pred_check
        _
      $region46: #{fwd.1} parent=5 // pred_check_branch
        %342 = sbr.rel (%p339) target = $region48
      $region47: #{fwd.1} parent=5 // pred_region
        %s343 = ssub.s32 %s17, 1
        // Predicated region
        $region49: #{fwd.1} parent=47 // pred_check
          %p344 = pneg %p38
        $region50: #{fwd.1} parent=47 // pred_check_branch
          %346 = sbr.rel (%p344) target = $region52
        $region51: #{fwd.1} parent=47 // pred_region
          %347 = dma.done [#allocation4], 512
        $region52: #{fwd.1} parent=47 // pred_fallthru
          _
        // Predicated region
        $region53: #{fwd.1} parent=47 // pred_check
          %p348 = pneg %p59
        $region54: #{fwd.1} parent=47 // pred_check_branch
          %350 = sbr.rel (%p348) target = $region56
        $region55: #{fwd.1} parent=47 // pred_region
          %351 = dma.done [#allocation7], 256
        $region56: #{fwd.1} parent=47 // pred_fallthru
          _
        // Predicated region
        $region57: #{fwd.1} parent=47 // pred_check
          %p352 = pneg %p80
        $region58: #{fwd.1} parent=47 // pred_check_branch
          %354 = sbr.rel (%p352) target = $region60
        $region59: #{fwd.1} parent=47 // pred_region
          %355 = dma.done [#allocation7], 256
        $region60: #{fwd.1} parent=47 // pred_fallthru
          _
        // Predicated region
        $region61: #{fwd.1} parent=47 // pred_check
          %p356 = pneg %p101
        $region62: #{fwd.1} parent=47 // pred_check_branch
          %358 = sbr.rel (%p356) target = $region64
        $region63: #{fwd.1} parent=47 // pred_region
          %359 = dma.done [#allocation10], 256
        $region64: #{fwd.1} parent=47 // pred_fallthru
          _
        %s360 = sand.u32 %s22, 1
        %s361 = scalar_lea.sflag [#allocation4], %s360
        %s362 = sand.u32 %s114, 1
        %s363 = smul.addr %s362, 8
        %s364 = scalar_lea.vmem [#allocation11], %s363
        // Predicated region
        $region65: #{fwd.1} parent=47 // pred_check
          %p365 = pneg %p127
        $region66: #{fwd.1} parent=47 // pred_check_branch
          %367 = sbr.rel (%p365) target = $region68
        $region67: #{fwd.1} parent=47 // pred_region
          %368 = dma.done %s361, 128
        $region68: #{fwd.1} parent=47 // pred_fallthru
          _
        %s369 = sand.u32 %s22, 1
        %s370 = scalar_lea.sflag [#allocation4], %s369
        %s371 = sand.u32 %s140, 1
        %s372 = smul.addr %s371, 4096
        %s373 = scalar_lea.vmem [#allocation12], %s372
        // Predicated region
        $region69: #{fwd.1} parent=47 // pred_check
          %p374 = pneg %p153
        $region70: #{fwd.1} parent=47 // pred_check_branch
          %376 = sbr.rel (%p374) target = $region72
        $region71: #{fwd.1} parent=47 // pred_region
          %377 = dma.done %s370, 65536
        $region72: #{fwd.1} parent=47 // pred_fallthru
          _
        %s378 = sand.u32 %s22, 1
        %s379 = scalar_lea.sflag [#allocation4], %s378
        %s380 = sand.u32 %s166, 1
        %s381 = smul.addr %s380, 1024
        %s382 = scalar_lea.vmem [#allocation13], %s381
        // Predicated region
        $region73: #{fwd.1} parent=47 // pred_check
          %p383 = pneg %p179
        $region74: #{fwd.1} parent=47 // pred_check_branch
          %385 = sbr.rel (%p383) target = $region76
        $region75: #{fwd.1} parent=47 // pred_region
          %386 = dma.done %s379, 16384
        $region76: #{fwd.1} parent=47 // pred_fallthru
          _
        %p387 = pneg %p38
        %p388 = pneg %p35
        %p389 = pneg %p59
        %p390 = pneg %p56
        %p391 = pneg %p80
        %p392 = pneg %p77
        %p393 = pneg %p101
        %p394 = pneg %p98
        %s395 = sand.u32 %s22, 1
        %s396 = scalar_lea.sflag [#allocation4], %s395
        %s397 = sand.u32 %s114, 1
        %s398 = smul.addr %s397, 8
        %s399 = scalar_lea.vmem [#allocation11], %s398
        %p400 = pneg %p127
        %p401 = pneg %p124
        %s402 = sand.u32 %s22, 1
        %s403 = scalar_lea.sflag [#allocation4], %s402
        %s404 = sand.u32 %s140, 1
        %s405 = smul.addr %s404, 4096
        %s406 = scalar_lea.vmem [#allocation12], %s405
        %p407 = pneg %p153
        %p408 = pneg %p150
        %s409 = sand.u32 %s22, 1
        %s410 = scalar_lea.sflag [#allocation4], %s409
        %s411 = sand.u32 %s166, 1
        %s412 = smul.addr %s411, 1024
        %s413 = scalar_lea.vmem [#allocation13], %s412
        %p414 = pneg %p179
        %p415 = pneg %p176
        %p416 = pneg %p200
        %p417 = pneg %p197
        %s418 = smul.u32 2, %s22
        %s419 = smul.u32 2, %s22
        %s420 = smul.u32 2, %s22
        %p421 = scmp.eq.s32.totalorder %s22, 0
        // Predicated region
        $region77: #{fwd.1} parent=47 // pred_check
          %p422 = pneg %p421
        $region78: #{fwd.1} parent=47 // pred_check_branch
          %424 = sbr.rel (%p422) target = $region80
        $region79: #{fwd.1} parent=47 // pred_region
          %v425 = vld [vmem:[#allocation3] sm:$0xff]
          %v426 = vld [vmem:[#allocation3 + $0x8] sm:$0xff]
          %v427 = vld [vmem:[#allocation3 + $0x10] sm:$0xff]
          %v428 = vld [vmem:[#allocation3 + $0x18] sm:$0xff]
          %429 = vst [vmem:[#allocation2] sm:$0xff] %v425
          %430 = vst [vmem:[#allocation2 + $0x8] sm:$0xff] %v426
          %431 = vst [vmem:[#allocation2 + $0x10] sm:$0xff] %v427
          %432 = vst [vmem:[#allocation2 + $0x18] sm:$0xff] %v428
        $region80: #{fwd.1} parent=47 // pred_fallthru
          _
        %v433 = vld [vmem:[#allocation6] sm:$0xff]
        %v434 = vld [vmem:[#allocation6 + $0x8] sm:$0xff]
        %v435 = vld [vmem:[#allocation8] sm:$0xff]
        %v436 = vld [vmem:[#allocation8 + $0x8] sm:$0xff]
        %v437 = vld [vmem:[#allocation9] sm:$0xff]
        %v438 = vld [vmem:[#allocation9 + $0x8] sm:$0xff]
        %v439 = vld [vmem:[#allocation2] sm:$0xff]
        %v440 = vld [vmem:[#allocation2 + $0x8] sm:$0xff]
        %v441 = vld [vmem:[#allocation2 + $0x10] sm:$0xff]
        %v442 = vld [vmem:[#allocation2 + $0x18] sm:$0xff]
        %v443 = vld [vmem:[%s364] ss:$2 sm:$0x3]
        %s444 = scalar_lea.vmem %s364, 1 [#allocation11]
        %v445 = vld [vmem:[%s444] ss:$2 sm:$0x3]
        %v446 = vld [vmem:[%s373] sm:$0xff]
        %v447 = vld [vmem:[%s373 + $0x8] sm:$0xff]
        %v448 = vld [vmem:[%s373 + $0x10] sm:$0xff]
        %v449 = vld [vmem:[%s373 + $0x40] sm:$0xff]
        %v450 = vld [vmem:[%s373 + $0x48] sm:$0xff]
        %v451 = vld [vmem:[%s373 + $0x50] sm:$0xff]
        %v452 = vld [vmem:[%s373 + $0x80] sm:$0xff]
        %v453 = vld [vmem:[%s373 + $0x88] sm:$0xff]
        %v454 = vld [vmem:[%s373 + $0x90] sm:$0xff]
        %v455 = vld [vmem:[%s373 + $0xc0] sm:$0xff]
        %v456 = vld [vmem:[%s373 + $0xc8] sm:$0xff]
        %v457 = vld [vmem:[%s373 + $0xd0] sm:$0xff]
        %v458 = vld [vmem:[%s373 + $0x100] sm:$0xff]
        %v459 = vld [vmem:[%s373 + $0x108] sm:$0xff]
        %v460 = vld [vmem:[%s373 + $0x110] sm:$0xff]
        %v461 = vld [vmem:[%s373 + $0x140] sm:$0xff]
        %v462 = vld [vmem:[%s373 + $0x148] sm:$0xff]
        %v463 = vld [vmem:[%s373 + $0x150] sm:$0xff]
        %v464 = vld [vmem:[%s373 + $0x180] sm:$0xff]
        %v465 = vld [vmem:[%s373 + $0x188] sm:$0xff]
        %v466 = vld [vmem:[%s373 + $0x190] sm:$0xff]
        %v467 = vld [vmem:[%s373 + $0x1c0] sm:$0xff]
        %v468 = vld [vmem:[%s373 + $0x1c8] sm:$0xff]
        %v469 = vld [vmem:[%s373 + $0x1d0] sm:$0xff]
        %v470 = vld [vmem:[%s373 + $0x200] sm:$0xff]
        %v471 = vld [vmem:[%s373 + $0x208] sm:$0xff]
        %v472 = vld [vmem:[%s373 + $0x210] sm:$0xff]
        %v473 = vld [vmem:[%s373 + $0x240] sm:$0xff]
        %v474 = vld [vmem:[%s373 + $0x248] sm:$0xff]
        %v475 = vld [vmem:[%s373 + $0x250] sm:$0xff]
        %v476 = vld [vmem:[%s373 + $0x280] sm:$0xff]
        %v477 = vld [vmem:[%s373 + $0x288] sm:$0xff]
        %v478 = vld [vmem:[%s373 + $0x290] sm:$0xff]
        %v479 = vld [vmem:[%s373 + $0x2c0] sm:$0xff]
        %v480 = vld [vmem:[%s373 + $0x2c8] sm:$0xff]
        %v481 = vld [vmem:[%s373 + $0x2d0] sm:$0xff]
        %v482 = vld [vmem:[%s373 + $0x300] sm:$0xff]
        %v483 = vld [vmem:[%s373 + $0x308] sm:$0xff]
        %v484 = vld [vmem:[%s373 + $0x310] sm:$0xff]
        %v485 = vld [vmem:[%s373 + $0x340] sm:$0xff]
        %v486 = vld [vmem:[%s373 + $0x348] sm:$0xff]
        %v487 = vld [vmem:[%s373 + $0x350] sm:$0xff]
        %v488 = vld [vmem:[%s373 + $0x380] sm:$0xff]
        %v489 = vld [vmem:[%s373 + $0x388] sm:$0xff]
        %v490 = vld [vmem:[%s373 + $0x390] sm:$0xff]
        %v491 = vld [vmem:[%s373 + $0x3c0] sm:$0xff]
        %v492 = vld [vmem:[%s373 + $0x3c8] sm:$0xff]
        %v493 = vld [vmem:[%s373 + $0x3d0] sm:$0xff]
        %v494 = vld [vmem:[%s373 + $0x400] sm:$0xff]
        %v495 = vld [vmem:[%s373 + $0x408] sm:$0xff]
        %v496 = vld [vmem:[%s373 + $0x410] sm:$0xff]
        %v497 = vld [vmem:[%s373 + $0x440] sm:$0xff]
        %v498 = vld [vmem:[%s373 + $0x448] sm:$0xff]
        %v499 = vld [vmem:[%s373 + $0x450] sm:$0xff]
        %v500 = vld [vmem:[%s373 + $0x480] sm:$0xff]
        %v501 = vld [vmem:[%s373 + $0x488] sm:$0xff]
        %v502 = vld [vmem:[%s373 + $0x490] sm:$0xff]
        %v503 = vld [vmem:[%s373 + $0x4c0] sm:$0xff]
        %v504 = vld [vmem:[%s373 + $0x4c8] sm:$0xff]
        %v505 = vld [vmem:[%s373 + $0x4d0] sm:$0xff]
        %v506 = vld [vmem:[%s373 + $0x500] sm:$0xff]
        %v507 = vld [vmem:[%s373 + $0x508] sm:$0xff]
        %v508 = vld [vmem:[%s373 + $0x510] sm:$0xff]
        %v509 = vld [vmem:[%s373 + $0x540] sm:$0xff]
        %v510 = vld [vmem:[%s373 + $0x548] sm:$0xff]
        %v511 = vld [vmem:[%s373 + $0x550] sm:$0xff]
        %v512 = vld [vmem:[%s373 + $0x580] sm:$0xff]
        %v513 = vld [vmem:[%s373 + $0x588] sm:$0xff]
        %v514 = vld [vmem:[%s373 + $0x590] sm:$0xff]
        %v515 = vld [vmem:[%s373 + $0x5c0] sm:$0xff]
        %v516 = vld [vmem:[%s373 + $0x5c8] sm:$0xff]
        %v517 = vld [vmem:[%s373 + $0x5d0] sm:$0xff]
        %v518 = vld [vmem:[%s373 + $0x600] sm:$0xff]
        %v519 = vld [vmem:[%s373 + $0x608] sm:$0xff]
        %v520 = vld [vmem:[%s373 + $0x610] sm:$0xff]
        %v521 = vld [vmem:[%s373 + $0x640] sm:$0xff]
        %v522 = vld [vmem:[%s373 + $0x648] sm:$0xff]
        %v523 = vld [vmem:[%s373 + $0x650] sm:$0xff]
        %v524 = vld [vmem:[%s373 + $0x680] sm:$0xff]
        %v525 = vld [vmem:[%s373 + $0x688] sm:$0xff]
        %v526 = vld [vmem:[%s373 + $0x690] sm:$0xff]
        %v527 = vld [vmem:[%s373 + $0x6c0] sm:$0xff]
        %v528 = vld [vmem:[%s373 + $0x6c8] sm:$0xff]
        %v529 = vld [vmem:[%s373 + $0x6d0] sm:$0xff]
        %v530 = vld [vmem:[%s373 + $0x700] sm:$0xff]
        %v531 = vld [vmem:[%s373 + $0x708] sm:$0xff]
        %v532 = vld [vmem:[%s373 + $0x710] sm:$0xff]
        %v533 = vld [vmem:[%s373 + $0x740] sm:$0xff]
        %v534 = vld [vmem:[%s373 + $0x748] sm:$0xff]
        %v535 = vld [vmem:[%s373 + $0x750] sm:$0xff]
        %v536 = vld [vmem:[%s373 + $0x780] sm:$0xff]
        %v537 = vld [vmem:[%s373 + $0x788] sm:$0xff]
        %v538 = vld [vmem:[%s373 + $0x790] sm:$0xff]
        %v539 = vld [vmem:[%s373 + $0x7c0] sm:$0xff]
        %v540 = vld [vmem:[%s373 + $0x7c8] sm:$0xff]
        %v541 = vld [vmem:[%s373 + $0x7d0] sm:$0xff]
        %v542 = vld [vmem:[%s373 + $0x18] sm:$0xff]
        %v543 = vld [vmem:[%s373 + $0x58] sm:$0xff]
        %v544 = vld [vmem:[%s373 + $0x98] sm:$0xff]
        %v545 = vld [vmem:[%s373 + $0xd8] sm:$0xff]
        %v546 = vld [vmem:[%s373 + $0x118] sm:$0xff]
        %v547 = vld [vmem:[%s373 + $0x158] sm:$0xff]
        %v548 = vld [vmem:[%s373 + $0x198] sm:$0xff]
        %v549 = vld [vmem:[%s373 + $0x1d8] sm:$0xff]
        %v550 = vld [vmem:[%s373 + $0x218] sm:$0xff]
        %v551 = vld [vmem:[%s373 + $0x258] sm:$0xff]
        %v552 = vld [vmem:[%s373 + $0x298] sm:$0xff]
        %v553 = vld [vmem:[%s373 + $0x2d8] sm:$0xff]
        %v554 = vld [vmem:[%s373 + $0x318] sm:$0xff]
        %v555 = vld [vmem:[%s373 + $0x358] sm:$0xff]
        %v556 = vld [vmem:[%s373 + $0x398] sm:$0xff]
        %v557 = vld [vmem:[%s373 + $0x3d8] sm:$0xff]
        %v558 = vld [vmem:[%s373 + $0x418] sm:$0xff]
        %v559 = vld [vmem:[%s373 + $0x458] sm:$0xff]
        %v560 = vld [vmem:[%s373 + $0x498] sm:$0xff]
        %v561 = vld [vmem:[%s373 + $0x4d8] sm:$0xff]
        %v562 = vld [vmem:[%s373 + $0x518] sm:$0xff]
        %v563 = vld [vmem:[%s373 + $0x558] sm:$0xff]
        %v564 = vld [vmem:[%s373 + $0x598] sm:$0xff]
        %v565 = vld [vmem:[%s373 + $0x5d8] sm:$0xff]
        %v566 = vld [vmem:[%s373 + $0x618] sm:$0xff]
        %v567 = vld [vmem:[%s373 + $0x658] sm:$0xff]
        %v568 = vld [vmem:[%s373 + $0x698] sm:$0xff]
        %v569 = vld [vmem:[%s373 + $0x6d8] sm:$0xff]
        %v570 = vld [vmem:[%s373 + $0x718] sm:$0xff]
        %v571 = vld [vmem:[%s373 + $0x758] sm:$0xff]
        %v572 = vld [vmem:[%s373 + $0x798] sm:$0xff]
        %v573 = vld [vmem:[%s373 + $0x7d8] sm:$0xff]
        %v574 = vld [vmem:[%s373 + $0x20] sm:$0xff]
        %v575 = vld [vmem:[%s373 + $0x28] sm:$0xff]
        %v576 = vld [vmem:[%s373 + $0x30] sm:$0xff]
        %v577 = vld [vmem:[%s373 + $0x38] sm:$0xff]
        %v578 = vld [vmem:[%s373 + $0x60] sm:$0xff]
        %v579 = vld [vmem:[%s373 + $0x68] sm:$0xff]
        %v580 = vld [vmem:[%s373 + $0x70] sm:$0xff]
        %v581 = vld [vmem:[%s373 + $0x78] sm:$0xff]
        %v582 = vld [vmem:[%s373 + $0xa0] sm:$0xff]
        %v583 = vld [vmem:[%s373 + $0xa8] sm:$0xff]
        %v584 = vld [vmem:[%s373 + $0xb0] sm:$0xff]
        %v585 = vld [vmem:[%s373 + $0xb8] sm:$0xff]
        %v586 = vld [vmem:[%s373 + $0xe0] sm:$0xff]
        %v587 = vld [vmem:[%s373 + $0xe8] sm:$0xff]
        %v588 = vld [vmem:[%s373 + $0xf0] sm:$0xff]
        %v589 = vld [vmem:[%s373 + $0xf8] sm:$0xff]
        %v590 = vld [vmem:[%s373 + $0x120] sm:$0xff]
        %v591 = vld [vmem:[%s373 + $0x128] sm:$0xff]
        %v592 = vld [vmem:[%s373 + $0x130] sm:$0xff]
        %v593 = vld [vmem:[%s373 + $0x138] sm:$0xff]
        %v594 = vld [vmem:[%s373 + $0x160] sm:$0xff]
        %v595 = vld [vmem:[%s373 + $0x168] sm:$0xff]
        %v596 = vld [vmem:[%s373 + $0x170] sm:$0xff]
        %v597 = vld [vmem:[%s373 + $0x178] sm:$0xff]
        %v598 = vld [vmem:[%s373 + $0x1a0] sm:$0xff]
        %v599 = vld [vmem:[%s373 + $0x1a8] sm:$0xff]
        %v600 = vld [vmem:[%s373 + $0x1b0] sm:$0xff]
        %v601 = vld [vmem:[%s373 + $0x1b8] sm:$0xff]
        %v602 = vld [vmem:[%s373 + $0x1e0] sm:$0xff]
        %v603 = vld [vmem:[%s373 + $0x1e8] sm:$0xff]
        %v604 = vld [vmem:[%s373 + $0x1f0] sm:$0xff]
        %v605 = vld [vmem:[%s373 + $0x1f8] sm:$0xff]
        %v606 = vld [vmem:[%s373 + $0x220] sm:$0xff]
        %v607 = vld [vmem:[%s373 + $0x228] sm:$0xff]
        %v608 = vld [vmem:[%s373 + $0x230] sm:$0xff]
        %v609 = vld [vmem:[%s373 + $0x238] sm:$0xff]
        %v610 = vld [vmem:[%s373 + $0x260] sm:$0xff]
        %v611 = vld [vmem:[%s373 + $0x268] sm:$0xff]
        %v612 = vld [vmem:[%s373 + $0x270] sm:$0xff]
        %v613 = vld [vmem:[%s373 + $0x278] sm:$0xff]
        %v614 = vld [vmem:[%s373 + $0x2a0] sm:$0xff]
        %v615 = vld [vmem:[%s373 + $0x2a8] sm:$0xff]
        %v616 = vld [vmem:[%s373 + $0x2b0] sm:$0xff]
        %v617 = vld [vmem:[%s373 + $0x2b8] sm:$0xff]
        %v618 = vld [vmem:[%s373 + $0x2e0] sm:$0xff]
        %v619 = vld [vmem:[%s373 + $0x2e8] sm:$0xff]
        %v620 = vld [vmem:[%s373 + $0x2f0] sm:$0xff]
        %v621 = vld [vmem:[%s373 + $0x2f8] sm:$0xff]
        %v622 = vld [vmem:[%s373 + $0x320] sm:$0xff]
        %v623 = vld [vmem:[%s373 + $0x328] sm:$0xff]
        %v624 = vld [vmem:[%s373 + $0x330] sm:$0xff]
        %v625 = vld [vmem:[%s373 + $0x338] sm:$0xff]
        %v626 = vld [vmem:[%s373 + $0x360] sm:$0xff]
        %v627 = vld [vmem:[%s373 + $0x368] sm:$0xff]
        %v628 = vld [vmem:[%s373 + $0x370] sm:$0xff]
        %v629 = vld [vmem:[%s373 + $0x378] sm:$0xff]
        %v630 = vld [vmem:[%s373 + $0x3a0] sm:$0xff]
        %v631 = vld [vmem:[%s373 + $0x3a8] sm:$0xff]
        %v632 = vld [vmem:[%s373 + $0x3b0] sm:$0xff]
        %v633 = vld [vmem:[%s373 + $0x3b8] sm:$0xff]
        %v634 = vld [vmem:[%s373 + $0x3e0] sm:$0xff]
        %v635 = vld [vmem:[%s373 + $0x3e8] sm:$0xff]
        %v636 = vld [vmem:[%s373 + $0x3f0] sm:$0xff]
        %v637 = vld [vmem:[%s373 + $0x3f8] sm:$0xff]
        %v638 = vld [vmem:[%s373 + $0x420] sm:$0xff]
        %v639 = vld [vmem:[%s373 + $0x428] sm:$0xff]
        %v640 = vld [vmem:[%s373 + $0x430] sm:$0xff]
        %v641 = vld [vmem:[%s373 + $0x438] sm:$0xff]
        %v642 = vld [vmem:[%s373 + $0x460] sm:$0xff]
        %v643 = vld [vmem:[%s373 + $0x468] sm:$0xff]
        %v644 = vld [vmem:[%s373 + $0x470] sm:$0xff]
        %v645 = vld [vmem:[%s373 + $0x478] sm:$0xff]
        %v646 = vld [vmem:[%s373 + $0x4a0] sm:$0xff]
        %v647 = vld [vmem:[%s373 + $0x4a8] sm:$0xff]
        %v648 = vld [vmem:[%s373 + $0x4b0] sm:$0xff]
        %v649 = vld [vmem:[%s373 + $0x4b8] sm:$0xff]
        %v650 = vld [vmem:[%s373 + $0x4e0] sm:$0xff]
        %v651 = vld [vmem:[%s373 + $0x4e8] sm:$0xff]
        %v652 = vld [vmem:[%s373 + $0x4f0] sm:$0xff]
        %v653 = vld [vmem:[%s373 + $0x4f8] sm:$0xff]
        %v654 = vld [vmem:[%s373 + $0x520] sm:$0xff]
        %v655 = vld [vmem:[%s373 + $0x528] sm:$0xff]
        %v656 = vld [vmem:[%s373 + $0x530] sm:$0xff]
        %v657 = vld [vmem:[%s373 + $0x538] sm:$0xff]
        %v658 = vld [vmem:[%s373 + $0x560] sm:$0xff]
        %v659 = vld [vmem:[%s373 + $0x568] sm:$0xff]
        %v660 = vld [vmem:[%s373 + $0x570] sm:$0xff]
        %v661 = vld [vmem:[%s373 + $0x578] sm:$0xff]
        %v662 = vld [vmem:[%s373 + $0x5a0] sm:$0xff]
        %v663 = vld [vmem:[%s373 + $0x5a8] sm:$0xff]
        %v664 = vld [vmem:[%s373 + $0x5b0] sm:$0xff]
        %v665 = vld [vmem:[%s373 + $0x5b8] sm:$0xff]
        %v666 = vld [vmem:[%s373 + $0x5e0] sm:$0xff]
        %v667 = vld [vmem:[%s373 + $0x5e8] sm:$0xff]
        %v668 = vld [vmem:[%s373 + $0x5f0] sm:$0xff]
        %v669 = vld [vmem:[%s373 + $0x5f8] sm:$0xff]
        %v670 = vld [vmem:[%s373 + $0x620] sm:$0xff]
        %v671 = vld [vmem:[%s373 + $0x628] sm:$0xff]
        %v672 = vld [vmem:[%s373 + $0x630] sm:$0xff]
        %v673 = vld [vmem:[%s373 + $0x638] sm:$0xff]
        %v674 = vld [vmem:[%s373 + $0x660] sm:$0xff]
        %v675 = vld [vmem:[%s373 + $0x668] sm:$0xff]
        %v676 = vld [vmem:[%s373 + $0x670] sm:$0xff]
        %v677 = vld [vmem:[%s373 + $0x678] sm:$0xff]
        %v678 = vld [vmem:[%s373 + $0x6a0] sm:$0xff]
        %v679 = vld [vmem:[%s373 + $0x6a8] sm:$0xff]
        %v680 = vld [vmem:[%s373 + $0x6b0] sm:$0xff]
        %v681 = vld [vmem:[%s373 + $0x6b8] sm:$0xff]
        %v682 = vld [vmem:[%s373 + $0x6e0] sm:$0xff]
        %v683 = vld [vmem:[%s373 + $0x6e8] sm:$0xff]
        %v684 = vld [vmem:[%s373 + $0x6f0] sm:$0xff]
        %v685 = vld [vmem:[%s373 + $0x6f8] sm:$0xff]
        %v686 = vld [vmem:[%s373 + $0x720] sm:$0xff]
        %v687 = vld [vmem:[%s373 + $0x728] sm:$0xff]
        %v688 = vld [vmem:[%s373 + $0x730] sm:$0xff]
        %v689 = vld [vmem:[%s373 + $0x738] sm:$0xff]
        %v690 = vld [vmem:[%s373 + $0x760] sm:$0xff]
        %v691 = vld [vmem:[%s373 + $0x768] sm:$0xff]
        %v692 = vld [vmem:[%s373 + $0x770] sm:$0xff]
        %v693 = vld [vmem:[%s373 + $0x778] sm:$0xff]
        %v694 = vld [vmem:[%s373 + $0x7a0] sm:$0xff]
        %v695 = vld [vmem:[%s373 + $0x7a8] sm:$0xff]
        %v696 = vld [vmem:[%s373 + $0x7b0] sm:$0xff]
        %v697 = vld [vmem:[%s373 + $0x7b8] sm:$0xff]
        %v698 = vld [vmem:[%s373 + $0x7e0] sm:$0xff]
        %v699 = vld [vmem:[%s373 + $0x7e8] sm:$0xff]
        %v700 = vld [vmem:[%s373 + $0x7f0] sm:$0xff]
        %v701 = vld [vmem:[%s373 + $0x7f8] sm:$0xff]
        %v702 = vld [vmem:[%s382] sm:$0xff]
        %v703 = vld [vmem:[%s382 + $0x8] sm:$0xff]
        %v704 = vld [vmem:[%s382 + $0x10] sm:$0xff]
        %v705 = vld [vmem:[%s382 + $0x18] sm:$0xff]
        %v706 = vld [vmem:[%s382 + $0x20] sm:$0xff]
        %v707 = vld [vmem:[%s382 + $0x28] sm:$0xff]
        %v708 = vld [vmem:[%s382 + $0x30] sm:$0xff]
        %v709 = vld [vmem:[%s382 + $0x38] sm:$0xff]
        %v710 = vld [vmem:[%s382 + $0x40] sm:$0xff]
        %v711 = vld [vmem:[%s382 + $0x48] sm:$0xff]
        %v712 = vld [vmem:[%s382 + $0x50] sm:$0xff]
        %v713 = vld [vmem:[%s382 + $0x58] sm:$0xff]
        %v714 = vld [vmem:[%s382 + $0x60] sm:$0xff]
        %v715 = vld [vmem:[%s382 + $0x68] sm:$0xff]
        %v716 = vld [vmem:[%s382 + $0x70] sm:$0xff]
        %v717 = vld [vmem:[%s382 + $0x78] sm:$0xff]
        %v718 = vld [vmem:[%s382 + $0x80] sm:$0xff]
        %v719 = vld [vmem:[%s382 + $0x88] sm:$0xff]
        %v720 = vld [vmem:[%s382 + $0x90] sm:$0xff]
        %v721 = vld [vmem:[%s382 + $0x98] sm:$0xff]
        %v722 = vld [vmem:[%s382 + $0xa0] sm:$0xff]
        %v723 = vld [vmem:[%s382 + $0xa8] sm:$0xff]
        %v724 = vld [vmem:[%s382 + $0xb0] sm:$0xff]
        %v725 = vld [vmem:[%s382 + $0xb8] sm:$0xff]
        %v726 = vld [vmem:[%s382 + $0xc0] sm:$0xff]
        %v727 = vld [vmem:[%s382 + $0xc8] sm:$0xff]
        %v728 = vld [vmem:[%s382 + $0xd0] sm:$0xff]
        %v729 = vld [vmem:[%s382 + $0xd8] sm:$0xff]
        %v730 = vld [vmem:[%s382 + $0xe0] sm:$0xff]
        %v731 = vld [vmem:[%s382 + $0xe8] sm:$0xff]
        %v732 = vld [vmem:[%s382 + $0xf0] sm:$0xff]
        %v733 = vld [vmem:[%s382 + $0xf8] sm:$0xff]
        %v734 = vld [vmem:[%s382 + $0x100] sm:$0xff]
        %v735 = vld [vmem:[%s382 + $0x108] sm:$0xff]
        %v736 = vld [vmem:[%s382 + $0x110] sm:$0xff]
        %v737 = vld [vmem:[%s382 + $0x118] sm:$0xff]
        %v738 = vld [vmem:[%s382 + $0x120] sm:$0xff]
        %v739 = vld [vmem:[%s382 + $0x128] sm:$0xff]
        %v740 = vld [vmem:[%s382 + $0x130] sm:$0xff]
        %v741 = vld [vmem:[%s382 + $0x138] sm:$0xff]
        %v742 = vld [vmem:[%s382 + $0x140] sm:$0xff]
        %v743 = vld [vmem:[%s382 + $0x148] sm:$0xff]
        %v744 = vld [vmem:[%s382 + $0x150] sm:$0xff]
        %v745 = vld [vmem:[%s382 + $0x158] sm:$0xff]
        %v746 = vld [vmem:[%s382 + $0x160] sm:$0xff]
        %v747 = vld [vmem:[%s382 + $0x168] sm:$0xff]
        %v748 = vld [vmem:[%s382 + $0x170] sm:$0xff]
        %v749 = vld [vmem:[%s382 + $0x178] sm:$0xff]
        %v750 = vld [vmem:[%s382 + $0x180] sm:$0xff]
        %v751 = vld [vmem:[%s382 + $0x188] sm:$0xff]
        %v752 = vld [vmem:[%s382 + $0x190] sm:$0xff]
        %v753 = vld [vmem:[%s382 + $0x198] sm:$0xff]
        %v754 = vld [vmem:[%s382 + $0x1a0] sm:$0xff]
        %v755 = vld [vmem:[%s382 + $0x1a8] sm:$0xff]
        %v756 = vld [vmem:[%s382 + $0x1b0] sm:$0xff]
        %v757 = vld [vmem:[%s382 + $0x1b8] sm:$0xff]
        %v758 = vld [vmem:[%s382 + $0x1c0] sm:$0xff]
        %v759 = vld [vmem:[%s382 + $0x1c8] sm:$0xff]
        %v760 = vld [vmem:[%s382 + $0x1d0] sm:$0xff]
        %v761 = vld [vmem:[%s382 + $0x1d8] sm:$0xff]
        %v762 = vld [vmem:[%s382 + $0x1e0] sm:$0xff]
        %v763 = vld [vmem:[%s382 + $0x1e8] sm:$0xff]
        %v764 = vld [vmem:[%s382 + $0x1f0] sm:$0xff]
        %v765 = vld [vmem:[%s382 + $0x1f8] sm:$0xff]
        %v766 = vmul.f32 %v439, %v439
        %v767 = vmul.f32 %v440, %v440
        %v768 = vmul.f32 %v441, %v441
        %v769 = vmul.f32 %v442, %v442
        %v770 = vadd.f32 %v766, %v767
        %771 = vadd.xlane.f32.xlu0 %v770
        %v772 = vpop.xlane.xlu0 %771
        %v773 = vadd.f32 %v768, %v769
        %774 = vadd.xlane.f32.xlu0 %v773
        %v775 = vpop.xlane.xlu0 %774
        %v776 = vrcp.pop 256.0
        %v777 = vmul.f32 %v772, %v776
        %v778 = vmul.f32 %v775, %v776
        %v779 = vadd.f32 %v777, 1e-06
        %v780 = vadd.f32 %v778, 1e-06
        %v781 = vrsqrt.pop %v779
        %v782 = vrsqrt.pop %v780
        %v783 = vmul.f32 %v439, %v781
        %v784 = vmul.f32 %v440, %v781
        %v785 = vmul.f32 %v441, %v782
        %v786 = vmul.f32 %v442, %v782
        %v788 = vlaneseq
        %v789 = vshrl.u32 %v788, 7
        %v790 = vsub.s32 0, %v789
        %v791 = vrot.slane %v443, %v790
        %v792 = vlaneseq
        %v793 = vshrl.u32 %v792, 7
        %v794 = vsub.s32 1, %v793
        %v795 = vrot.slane %v443, %v794
        %v798 = vmul.f32 %v783, %v791
        %v799 = vmul.f32 %v784, %v795
        %v800 = vmul.f32 %v785, %v791
        %v801 = vmul.f32 %v786, %v795
        %v802 = vpack.c.bf16 %v800, %v798
        %v803 = vpack.c.bf16 %v801, %v799
        %v900 = vunpack.c.l.b16 %v446
        %v901 = vunpack.c.h.b16 %v446
        %v902 = vunpack.c.l.b16 %v447
        %v903 = vunpack.c.h.b16 %v447
        %v904 = vunpack.c.l.b16 %v448
        %v905 = vunpack.c.h.b16 %v448
        %v906 = vunpack.c.l.b16 %v449
        %v907 = vunpack.c.h.b16 %v449
        %v908 = vunpack.c.l.b16 %v450
        %v909 = vunpack.c.h.b16 %v450
        %v910 = vunpack.c.l.b16 %v451
        %v911 = vunpack.c.h.b16 %v451
        %v912 = vunpack.c.l.b16 %v452
        %v913 = vunpack.c.h.b16 %v452
        %v914 = vunpack.c.l.b16 %v453
        %v915 = vunpack.c.h.b16 %v453
        %v916 = vunpack.c.l.b16 %v454
        %v917 = vunpack.c.h.b16 %v454
        %v918 = vunpack.c.l.b16 %v455
        %v919 = vunpack.c.h.b16 %v455
        %v920 = vunpack.c.l.b16 %v456
        %v921 = vunpack.c.h.b16 %v456
        %v922 = vunpack.c.l.b16 %v457
        %v923 = vunpack.c.h.b16 %v457
        %v924 = vunpack.c.l.b16 %v458
        %v925 = vunpack.c.h.b16 %v458
        %v926 = vunpack.c.l.b16 %v459
        %v927 = vunpack.c.h.b16 %v459
        %v928 = vunpack.c.l.b16 %v460
        %v929 = vunpack.c.h.b16 %v460
        %v930 = vunpack.c.l.b16 %v461
        %v931 = vunpack.c.h.b16 %v461
        %v932 = vunpack.c.l.b16 %v462
        %v933 = vunpack.c.h.b16 %v462
        %v934 = vunpack.c.l.b16 %v463
        %v935 = vunpack.c.h.b16 %v463
        %v936 = vunpack.c.l.b16 %v464
        %v937 = vunpack.c.h.b16 %v464
        %v938 = vunpack.c.l.b16 %v465
        %v939 = vunpack.c.h.b16 %v465
        %v940 = vunpack.c.l.b16 %v466
        %v941 = vunpack.c.h.b16 %v466
        %v942 = vunpack.c.l.b16 %v467
        %v943 = vunpack.c.h.b16 %v467
        %v944 = vunpack.c.l.b16 %v468
        %v945 = vunpack.c.h.b16 %v468
        %v946 = vunpack.c.l.b16 %v469
        %v947 = vunpack.c.h.b16 %v469
        %v948 = vunpack.c.l.b16 %v470
        %v949 = vunpack.c.h.b16 %v470
        %v950 = vunpack.c.l.b16 %v471
        %v951 = vunpack.c.h.b16 %v471
        %v952 = vunpack.c.l.b16 %v472
        %v953 = vunpack.c.h.b16 %v472
        %v954 = vunpack.c.l.b16 %v473
        %v955 = vunpack.c.h.b16 %v473
        %v956 = vunpack.c.l.b16 %v474
        %v957 = vunpack.c.h.b16 %v474
        %v958 = vunpack.c.l.b16 %v475
        %v959 = vunpack.c.h.b16 %v475
        %v960 = vunpack.c.l.b16 %v476
        %v961 = vunpack.c.h.b16 %v476
        %v962 = vunpack.c.l.b16 %v477
        %v963 = vunpack.c.h.b16 %v477
        %v964 = vunpack.c.l.b16 %v478
        %v965 = vunpack.c.h.b16 %v478
        %v966 = vunpack.c.l.b16 %v479
        %v967 = vunpack.c.h.b16 %v479
        %v968 = vunpack.c.l.b16 %v480
        %v969 = vunpack.c.h.b16 %v480
        %v970 = vunpack.c.l.b16 %v481
        %v971 = vunpack.c.h.b16 %v481
        %v972 = vunpack.c.l.b16 %v482
        %v973 = vunpack.c.h.b16 %v482
        %v974 = vunpack.c.l.b16 %v483
        %v975 = vunpack.c.h.b16 %v483
        %v976 = vunpack.c.l.b16 %v484
        %v977 = vunpack.c.h.b16 %v484
        %v978 = vunpack.c.l.b16 %v485
        %v979 = vunpack.c.h.b16 %v485
        %v980 = vunpack.c.l.b16 %v486
        %v981 = vunpack.c.h.b16 %v486
        %v982 = vunpack.c.l.b16 %v487
        %v983 = vunpack.c.h.b16 %v487
        %v984 = vunpack.c.l.b16 %v488
        %v985 = vunpack.c.h.b16 %v488
        %v986 = vunpack.c.l.b16 %v489
        %v987 = vunpack.c.h.b16 %v489
        %v988 = vunpack.c.l.b16 %v490
        %v989 = vunpack.c.h.b16 %v490
        %v990 = vunpack.c.l.b16 %v491
        %v991 = vunpack.c.h.b16 %v491
        %v992 = vunpack.c.l.b16 %v492
        %v993 = vunpack.c.h.b16 %v492
        %v994 = vunpack.c.l.b16 %v493
        %v995 = vunpack.c.h.b16 %v493
        %v996 = vunpack.c.l.b16 %v494
        %v997 = vunpack.c.h.b16 %v494
        %v998 = vunpack.c.l.b16 %v495
        %v999 = vunpack.c.h.b16 %v495
        %v1000 = vunpack.c.l.b16 %v496
        %v1001 = vunpack.c.h.b16 %v496
        %v1002 = vunpack.c.l.b16 %v497
        %v1003 = vunpack.c.h.b16 %v497
        %v1004 = vunpack.c.l.b16 %v498
        %v1005 = vunpack.c.h.b16 %v498
        %v1006 = vunpack.c.l.b16 %v499
        %v1007 = vunpack.c.h.b16 %v499
        %v1008 = vunpack.c.l.b16 %v500
        %v1009 = vunpack.c.h.b16 %v500
        %v1010 = vunpack.c.l.b16 %v501
        %v1011 = vunpack.c.h.b16 %v501
        %v1012 = vunpack.c.l.b16 %v502
        %v1013 = vunpack.c.h.b16 %v502
        %v1014 = vunpack.c.l.b16 %v503
        %v1015 = vunpack.c.h.b16 %v503
        %v1016 = vunpack.c.l.b16 %v504
        %v1017 = vunpack.c.h.b16 %v504
        %v1018 = vunpack.c.l.b16 %v505
        %v1019 = vunpack.c.h.b16 %v505
        %v1020 = vunpack.c.l.b16 %v506
        %v1021 = vunpack.c.h.b16 %v506
        %v1022 = vunpack.c.l.b16 %v507
        %v1023 = vunpack.c.h.b16 %v507
        %v1024 = vunpack.c.l.b16 %v508
        %v1025 = vunpack.c.h.b16 %v508
        %v1026 = vunpack.c.l.b16 %v509
        %v1027 = vunpack.c.h.b16 %v509
        %v1028 = vunpack.c.l.b16 %v510
        %v1029 = vunpack.c.h.b16 %v510
        %v1030 = vunpack.c.l.b16 %v511
        %v1031 = vunpack.c.h.b16 %v511
        %v1032 = vunpack.c.l.b16 %v512
        %v1033 = vunpack.c.h.b16 %v512
        %v1034 = vunpack.c.l.b16 %v513
        %v1035 = vunpack.c.h.b16 %v513
        %v1036 = vunpack.c.l.b16 %v514
        %v1037 = vunpack.c.h.b16 %v514
        %v1038 = vunpack.c.l.b16 %v515
        %v1039 = vunpack.c.h.b16 %v515
        %v1040 = vunpack.c.l.b16 %v516
        %v1041 = vunpack.c.h.b16 %v516
        %v1042 = vunpack.c.l.b16 %v517
        %v1043 = vunpack.c.h.b16 %v517
        %v1044 = vunpack.c.l.b16 %v518
        %v1045 = vunpack.c.h.b16 %v518
        %v1046 = vunpack.c.l.b16 %v519
        %v1047 = vunpack.c.h.b16 %v519
        %v1048 = vunpack.c.l.b16 %v520
        %v1049 = vunpack.c.h.b16 %v520
        %v1050 = vunpack.c.l.b16 %v521
        %v1051 = vunpack.c.h.b16 %v521
        %v1052 = vunpack.c.l.b16 %v522
        %v1053 = vunpack.c.h.b16 %v522
        %v1054 = vunpack.c.l.b16 %v523
        %v1055 = vunpack.c.h.b16 %v523
        %v1056 = vunpack.c.l.b16 %v524
        %v1057 = vunpack.c.h.b16 %v524
        %v1058 = vunpack.c.l.b16 %v525
        %v1059 = vunpack.c.h.b16 %v525
        %v1060 = vunpack.c.l.b16 %v526
        %v1061 = vunpack.c.h.b16 %v526
        %v1062 = vunpack.c.l.b16 %v527
        %v1063 = vunpack.c.h.b16 %v527
        %v1064 = vunpack.c.l.b16 %v528
        %v1065 = vunpack.c.h.b16 %v528
        %v1066 = vunpack.c.l.b16 %v529
        %v1067 = vunpack.c.h.b16 %v529
        %v1068 = vunpack.c.l.b16 %v530
        %v1069 = vunpack.c.h.b16 %v530
        %v1070 = vunpack.c.l.b16 %v531
        %v1071 = vunpack.c.h.b16 %v531
        %v1072 = vunpack.c.l.b16 %v532
        %v1073 = vunpack.c.h.b16 %v532
        %v1074 = vunpack.c.l.b16 %v533
        %v1075 = vunpack.c.h.b16 %v533
        %v1076 = vunpack.c.l.b16 %v534
        %v1077 = vunpack.c.h.b16 %v534
        %v1078 = vunpack.c.l.b16 %v535
        %v1079 = vunpack.c.h.b16 %v535
        %v1080 = vunpack.c.l.b16 %v536
        %v1081 = vunpack.c.h.b16 %v536
        %v1082 = vunpack.c.l.b16 %v537
        %v1083 = vunpack.c.h.b16 %v537
        %v1084 = vunpack.c.l.b16 %v538
        %v1085 = vunpack.c.h.b16 %v538
        %v1086 = vunpack.c.l.b16 %v539
        %v1087 = vunpack.c.h.b16 %v539
        %v1088 = vunpack.c.l.b16 %v540
        %v1089 = vunpack.c.h.b16 %v540
        %v1090 = vunpack.c.l.b16 %v541
        %v1091 = vunpack.c.h.b16 %v541
        %v1092 = vpack.c.b16 %v906, %v900
        %v1093 = vpack.c.b16 %v907, %v901
        %v1094 = vpack.c.b16 %v908, %v902
        %v1095 = vpack.c.b16 %v909, %v903
        %v1096 = vpack.c.b16 %v910, %v904
        %v1097 = vpack.c.b16 %v911, %v905
        %v1098 = vpack.c.b16 %v918, %v912
        %v1099 = vpack.c.b16 %v919, %v913
        %v1100 = vpack.c.b16 %v920, %v914
        %v1101 = vpack.c.b16 %v921, %v915
        %v1102 = vpack.c.b16 %v922, %v916
        %v1103 = vpack.c.b16 %v923, %v917
        %v1104 = vpack.c.b16 %v930, %v924
        %v1105 = vpack.c.b16 %v931, %v925
        %v1106 = vpack.c.b16 %v932, %v926
        %v1107 = vpack.c.b16 %v933, %v927
        %v1108 = vpack.c.b16 %v934, %v928
        %v1109 = vpack.c.b16 %v935, %v929
        %v1110 = vpack.c.b16 %v942, %v936
        %v1111 = vpack.c.b16 %v943, %v937
        %v1112 = vpack.c.b16 %v944, %v938
        %v1113 = vpack.c.b16 %v945, %v939
        %v1114 = vpack.c.b16 %v946, %v940
        %v1115 = vpack.c.b16 %v947, %v941
        %v1116 = vpack.c.b16 %v954, %v948
        %v1117 = vpack.c.b16 %v955, %v949
        %v1118 = vpack.c.b16 %v956, %v950
        %v1119 = vpack.c.b16 %v957, %v951
        %v1120 = vpack.c.b16 %v958, %v952
        %v1121 = vpack.c.b16 %v959, %v953
        %v1122 = vpack.c.b16 %v966, %v960
        %v1123 = vpack.c.b16 %v967, %v961
        %v1124 = vpack.c.b16 %v968, %v962
        %v1125 = vpack.c.b16 %v969, %v963
        %v1126 = vpack.c.b16 %v970, %v964
        %v1127 = vpack.c.b16 %v971, %v965
        %v1128 = vpack.c.b16 %v978, %v972
        %v1129 = vpack.c.b16 %v979, %v973
        %v1130 = vpack.c.b16 %v980, %v974
        %v1131 = vpack.c.b16 %v981, %v975
        %v1132 = vpack.c.b16 %v982, %v976
        %v1133 = vpack.c.b16 %v983, %v977
        %v1134 = vpack.c.b16 %v990, %v984
        %v1135 = vpack.c.b16 %v991, %v985
        %v1136 = vpack.c.b16 %v992, %v986
        %v1137 = vpack.c.b16 %v993, %v987
        %v1138 = vpack.c.b16 %v994, %v988
        %v1139 = vpack.c.b16 %v995, %v989
        %v1140 = vpack.c.b16 %v1002, %v996
        %v1141 = vpack.c.b16 %v1003, %v997
        %v1142 = vpack.c.b16 %v1004, %v998
        %v1143 = vpack.c.b16 %v1005, %v999
        %v1144 = vpack.c.b16 %v1006, %v1000
        %v1145 = vpack.c.b16 %v1007, %v1001
        %v1146 = vpack.c.b16 %v1014, %v1008
        %v1147 = vpack.c.b16 %v1015, %v1009
        %v1148 = vpack.c.b16 %v1016, %v1010
        %v1149 = vpack.c.b16 %v1017, %v1011
        %v1150 = vpack.c.b16 %v1018, %v1012
        %v1151 = vpack.c.b16 %v1019, %v1013
        %v1152 = vpack.c.b16 %v1026, %v1020
        %v1153 = vpack.c.b16 %v1027, %v1021
        %v1154 = vpack.c.b16 %v1028, %v1022
        %v1155 = vpack.c.b16 %v1029, %v1023
        %v1156 = vpack.c.b16 %v1030, %v1024
        %v1157 = vpack.c.b16 %v1031, %v1025
        %v1158 = vpack.c.b16 %v1038, %v1032
        %v1159 = vpack.c.b16 %v1039, %v1033
        %v1160 = vpack.c.b16 %v1040, %v1034
        %v1161 = vpack.c.b16 %v1041, %v1035
        %v1162 = vpack.c.b16 %v1042, %v1036
        %v1163 = vpack.c.b16 %v1043, %v1037
        %v1164 = vpack.c.b16 %v1050, %v1044
        %v1165 = vpack.c.b16 %v1051, %v1045
        %v1166 = vpack.c.b16 %v1052, %v1046
        %v1167 = vpack.c.b16 %v1053, %v1047
        %v1168 = vpack.c.b16 %v1054, %v1048
        %v1169 = vpack.c.b16 %v1055, %v1049
        %v1170 = vpack.c.b16 %v1062, %v1056
        %v1171 = vpack.c.b16 %v1063, %v1057
        %v1172 = vpack.c.b16 %v1064, %v1058
        %v1173 = vpack.c.b16 %v1065, %v1059
        %v1174 = vpack.c.b16 %v1066, %v1060
        %v1175 = vpack.c.b16 %v1067, %v1061
        %v1176 = vpack.c.b16 %v1074, %v1068
        %v1177 = vpack.c.b16 %v1075, %v1069
        %v1178 = vpack.c.b16 %v1076, %v1070
        %v1179 = vpack.c.b16 %v1077, %v1071
        %v1180 = vpack.c.b16 %v1078, %v1072
        %v1181 = vpack.c.b16 %v1079, %v1073
        %v1182 = vpack.c.b16 %v1086, %v1080
        %v1183 = vpack.c.b16 %v1087, %v1081
        %v1184 = vpack.c.b16 %v1088, %v1082
        %v1185 = vpack.c.b16 %v1089, %v1083
        %v1186 = vpack.c.b16 %v1090, %v1084
        %v1187 = vpack.c.b16 %v1091, %v1085
        %1284 = vmatprep.subr.bf16.mxu0 %v1093
        %1285 = vmatpush1.bf16.msra.mxu0 %v1092
        %1286 = vmatprep.subr.bf16.mxu0 %v1099
        %1287 = vmatpush1.bf16.msra.mxu0 %v1098
        %1288 = vmatprep.subr.bf16.mxu0 %v1105
        %1289 = vmatpush1.bf16.msra.mxu0 %v1104
        %1290 = vmatprep.subr.bf16.mxu0 %v1111
        %1291 = vmatpush1.bf16.msra.mxu0 %v1110
        %1292 = vmatprep.subr.bf16.mxu0 %v1117
        %1293 = vmatpush1.bf16.msra.mxu0 %v1116
        %1294 = vmatprep.subr.bf16.mxu0 %v1123
        %1295 = vmatpush1.bf16.msra.mxu0 %v1122
        %1296 = vmatprep.subr.bf16.mxu0 %v1129
        %1297 = vmatpush1.bf16.msra.mxu0 %v1128
        %1298 = vmatprep.subr.bf16.mxu0 %v1135
        %1299 = vmatpush1.bf16.msra.mxu0 %v1134
        %1300 = vmatprep.subr.bf16.mxu0 %v1141
        %1301 = vmatpush1.bf16.msra.mxu0 %v1140
        %1302 = vmatprep.subr.bf16.mxu0 %v1147
        %1303 = vmatpush1.bf16.msra.mxu0 %v1146
        %1304 = vmatprep.subr.bf16.mxu0 %v1153
        %1305 = vmatpush1.bf16.msra.mxu0 %v1152
        %1306 = vmatprep.subr.bf16.mxu0 %v1159
        %1307 = vmatpush1.bf16.msra.mxu0 %v1158
        %1308 = vmatprep.subr.bf16.mxu0 %v1165
        %1309 = vmatpush1.bf16.msra.mxu0 %v1164
        %1310 = vmatprep.subr.bf16.mxu0 %v1171
        %1311 = vmatpush1.bf16.msra.mxu0 %v1170
        %1312 = vmatprep.subr.bf16.mxu0 %v1177
        %1313 = vmatpush1.bf16.msra.mxu0 %v1176
        %1314 = vmatprep.subr.bf16.mxu0 %v1183
        %1315 = vmatpush1.bf16.msra.mxu0 %v1182
        %1316 = vmatprep.mubr.bf16.mxu0 %v803
        %1317 = vmatmul.mubr.bf16.gmra.mrb[0].mxu0 %v802
        %v1318 = vpop.f32.mrb[0].mxu0
        %v1319 = vadd.f32 0.0, %v1318
        %v1320 = vpop.f32.mrb[0].mxu0
        %v1321 = vadd.f32 0.0, %v1320
        %v1322 = vpop.f32.mrb[0].mxu0
        %v1323 = vadd.f32 0.0, %v1322
        %v1324 = vpop.f32.mrb[0].mxu0
        %v1325 = vadd.f32 0.0, %v1324
        %1326 = vdwg.mxu0
        %1327 = vmatprep.subr.bf16.mxu0 %v1095
        %1328 = vmatpush1.bf16.msra.mxu0 %v1094
        %1329 = vmatprep.subr.bf16.mxu0 %v1101
        %1330 = vmatpush1.bf16.msra.mxu0 %v1100
        %1331 = vmatprep.subr.bf16.mxu0 %v1107
        %1332 = vmatpush1.bf16.msra.mxu0 %v1106
        %1333 = vmatprep.subr.bf16.mxu0 %v1113
        %1334 = vmatpush1.bf16.msra.mxu0 %v1112
        %1335 = vmatprep.subr.bf16.mxu0 %v1119
        %1336 = vmatpush1.bf16.msra.mxu0 %v1118
        %1337 = vmatprep.subr.bf16.mxu0 %v1125
        %1338 = vmatpush1.bf16.msra.mxu0 %v1124
        %1339 = vmatprep.subr.bf16.mxu0 %v1131
        %1340 = vmatpush1.bf16.msra.mxu0 %v1130
        %1341 = vmatprep.subr.bf16.mxu0 %v1137
        %1342 = vmatpush1.bf16.msra.mxu0 %v1136
        %1343 = vmatprep.subr.bf16.mxu0 %v1143
        %1344 = vmatpush1.bf16.msra.mxu0 %v1142
        %1345 = vmatprep.subr.bf16.mxu0 %v1149
        %1346 = vmatpush1.bf16.msra.mxu0 %v1148
        %1347 = vmatprep.subr.bf16.mxu0 %v1155
        %1348 = vmatpush1.bf16.msra.mxu0 %v1154
        %1349 = vmatprep.subr.bf16.mxu0 %v1161
        %1350 = vmatpush1.bf16.msra.mxu0 %v1160
        %1351 = vmatprep.subr.bf16.mxu0 %v1167
        %1352 = vmatpush1.bf16.msra.mxu0 %v1166
        %1353 = vmatprep.subr.bf16.mxu0 %v1173
        %1354 = vmatpush1.bf16.msra.mxu0 %v1172
        %1355 = vmatprep.subr.bf16.mxu0 %v1179
        %1356 = vmatpush1.bf16.msra.mxu0 %v1178
        %1357 = vmatprep.subr.bf16.mxu0 %v1185
        %1358 = vmatpush1.bf16.msra.mxu0 %v1184
        %1359 = vmatprep.mubr.bf16.mxu0 %v803
        %1360 = vmatmul.mubr.bf16.gmra.mrb[0].mxu0 %v802
        %v1361 = vpop.f32.mrb[0].mxu0
        %v1362 = vadd.f32 0.0, %v1361
        %v1363 = vpop.f32.mrb[0].mxu0
        %v1364 = vadd.f32 0.0, %v1363
        %v1365 = vpop.f32.mrb[0].mxu0
        %v1366 = vadd.f32 0.0, %v1365
        %v1367 = vpop.f32.mrb[0].mxu0
        %v1368 = vadd.f32 0.0, %v1367
        %1369 = vdwg.mxu0
        %1370 = vmatprep.subr.bf16.mxu0 %v1097
        %1371 = vmatpush1.bf16.msra.mxu0 %v1096
        %1372 = vmatprep.subr.bf16.mxu0 %v1103
        %1373 = vmatpush1.bf16.msra.mxu0 %v1102
        %1374 = vmatprep.subr.bf16.mxu0 %v1109
        %1375 = vmatpush1.bf16.msra.mxu0 %v1108
        %1376 = vmatprep.subr.bf16.mxu0 %v1115
        %1377 = vmatpush1.bf16.msra.mxu0 %v1114
        %1378 = vmatprep.subr.bf16.mxu0 %v1121
        %1379 = vmatpush1.bf16.msra.mxu0 %v1120
        %1380 = vmatprep.subr.bf16.mxu0 %v1127
        %1381 = vmatpush1.bf16.msra.mxu0 %v1126
        %1382 = vmatprep.subr.bf16.mxu0 %v1133
        %1383 = vmatpush1.bf16.msra.mxu0 %v1132
        %1384 = vmatprep.subr.bf16.mxu0 %v1139
        %1385 = vmatpush1.bf16.msra.mxu0 %v1138
        %1386 = vmatprep.subr.bf16.mxu0 %v1145
        %1387 = vmatpush1.bf16.msra.mxu0 %v1144
        %1388 = vmatprep.subr.bf16.mxu0 %v1151
        %1389 = vmatpush1.bf16.msra.mxu0 %v1150
        %1390 = vmatprep.subr.bf16.mxu0 %v1157
        %1391 = vmatpush1.bf16.msra.mxu0 %v1156
        %1392 = vmatprep.subr.bf16.mxu0 %v1163
        %1393 = vmatpush1.bf16.msra.mxu0 %v1162
        %1394 = vmatprep.subr.bf16.mxu0 %v1169
        %1395 = vmatpush1.bf16.msra.mxu0 %v1168
        %1396 = vmatprep.subr.bf16.mxu0 %v1175
        %1397 = vmatpush1.bf16.msra.mxu0 %v1174
        %1398 = vmatprep.subr.bf16.mxu0 %v1181
        %1399 = vmatpush1.bf16.msra.mxu0 %v1180
        %1400 = vmatprep.subr.bf16.mxu0 %v1187
        %1401 = vmatpush1.bf16.msra.mxu0 %v1186
        %1402 = vmatprep.mubr.bf16.mxu0 %v803
        %1403 = vmatmul.mubr.bf16.gmra.mrb[0].mxu0 %v802
        %v1404 = vpop.f32.mrb[0].mxu0
        %v1405 = vadd.f32 0.0, %v1404
        %v1406 = vpop.f32.mrb[0].mxu0
        %v1407 = vadd.f32 0.0, %v1406
        %v1408 = vpop.f32.mrb[0].mxu0
        %v1409 = vadd.f32 0.0, %v1408
        %v1410 = vpop.f32.mrb[0].mxu0
        %v1411 = vadd.f32 0.0, %v1410
        %1412 = vdwg.mxu0
        %v1413 = vmul.f32 %v1319, %v433
        %v1414 = vmul.f32 %v1323, %v434
        %1415 = vrot.lane.b32.xlu0 %v1319, 64
        %v1416 = vpop.permute.xlu0 %1415
        %1417 = vrot.lane.b32.xlu0 %v1323, 64
        %v1418 = vpop.permute.xlu0 %1417
        %v1419 = vmul.f32 %v1416, %v435
        %v1420 = vmul.f32 %v1418, %v436
        %v1421 = vadd.f32 %v1413, %v1419
        %v1422 = vadd.f32 %v1414, %v1420
        %v1423 = vmul.f32 %v1362, %v433
        %v1424 = vmul.f32 %v1366, %v434
        %1425 = vrot.lane.b32.xlu0 %v1362, 64
        %v1426 = vpop.permute.xlu0 %1425
        %1427 = vrot.lane.b32.xlu0 %v1366, 64
        %v1428 = vpop.permute.xlu0 %1427
        %v1429 = vmul.f32 %v1426, %v435
        %v1430 = vmul.f32 %v1428, %v436
        %v1431 = vadd.f32 %v1423, %v1429
        %v1432 = vadd.f32 %v1424, %v1430
        %1433 = vmatprep.subr.mxu0 0.0
        %1434 = vmatpush1.xpose.msra.mxu0 %v1431
        %1435 = vmatprep.subr.mxu0 0.0
        %1436 = vmatpush1.xpose.msra.mxu0 %v1432
        %1437 = vmatprep.subr.mxu0 0.0
        %1438 = vmatpush1.xpose.msra.mxu0 0.0
        %1439 = vmatprep.subr.mxu0 0.0
        %1440 = vmatpush1.xpose.msra.mxu0 0.0
        %1441 = vmatprep.subr.mxu0 0.0
        %1442 = vmatpush1.xpose.msra.mxu0 0.0
        %1443 = vmatprep.subr.mxu0 0.0
        %1444 = vmatpush1.xpose.msra.mxu0 0.0
        %1445 = vmatprep.subr.mxu0 0.0
        %1446 = vmatpush1.xpose.msra.mxu0 0.0
        %1447 = vmatprep.subr.mxu0 0.0
        %1448 = vmatpush1.xpose.msra.mxu0 0.0
        %1449 = vmatprep.subr.mxu0 0.0
        %1450 = vmatpush1.xpose.msra.mxu0 0.0
        %1451 = vmatprep.subr.mxu0 0.0
        %1452 = vmatpush1.xpose.msra.mxu0 0.0
        %1453 = vmatprep.subr.mxu0 0.0
        %1454 = vmatpush1.xpose.msra.mxu0 0.0
        %1455 = vmatprep.subr.mxu0 0.0
        %1456 = vmatpush1.xpose.msra.mxu0 0.0
        %1457 = vmatprep.subr.mxu0 0.0
        %1458 = vmatpush1.xpose.msra.mxu0 0.0
        %1459 = vmatprep.subr.mxu0 0.0
        %1460 = vmatpush1.xpose.msra.mxu0 0.0
        %1461 = vmatprep.subr.mxu0 0.0
        %1462 = vmatpush1.xpose.msra.mxu0 0.0
        %1463 = vmatprep.subr.mxu0 0.0
        %1464 = vmatpush1.xpose.msra.mxu0 0.0
        %1465 = vmatprep.subr.mxu0 0.0
        %1466 = vmatpush1.xpose.msra.mxu0 0.0
        %1467 = vmatprep.subr.mxu0 0.0
        %1468 = vmatpush1.xpose.msra.mxu0 0.0
        %1469 = vmatprep.subr.mxu0 0.0
        %1470 = vmatpush1.xpose.msra.mxu0 0.0
        %1471 = vmatprep.subr.mxu0 0.0
        %1472 = vmatpush1.xpose.msra.mxu0 0.0
        %1473 = vmatprep.subr.mxu0 0.0
        %1474 = vmatpush1.xpose.msra.mxu0 0.0
        %1475 = vmatprep.subr.mxu0 0.0
        %1476 = vmatpush1.xpose.msra.mxu0 0.0
        %1477 = vmatprep.subr.mxu0 0.0
        %1478 = vmatpush1.xpose.msra.mxu0 0.0
        %1479 = vmatprep.subr.mxu0 0.0
        %1480 = vmatpush1.xpose.msra.mxu0 0.0
        %1481 = vmatprep.subr.mxu0 0.0
        %1482 = vmatpush1.xpose.msra.mxu0 0.0
        %1483 = vmatprep.subr.mxu0 0.0
        %1484 = vmatpush1.xpose.msra.mxu0 0.0
        %1485 = vmatprep.subr.mxu0 0.0
        %1486 = vmatpush1.xpose.msra.mxu0 0.0
        %1487 = vmatprep.subr.mxu0 0.0
        %1488 = vmatpush1.xpose.msra.mxu0 0.0
        %1489 = vmatprep.subr.mxu0 0.0
        %1490 = vmatpush1.xpose.msra.mxu0 0.0
        %1491 = vmatprep.subr.mxu0 0.0
        %1492 = vmatpush1.xpose.msra.mxu0 0.0
        %1493 = vmatprep.subr.mxu0 0.0
        %1494 = vmatpush1.xpose.msra.mxu0 0.0
        %1495 = vmatprep.subr.mxu0 0.0
        %1496 = vmatpush1.xpose.msra.mxu0 0.0
        %1497 = vmatprep.mubr.f32.mxu0 0.0
        %1498 = vmatmul.mubr.f32.gmra.mrb[0].mxu0 %v1421
        %v1499 = vpop.f32.mrb[0].mxu0
        %v1500 = vadd.f32 %v437, %v1499
        %v1501 = vpop.f32.mrb[0].mxu0
        %1502 = vmatprep.mubr.f32.mxu0 0.0
        %1503 = vmatmul.mubr.f32.gmra.mrb[0].mxu0 %v1422
        %v1504 = vpop.f32.mrb[0].mxu0
        %v1505 = vadd.f32 %v438, %v1504
        %v1506 = vpop.f32.mrb[0].mxu0
        %1507 = vdwg.mxu0
        %vm1508 = vcmask 130048
        %v1509 = vsel %vm1508, %v1500, -inf
        %1510 = vmax.xlane.f32.xlu0 %v1509
        %v1511 = vpop.xlane.xlu0 %1510
        %v1512 = vsel %vm1508, %v1505, -inf
        %1513 = vmax.xlane.f32.xlu0 %v1512
        %v1514 = vpop.xlane.xlu0 %1513
        %v1515 = vsub.f32 %v1500, %v1511
        %v1516 = vsub.f32 %v1505, %v1514
        %v1517 = vmul.f32 %v1515, 1.442695
        %v1518 = vpow.pop %v1517
        %v1519 = vmul.f32 %v1516, 1.442695
        %v1520 = vpow.pop %v1519
        %v1521 = vsel %vm1508, %v1518, 0.0
        %1522 = vadd.xlane.f32.xlu0 %v1521
        %v1523 = vpop.xlane.xlu0 %1522
        %v1524 = vsel %vm1508, %v1520, 0.0
        %1525 = vadd.xlane.f32.xlu0 %v1524
        %v1526 = vpop.xlane.xlu0 %1525
        %v1527 = vrcp.pop %v1523
        %v1528 = vrcp.pop %v1526
        %v1529 = vmul.f32 %v1518, %v1527
        %v1530 = vmul.f32 %v1520, %v1528
        %v1532 = vsel %vm1508, %v1529, 0
        %v1535 = vsel %vm1508, %v1530, 0
        %1537 = vmatprep.subr.mxu0 0.0
        %1538 = vmatpush1.msra.mxu0 %v1405
        %1539 = vmatprep.subr.mxu0 0.0
        %1540 = vmatpush1.msra.mxu0 %v1409
        %1541 = vmatprep.subr.mxu0 0.0
        %1542 = vmatpush1.msra.mxu0 0.0
        %1543 = vmatprep.subr.mxu0 0.0
        %1544 = vmatpush1.msra.mxu0 0.0
        %1545 = vmatprep.subr.mxu0 0.0
        %1546 = vmatpush1.msra.mxu0 0.0
        %1547 = vmatprep.subr.mxu0 0.0
        %1548 = vmatpush1.msra.mxu0 0.0
        %1549 = vmatprep.subr.mxu0 0.0
        %1550 = vmatpush1.msra.mxu0 0.0
        %1551 = vmatprep.subr.mxu0 0.0
        %1552 = vmatpush1.msra.mxu0 0.0
        %1553 = vmatprep.subr.mxu0 0.0
        %1554 = vmatpush1.msra.mxu0 0.0
        %1555 = vmatprep.subr.mxu0 0.0
        %1556 = vmatpush1.msra.mxu0 0.0
        %1557 = vmatprep.subr.mxu0 0.0
        %1558 = vmatpush1.msra.mxu0 0.0
        %1559 = vmatprep.subr.mxu0 0.0
        %1560 = vmatpush1.msra.mxu0 0.0
        %1561 = vmatprep.subr.mxu0 0.0
        %1562 = vmatpush1.msra.mxu0 0.0
        %1563 = vmatprep.subr.mxu0 0.0
        %1564 = vmatpush1.msra.mxu0 0.0
        %1565 = vmatprep.subr.mxu0 0.0
        %1566 = vmatpush1.msra.mxu0 0.0
        %1567 = vmatprep.subr.mxu0 0.0
        %1568 = vmatpush1.msra.mxu0 0.0
        %1569 = vmatprep.subr.mxu0 0.0
        %1570 = vmatpush1.msra.mxu0 0.0
        %1571 = vmatprep.subr.mxu0 0.0
        %1572 = vmatpush1.msra.mxu0 0.0
        %1573 = vmatprep.subr.mxu0 0.0
        %1574 = vmatpush1.msra.mxu0 0.0
        %1575 = vmatprep.subr.mxu0 0.0
        %1576 = vmatpush1.msra.mxu0 0.0
        %1577 = vmatprep.subr.mxu0 0.0
        %1578 = vmatpush1.msra.mxu0 0.0
        %1579 = vmatprep.subr.mxu0 0.0
        %1580 = vmatpush1.msra.mxu0 0.0
        %1581 = vmatprep.subr.mxu0 0.0
        %1582 = vmatpush1.msra.mxu0 0.0
        %1583 = vmatprep.subr.mxu0 0.0
        %1584 = vmatpush1.msra.mxu0 0.0
        %1585 = vmatprep.subr.mxu0 0.0
        %1586 = vmatpush1.msra.mxu0 0.0
        %1587 = vmatprep.subr.mxu0 0.0
        %1588 = vmatpush1.msra.mxu0 0.0
        %1589 = vmatprep.subr.mxu0 0.0
        %1590 = vmatpush1.msra.mxu0 0.0
        %1591 = vmatprep.subr.mxu0 0.0
        %1592 = vmatpush1.msra.mxu0 0.0
        %1593 = vmatprep.subr.mxu0 0.0
        %1594 = vmatpush1.msra.mxu0 0.0
        %1595 = vmatprep.subr.mxu0 0.0
        %1596 = vmatpush1.msra.mxu0 0.0
        %1597 = vmatprep.subr.mxu0 0.0
        %1598 = vmatpush1.msra.mxu0 0.0
        %1599 = vmatprep.subr.mxu0 0.0
        %1600 = vmatpush1.msra.mxu0 0.0
        %1601 = vmatprep.mubr.f32.mxu0 0.0
        %1602 = vmatmul.mubr.f32.gmra.mrb[0].mxu0 %v1532
        %v1603 = vpop.f32.mrb[0].mxu0
        %v1604 = vadd.f32 0.0, %v1603
        %v1605 = vpop.f32.mrb[0].mxu0
        %1606 = vmatprep.mubr.f32.mxu0 0.0
        %1607 = vmatmul.mubr.f32.gmra.mrb[0].mxu0 %v1535
        %v1608 = vpop.f32.mrb[0].mxu0
        %v1609 = vadd.f32 0.0, %v1608
        %v1610 = vpop.f32.mrb[0].mxu0
        %1611 = vdwg.mxu0
        %v1612 = vmul.f32 %v1321, %v433
        %v1613 = vmul.f32 %v1325, %v434
        %1614 = vrot.lane.b32.xlu0 %v1321, 64
        %v1615 = vpop.permute.xlu0 %1614
        %1616 = vrot.lane.b32.xlu0 %v1325, 64
        %v1617 = vpop.permute.xlu0 %1616
        %v1618 = vmul.f32 %v1615, %v435
        %v1619 = vmul.f32 %v1617, %v436
        %v1620 = vadd.f32 %v1612, %v1618
        %v1621 = vadd.f32 %v1613, %v1619
        %v1622 = vmul.f32 %v1364, %v433
        %v1623 = vmul.f32 %v1368, %v434
        %1624 = vrot.lane.b32.xlu0 %v1364, 64
        %v1625 = vpop.permute.xlu0 %1624
        %1626 = vrot.lane.b32.xlu0 %v1368, 64
        %v1627 = vpop.permute.xlu0 %1626
        %v1628 = vmul.f32 %v1625, %v435
        %v1629 = vmul.f32 %v1627, %v436
        %v1630 = vadd.f32 %v1622, %v1628
        %v1631 = vadd.f32 %v1623, %v1629
        %1632 = vmatprep.subr.mxu0 0.0
        %1633 = vmatpush1.xpose.msra.mxu0 %v1630
        %1634 = vmatprep.subr.mxu0 0.0
        %1635 = vmatpush1.xpose.msra.mxu0 %v1631
        %1636 = vmatprep.subr.mxu0 0.0
        %1637 = vmatpush1.xpose.msra.mxu0 0.0
        %1638 = vmatprep.subr.mxu0 0.0
        %1639 = vmatpush1.xpose.msra.mxu0 0.0
        %1640 = vmatprep.subr.mxu0 0.0
        %1641 = vmatpush1.xpose.msra.mxu0 0.0
        %1642 = vmatprep.subr.mxu0 0.0
        %1643 = vmatpush1.xpose.msra.mxu0 0.0
        %1644 = vmatprep.subr.mxu0 0.0
        %1645 = vmatpush1.xpose.msra.mxu0 0.0
        %1646 = vmatprep.subr.mxu0 0.0
        %1647 = vmatpush1.xpose.msra.mxu0 0.0
        %1648 = vmatprep.subr.mxu0 0.0
        %1649 = vmatpush1.xpose.msra.mxu0 0.0
        %1650 = vmatprep.subr.mxu0 0.0
        %1651 = vmatpush1.xpose.msra.mxu0 0.0
        %1652 = vmatprep.subr.mxu0 0.0
        %1653 = vmatpush1.xpose.msra.mxu0 0.0
        %1654 = vmatprep.subr.mxu0 0.0
        %1655 = vmatpush1.xpose.msra.mxu0 0.0
        %1656 = vmatprep.subr.mxu0 0.0
        %1657 = vmatpush1.xpose.msra.mxu0 0.0
        %1658 = vmatprep.subr.mxu0 0.0
        %1659 = vmatpush1.xpose.msra.mxu0 0.0
        %1660 = vmatprep.subr.mxu0 0.0
        %1661 = vmatpush1.xpose.msra.mxu0 0.0
        %1662 = vmatprep.subr.mxu0 0.0
        %1663 = vmatpush1.xpose.msra.mxu0 0.0
        %1664 = vmatprep.subr.mxu0 0.0
        %1665 = vmatpush1.xpose.msra.mxu0 0.0
        %1666 = vmatprep.subr.mxu0 0.0
        %1667 = vmatpush1.xpose.msra.mxu0 0.0
        %1668 = vmatprep.subr.mxu0 0.0
        %1669 = vmatpush1.xpose.msra.mxu0 0.0
        %1670 = vmatprep.subr.mxu0 0.0
        %1671 = vmatpush1.xpose.msra.mxu0 0.0
        %1672 = vmatprep.subr.mxu0 0.0
        %1673 = vmatpush1.xpose.msra.mxu0 0.0
        %1674 = vmatprep.subr.mxu0 0.0
        %1675 = vmatpush1.xpose.msra.mxu0 0.0
        %1676 = vmatprep.subr.mxu0 0.0
        %1677 = vmatpush1.xpose.msra.mxu0 0.0
        %1678 = vmatprep.subr.mxu0 0.0
        %1679 = vmatpush1.xpose.msra.mxu0 0.0
        %1680 = vmatprep.subr.mxu0 0.0
        %1681 = vmatpush1.xpose.msra.mxu0 0.0
        %1682 = vmatprep.subr.mxu0 0.0
        %1683 = vmatpush1.xpose.msra.mxu0 0.0
        %1684 = vmatprep.subr.mxu0 0.0
        %1685 = vmatpush1.xpose.msra.mxu0 0.0
        %1686 = vmatprep.subr.mxu0 0.0
        %1687 = vmatpush1.xpose.msra.mxu0 0.0
        %1688 = vmatprep.subr.mxu0 0.0
        %1689 = vmatpush1.xpose.msra.mxu0 0.0
        %1690 = vmatprep.subr.mxu0 0.0
        %1691 = vmatpush1.xpose.msra.mxu0 0.0
        %1692 = vmatprep.subr.mxu0 0.0
        %1693 = vmatpush1.xpose.msra.mxu0 0.0
        %1694 = vmatprep.subr.mxu0 0.0
        %1695 = vmatpush1.xpose.msra.mxu0 0.0
        %1696 = vmatprep.mubr.f32.mxu0 0.0
        %1697 = vmatmul.mubr.f32.gmra.mrb[0].mxu0 %v1620
        %v1698 = vpop.f32.mrb[0].mxu0
        %v1699 = vadd.f32 %v437, %v1698
        %v1700 = vpop.f32.mrb[0].mxu0
        %1701 = vmatprep.mubr.f32.mxu0 0.0
        %1702 = vmatmul.mubr.f32.gmra.mrb[0].mxu0 %v1621
        %v1703 = vpop.f32.mrb[0].mxu0
        %v1704 = vadd.f32 %v438, %v1703
        %v1705 = vpop.f32.mrb[0].mxu0
        %1706 = vdwg.mxu0
        %v1707 = vsel %vm1508, %v1699, -inf
        %1708 = vmax.xlane.f32.xlu0 %v1707
        %v1709 = vpop.xlane.xlu0 %1708
        %v1710 = vsel %vm1508, %v1704, -inf
        %1711 = vmax.xlane.f32.xlu0 %v1710
        %v1712 = vpop.xlane.xlu0 %1711
        %v1713 = vsub.f32 %v1699, %v1709
        %v1714 = vsub.f32 %v1704, %v1712
        %v1715 = vmul.f32 %v1713, 1.442695
        %v1716 = vpow.pop %v1715
        %v1717 = vmul.f32 %v1714, 1.442695
        %v1718 = vpow.pop %v1717
        %v1719 = vsel %vm1508, %v1716, 0.0
        %1720 = vadd.xlane.f32.xlu0 %v1719
        %v1721 = vpop.xlane.xlu0 %1720
        %v1722 = vsel %vm1508, %v1718, 0.0
        %1723 = vadd.xlane.f32.xlu0 %v1722
        %v1724 = vpop.xlane.xlu0 %1723
        %v1725 = vrcp.pop %v1721
        %v1726 = vrcp.pop %v1724
        %v1727 = vmul.f32 %v1716, %v1725
        %v1728 = vmul.f32 %v1718, %v1726
        %v1730 = vsel %vm1508, %v1727, 0
        %v1733 = vsel %vm1508, %v1728, 0
        %1735 = vmatprep.subr.mxu0 0.0
        %1736 = vmatpush1.msra.mxu0 %v1407
        %1737 = vmatprep.subr.mxu0 0.0
        %1738 = vmatpush1.msra.mxu0 %v1411
        %1739 = vmatprep.subr.mxu0 0.0
        %1740 = vmatpush1.msra.mxu0 0.0
        %1741 = vmatprep.subr.mxu0 0.0
        %1742 = vmatpush1.msra.mxu0 0.0
        %1743 = vmatprep.subr.mxu0 0.0
        %1744 = vmatpush1.msra.mxu0 0.0
        %1745 = vmatprep.subr.mxu0 0.0
        %1746 = vmatpush1.msra.mxu0 0.0
        %1747 = vmatprep.subr.mxu0 0.0
        %1748 = vmatpush1.msra.mxu0 0.0
        %1749 = vmatprep.subr.mxu0 0.0
        %1750 = vmatpush1.msra.mxu0 0.0
        %1751 = vmatprep.subr.mxu0 0.0
        %1752 = vmatpush1.msra.mxu0 0.0
        %1753 = vmatprep.subr.mxu0 0.0
        %1754 = vmatpush1.msra.mxu0 0.0
        %1755 = vmatprep.subr.mxu0 0.0
        %1756 = vmatpush1.msra.mxu0 0.0
        %1757 = vmatprep.subr.mxu0 0.0
        %1758 = vmatpush1.msra.mxu0 0.0
        %1759 = vmatprep.subr.mxu0 0.0
        %1760 = vmatpush1.msra.mxu0 0.0
        %1761 = vmatprep.subr.mxu0 0.0
        %1762 = vmatpush1.msra.mxu0 0.0
        %1763 = vmatprep.subr.mxu0 0.0
        %1764 = vmatpush1.msra.mxu0 0.0
        %1765 = vmatprep.subr.mxu0 0.0
        %1766 = vmatpush1.msra.mxu0 0.0
        %1767 = vmatprep.subr.mxu0 0.0
        %1768 = vmatpush1.msra.mxu0 0.0
        %1769 = vmatprep.subr.mxu0 0.0
        %1770 = vmatpush1.msra.mxu0 0.0
        %1771 = vmatprep.subr.mxu0 0.0
        %1772 = vmatpush1.msra.mxu0 0.0
        %1773 = vmatprep.subr.mxu0 0.0
        %1774 = vmatpush1.msra.mxu0 0.0
        %1775 = vmatprep.subr.mxu0 0.0
        %1776 = vmatpush1.msra.mxu0 0.0
        %1777 = vmatprep.subr.mxu0 0.0
        %1778 = vmatpush1.msra.mxu0 0.0
        %1779 = vmatprep.subr.mxu0 0.0
        %1780 = vmatpush1.msra.mxu0 0.0
        %1781 = vmatprep.subr.mxu0 0.0
        %1782 = vmatpush1.msra.mxu0 0.0
        %1783 = vmatprep.subr.mxu0 0.0
        %1784 = vmatpush1.msra.mxu0 0.0
        %1785 = vmatprep.subr.mxu0 0.0
        %1786 = vmatpush1.msra.mxu0 0.0
        %1787 = vmatprep.subr.mxu0 0.0
        %1788 = vmatpush1.msra.mxu0 0.0
        %1789 = vmatprep.subr.mxu0 0.0
        %1790 = vmatpush1.msra.mxu0 0.0
        %1791 = vmatprep.subr.mxu0 0.0
        %1792 = vmatpush1.msra.mxu0 0.0
        %1793 = vmatprep.subr.mxu0 0.0
        %1794 = vmatpush1.msra.mxu0 0.0
        %1795 = vmatprep.subr.mxu0 0.0
        %1796 = vmatpush1.msra.mxu0 0.0
        %1797 = vmatprep.subr.mxu0 0.0
        %1798 = vmatpush1.msra.mxu0 0.0
        %1799 = vmatprep.mubr.f32.mxu0 0.0
        %1800 = vmatmul.mubr.f32.gmra.mrb[0].mxu0 %v1730
        %v1801 = vpop.f32.mrb[0].mxu0
        %v1802 = vadd.f32 0.0, %v1801
        %v1803 = vpop.f32.mrb[0].mxu0
        %1804 = vmatprep.mubr.f32.mxu0 0.0
        %1805 = vmatmul.mubr.f32.gmra.mrb[0].mxu0 %v1733
        %v1806 = vpop.f32.mrb[0].mxu0
        %v1807 = vadd.f32 0.0, %v1806
        %v1808 = vpop.f32.mrb[0].mxu0
        %1809 = vdwg.mxu0
        %v1810 = vpack.c.bf16 %v1609, %v1604
        %v1811 = vpack.c.bf16 %v1807, %v1802
        %v1844 = vunpack.c.l.b16 %v542
        %v1845 = vunpack.c.h.b16 %v542
        %v1846 = vunpack.c.l.b16 %v543
        %v1847 = vunpack.c.h.b16 %v543
        %v1848 = vunpack.c.l.b16 %v544
        %v1849 = vunpack.c.h.b16 %v544
        %v1850 = vunpack.c.l.b16 %v545
        %v1851 = vunpack.c.h.b16 %v545
        %v1852 = vunpack.c.l.b16 %v546
        %v1853 = vunpack.c.h.b16 %v546
        %v1854 = vunpack.c.l.b16 %v547
        %v1855 = vunpack.c.h.b16 %v547
        %v1856 = vunpack.c.l.b16 %v548
        %v1857 = vunpack.c.h.b16 %v548
        %v1858 = vunpack.c.l.b16 %v549
        %v1859 = vunpack.c.h.b16 %v549
        %v1860 = vunpack.c.l.b16 %v550
        %v1861 = vunpack.c.h.b16 %v550
        %v1862 = vunpack.c.l.b16 %v551
        %v1863 = vunpack.c.h.b16 %v551
        %v1864 = vunpack.c.l.b16 %v552
        %v1865 = vunpack.c.h.b16 %v552
        %v1866 = vunpack.c.l.b16 %v553
        %v1867 = vunpack.c.h.b16 %v553
        %v1868 = vunpack.c.l.b16 %v554
        %v1869 = vunpack.c.h.b16 %v554
        %v1870 = vunpack.c.l.b16 %v555
        %v1871 = vunpack.c.h.b16 %v555
        %v1872 = vunpack.c.l.b16 %v556
        %v1873 = vunpack.c.h.b16 %v556
        %v1874 = vunpack.c.l.b16 %v557
        %v1875 = vunpack.c.h.b16 %v557
        %v1876 = vunpack.c.l.b16 %v558
        %v1877 = vunpack.c.h.b16 %v558
        %v1878 = vunpack.c.l.b16 %v559
        %v1879 = vunpack.c.h.b16 %v559
        %v1880 = vunpack.c.l.b16 %v560
        %v1881 = vunpack.c.h.b16 %v560
        %v1882 = vunpack.c.l.b16 %v561
        %v1883 = vunpack.c.h.b16 %v561
        %v1884 = vunpack.c.l.b16 %v562
        %v1885 = vunpack.c.h.b16 %v562
        %v1886 = vunpack.c.l.b16 %v563
        %v1887 = vunpack.c.h.b16 %v563
        %v1888 = vunpack.c.l.b16 %v564
        %v1889 = vunpack.c.h.b16 %v564
        %v1890 = vunpack.c.l.b16 %v565
        %v1891 = vunpack.c.h.b16 %v565
        %v1892 = vunpack.c.l.b16 %v566
        %v1893 = vunpack.c.h.b16 %v566
        %v1894 = vunpack.c.l.b16 %v567
        %v1895 = vunpack.c.h.b16 %v567
        %v1896 = vunpack.c.l.b16 %v568
        %v1897 = vunpack.c.h.b16 %v568
        %v1898 = vunpack.c.l.b16 %v569
        %v1899 = vunpack.c.h.b16 %v569
        %v1900 = vunpack.c.l.b16 %v570
        %v1901 = vunpack.c.h.b16 %v570
        %v1902 = vunpack.c.l.b16 %v571
        %v1903 = vunpack.c.h.b16 %v571
        %v1904 = vunpack.c.l.b16 %v572
        %v1905 = vunpack.c.h.b16 %v572
        %v1906 = vunpack.c.l.b16 %v573
        %v1907 = vunpack.c.h.b16 %v573
        %v1908 = vpack.c.b16 %v1846, %v1844
        %v1909 = vpack.c.b16 %v1847, %v1845
        %v1910 = vpack.c.b16 %v1850, %v1848
        %v1911 = vpack.c.b16 %v1851, %v1849
        %v1912 = vpack.c.b16 %v1854, %v1852
        %v1913 = vpack.c.b16 %v1855, %v1853
        %v1914 = vpack.c.b16 %v1858, %v1856
        %v1915 = vpack.c.b16 %v1859, %v1857
        %v1916 = vpack.c.b16 %v1862, %v1860
        %v1917 = vpack.c.b16 %v1863, %v1861
        %v1918 = vpack.c.b16 %v1866, %v1864
        %v1919 = vpack.c.b16 %v1867, %v1865
        %v1920 = vpack.c.b16 %v1870, %v1868
        %v1921 = vpack.c.b16 %v1871, %v1869
        %v1922 = vpack.c.b16 %v1874, %v1872
        %v1923 = vpack.c.b16 %v1875, %v1873
        %v1924 = vpack.c.b16 %v1878, %v1876
        %v1925 = vpack.c.b16 %v1879, %v1877
        %v1926 = vpack.c.b16 %v1882, %v1880
        %v1927 = vpack.c.b16 %v1883, %v1881
        %v1928 = vpack.c.b16 %v1886, %v1884
        %v1929 = vpack.c.b16 %v1887, %v1885
        %v1930 = vpack.c.b16 %v1890, %v1888
        %v1931 = vpack.c.b16 %v1891, %v1889
        %v1932 = vpack.c.b16 %v1894, %v1892
        %v1933 = vpack.c.b16 %v1895, %v1893
        %v1934 = vpack.c.b16 %v1898, %v1896
        %v1935 = vpack.c.b16 %v1899, %v1897
        %v1936 = vpack.c.b16 %v1902, %v1900
        %v1937 = vpack.c.b16 %v1903, %v1901
        %v1938 = vpack.c.b16 %v1906, %v1904
        %v1939 = vpack.c.b16 %v1907, %v1905
        %1972 = vmatprep.subr.bf16.mxu0 %v1909
        %1973 = vmatpush1.bf16.msra.mxu0 %v1908
        %1974 = vmatprep.subr.bf16.mxu0 %v1911
        %1975 = vmatpush1.bf16.msra.mxu0 %v1910
        %1976 = vmatprep.subr.bf16.mxu0 %v1913
        %1977 = vmatpush1.bf16.msra.mxu0 %v1912
        %1978 = vmatprep.subr.bf16.mxu0 %v1915
        %1979 = vmatpush1.bf16.msra.mxu0 %v1914
        %1980 = vmatprep.subr.bf16.mxu0 %v1917
        %1981 = vmatpush1.bf16.msra.mxu0 %v1916
        %1982 = vmatprep.subr.bf16.mxu0 %v1919
        %1983 = vmatpush1.bf16.msra.mxu0 %v1918
        %1984 = vmatprep.subr.bf16.mxu0 %v1921
        %1985 = vmatpush1.bf16.msra.mxu0 %v1920
        %1986 = vmatprep.subr.bf16.mxu0 %v1923
        %1987 = vmatpush1.bf16.msra.mxu0 %v1922
        %1988 = vmatprep.subr.bf16.mxu0 %v1925
        %1989 = vmatpush1.bf16.msra.mxu0 %v1924
        %1990 = vmatprep.subr.bf16.mxu0 %v1927
        %1991 = vmatpush1.bf16.msra.mxu0 %v1926
        %1992 = vmatprep.subr.bf16.mxu0 %v1929
        %1993 = vmatpush1.bf16.msra.mxu0 %v1928
        %1994 = vmatprep.subr.bf16.mxu0 %v1931
        %1995 = vmatpush1.bf16.msra.mxu0 %v1930
        %1996 = vmatprep.subr.bf16.mxu0 %v1933
        %1997 = vmatpush1.bf16.msra.mxu0 %v1932
        %1998 = vmatprep.subr.bf16.mxu0 %v1935
        %1999 = vmatpush1.bf16.msra.mxu0 %v1934
        %2000 = vmatprep.subr.bf16.mxu0 %v1937
        %2001 = vmatpush1.bf16.msra.mxu0 %v1936
        %2002 = vmatprep.subr.bf16.mxu0 %v1939
        %2003 = vmatpush1.bf16.msra.mxu0 %v1938
        %2004 = vmatprep.mubr.bf16.mxu0 %v1811
        %2005 = vmatmul.mubr.bf16.gmra.mrb[0].mxu0 %v1810
        %v2006 = vpop.f32.mrb[0].mxu0
        %v2007 = vadd.f32 0.0, %v2006
        %v2008 = vpop.f32.mrb[0].mxu0
        %v2009 = vadd.f32 0.0, %v2008
        %v2010 = vpop.f32.mrb[0].mxu0
        %v2011 = vadd.f32 0.0, %v2010
        %v2012 = vpop.f32.mrb[0].mxu0
        %v2013 = vadd.f32 0.0, %v2012
        %2014 = vdwg.mxu0
        %v2015 = vadd.f32 %v439, %v2007
        %v2016 = vadd.f32 %v440, %v2009
        %v2017 = vadd.f32 %v441, %v2011
        %v2018 = vadd.f32 %v442, %v2013
        %v2019 = vmul.f32 %v2015, %v2015
        %v2020 = vmul.f32 %v2016, %v2016
        %v2021 = vmul.f32 %v2017, %v2017
        %v2022 = vmul.f32 %v2018, %v2018
        %v2023 = vadd.f32 %v2019, %v2020
        %2024 = vadd.xlane.f32.xlu0 %v2023
        %v2025 = vpop.xlane.xlu0 %2024
        %v2026 = vadd.f32 %v2021, %v2022
        %2027 = vadd.xlane.f32.xlu0 %v2026
        %v2028 = vpop.xlane.xlu0 %2027
        %v2029 = vmul.f32 %v2025, %v776
        %v2030 = vmul.f32 %v2028, %v776
        %v2031 = vadd.f32 %v2029, 1e-06
        %v2032 = vadd.f32 %v2030, 1e-06
        %v2033 = vrsqrt.pop %v2031
        %v2034 = vrsqrt.pop %v2032
        %v2035 = vmul.f32 %v2015, %v2033
        %v2036 = vmul.f32 %v2016, %v2033
        %v2037 = vmul.f32 %v2017, %v2034
        %v2038 = vmul.f32 %v2018, %v2034
        %v2040 = vlaneseq
        %v2041 = vshrl.u32 %v2040, 7
        %v2042 = vsub.s32 0, %v2041
        %v2043 = vrot.slane %v445, %v2042
        %v2044 = vlaneseq
        %v2045 = vshrl.u32 %v2044, 7
        %v2046 = vsub.s32 1, %v2045
        %v2047 = vrot.slane %v445, %v2046
        %v2050 = vmul.f32 %v2035, %v2043
        %v2051 = vmul.f32 %v2036, %v2047
        %v2052 = vmul.f32 %v2037, %v2043
        %v2053 = vmul.f32 %v2038, %v2047
        %v2054 = vpack.c.bf16 %v2052, %v2050
        %v2055 = vpack.c.bf16 %v2053, %v2051
        %v2184 = vunpack.c.l.b16 %v574
        %v2185 = vunpack.c.h.b16 %v574
        %v2186 = vunpack.c.l.b16 %v575
        %v2187 = vunpack.c.h.b16 %v575
        %v2188 = vunpack.c.l.b16 %v576
        %v2189 = vunpack.c.h.b16 %v576
        %v2190 = vunpack.c.l.b16 %v577
        %v2191 = vunpack.c.h.b16 %v577
        %v2192 = vunpack.c.l.b16 %v578
        %v2193 = vunpack.c.h.b16 %v578
        %v2194 = vunpack.c.l.b16 %v579
        %v2195 = vunpack.c.h.b16 %v579
        %v2196 = vunpack.c.l.b16 %v580
        %v2197 = vunpack.c.h.b16 %v580
        %v2198 = vunpack.c.l.b16 %v581
        %v2199 = vunpack.c.h.b16 %v581
        %v2200 = vunpack.c.l.b16 %v582
        %v2201 = vunpack.c.h.b16 %v582
        %v2202 = vunpack.c.l.b16 %v583
        %v2203 = vunpack.c.h.b16 %v583
        %v2204 = vunpack.c.l.b16 %v584
        %v2205 = vunpack.c.h.b16 %v584
        %v2206 = vunpack.c.l.b16 %v585
        %v2207 = vunpack.c.h.b16 %v585
        %v2208 = vunpack.c.l.b16 %v586
        %v2209 = vunpack.c.h.b16 %v586
        %v2210 = vunpack.c.l.b16 %v587
        %v2211 = vunpack.c.h.b16 %v587
        %v2212 = vunpack.c.l.b16 %v588
        %v2213 = vunpack.c.h.b16 %v588
        %v2214 = vunpack.c.l.b16 %v589
        %v2215 = vunpack.c.h.b16 %v589
        %v2216 = vunpack.c.l.b16 %v590
        %v2217 = vunpack.c.h.b16 %v590
        %v2218 = vunpack.c.l.b16 %v591
        %v2219 = vunpack.c.h.b16 %v591
        %v2220 = vunpack.c.l.b16 %v592
        %v2221 = vunpack.c.h.b16 %v592
        %v2222 = vunpack.c.l.b16 %v593
        %v2223 = vunpack.c.h.b16 %v593
        %v2224 = vunpack.c.l.b16 %v594
        %v2225 = vunpack.c.h.b16 %v594
        %v2226 = vunpack.c.l.b16 %v595
        %v2227 = vunpack.c.h.b16 %v595
        %v2228 = vunpack.c.l.b16 %v596
        %v2229 = vunpack.c.h.b16 %v596
        %v2230 = vunpack.c.l.b16 %v597
        %v2231 = vunpack.c.h.b16 %v597
        %v2232 = vunpack.c.l.b16 %v598
        %v2233 = vunpack.c.h.b16 %v598
        %v2234 = vunpack.c.l.b16 %v599
        %v2235 = vunpack.c.h.b16 %v599
        %v2236 = vunpack.c.l.b16 %v600
        %v2237 = vunpack.c.h.b16 %v600
        %v2238 = vunpack.c.l.b16 %v601
        %v2239 = vunpack.c.h.b16 %v601
        %v2240 = vunpack.c.l.b16 %v602
        %v2241 = vunpack.c.h.b16 %v602
        %v2242 = vunpack.c.l.b16 %v603
        %v2243 = vunpack.c.h.b16 %v603
        %v2244 = vunpack.c.l.b16 %v604
        %v2245 = vunpack.c.h.b16 %v604
        %v2246 = vunpack.c.l.b16 %v605
        %v2247 = vunpack.c.h.b16 %v605
        %v2248 = vunpack.c.l.b16 %v606
        %v2249 = vunpack.c.h.b16 %v606
        %v2250 = vunpack.c.l.b16 %v607
        %v2251 = vunpack.c.h.b16 %v607
        %v2252 = vunpack.c.l.b16 %v608
        %v2253 = vunpack.c.h.b16 %v608
        %v2254 = vunpack.c.l.b16 %v609
        %v2255 = vunpack.c.h.b16 %v609
        %v2256 = vunpack.c.l.b16 %v610
        %v2257 = vunpack.c.h.b16 %v610
        %v2258 = vunpack.c.l.b16 %v611
        %v2259 = vunpack.c.h.b16 %v611
        %v2260 = vunpack.c.l.b16 %v612
        %v2261 = vunpack.c.h.b16 %v612
        %v2262 = vunpack.c.l.b16 %v613
        %v2263 = vunpack.c.h.b16 %v613
        %v2264 = vunpack.c.l.b16 %v614
        %v2265 = vunpack.c.h.b16 %v614
        %v2266 = vunpack.c.l.b16 %v615
        %v2267 = vunpack.c.h.b16 %v615
        %v2268 = vunpack.c.l.b16 %v616
        %v2269 = vunpack.c.h.b16 %v616
        %v2270 = vunpack.c.l.b16 %v617
        %v2271 = vunpack.c.h.b16 %v617
        %v2272 = vunpack.c.l.b16 %v618
        %v2273 = vunpack.c.h.b16 %v618
        %v2274 = vunpack.c.l.b16 %v619
        %v2275 = vunpack.c.h.b16 %v619
        %v2276 = vunpack.c.l.b16 %v620
        %v2277 = vunpack.c.h.b16 %v620
        %v2278 = vunpack.c.l.b16 %v621
        %v2279 = vunpack.c.h.b16 %v621
        %v2280 = vunpack.c.l.b16 %v622
        %v2281 = vunpack.c.h.b16 %v622
        %v2282 = vunpack.c.l.b16 %v623
        %v2283 = vunpack.c.h.b16 %v623
        %v2284 = vunpack.c.l.b16 %v624
        %v2285 = vunpack.c.h.b16 %v624
        %v2286 = vunpack.c.l.b16 %v625
        %v2287 = vunpack.c.h.b16 %v625
        %v2288 = vunpack.c.l.b16 %v626
        %v2289 = vunpack.c.h.b16 %v626
        %v2290 = vunpack.c.l.b16 %v627
        %v2291 = vunpack.c.h.b16 %v627
        %v2292 = vunpack.c.l.b16 %v628
        %v2293 = vunpack.c.h.b16 %v628
        %v2294 = vunpack.c.l.b16 %v629
        %v2295 = vunpack.c.h.b16 %v629
        %v2296 = vunpack.c.l.b16 %v630
        %v2297 = vunpack.c.h.b16 %v630
        %v2298 = vunpack.c.l.b16 %v631
        %v2299 = vunpack.c.h.b16 %v631
        %v2300 = vunpack.c.l.b16 %v632
        %v2301 = vunpack.c.h.b16 %v632
        %v2302 = vunpack.c.l.b16 %v633
        %v2303 = vunpack.c.h.b16 %v633
        %v2304 = vunpack.c.l.b16 %v634
        %v2305 = vunpack.c.h.b16 %v634
        %v2306 = vunpack.c.l.b16 %v635
        %v2307 = vunpack.c.h.b16 %v635
        %v2308 = vunpack.c.l.b16 %v636
        %v2309 = vunpack.c.h.b16 %v636
        %v2310 = vunpack.c.l.b16 %v637
        %v2311 = vunpack.c.h.b16 %v637
        %v2312 = vunpack.c.l.b16 %v638
        %v2313 = vunpack.c.h.b16 %v638
        %v2314 = vunpack.c.l.b16 %v639
        %v2315 = vunpack.c.h.b16 %v639
        %v2316 = vunpack.c.l.b16 %v640
        %v2317 = vunpack.c.h.b16 %v640
        %v2318 = vunpack.c.l.b16 %v641
        %v2319 = vunpack.c.h.b16 %v641
        %v2320 = vunpack.c.l.b16 %v642
        %v2321 = vunpack.c.h.b16 %v642
        %v2322 = vunpack.c.l.b16 %v643
        %v2323 = vunpack.c.h.b16 %v643
        %v2324 = vunpack.c.l.b16 %v644
        %v2325 = vunpack.c.h.b16 %v644
        %v2326 = vunpack.c.l.b16 %v645
        %v2327 = vunpack.c.h.b16 %v645
        %v2328 = vunpack.c.l.b16 %v646
        %v2329 = vunpack.c.h.b16 %v646
        %v2330 = vunpack.c.l.b16 %v647
        %v2331 = vunpack.c.h.b16 %v647
        %v2332 = vunpack.c.l.b16 %v648
        %v2333 = vunpack.c.h.b16 %v648
        %v2334 = vunpack.c.l.b16 %v649
        %v2335 = vunpack.c.h.b16 %v649
        %v2336 = vunpack.c.l.b16 %v650
        %v2337 = vunpack.c.h.b16 %v650
        %v2338 = vunpack.c.l.b16 %v651
        %v2339 = vunpack.c.h.b16 %v651
        %v2340 = vunpack.c.l.b16 %v652
        %v2341 = vunpack.c.h.b16 %v652
        %v2342 = vunpack.c.l.b16 %v653
        %v2343 = vunpack.c.h.b16 %v653
        %v2344 = vunpack.c.l.b16 %v654
        %v2345 = vunpack.c.h.b16 %v654
        %v2346 = vunpack.c.l.b16 %v655
        %v2347 = vunpack.c.h.b16 %v655
        %v2348 = vunpack.c.l.b16 %v656
        %v2349 = vunpack.c.h.b16 %v656
        %v2350 = vunpack.c.l.b16 %v657
        %v2351 = vunpack.c.h.b16 %v657
        %v2352 = vunpack.c.l.b16 %v658
        %v2353 = vunpack.c.h.b16 %v658
        %v2354 = vunpack.c.l.b16 %v659
        %v2355 = vunpack.c.h.b16 %v659
        %v2356 = vunpack.c.l.b16 %v660
        %v2357 = vunpack.c.h.b16 %v660
        %v2358 = vunpack.c.l.b16 %v661
        %v2359 = vunpack.c.h.b16 %v661
        %v2360 = vunpack.c.l.b16 %v662
        %v2361 = vunpack.c.h.b16 %v662
        %v2362 = vunpack.c.l.b16 %v663
        %v2363 = vunpack.c.h.b16 %v663
        %v2364 = vunpack.c.l.b16 %v664
        %v2365 = vunpack.c.h.b16 %v664
        %v2366 = vunpack.c.l.b16 %v665
        %v2367 = vunpack.c.h.b16 %v665
        %v2368 = vunpack.c.l.b16 %v666
        %v2369 = vunpack.c.h.b16 %v666
        %v2370 = vunpack.c.l.b16 %v667
        %v2371 = vunpack.c.h.b16 %v667
        %v2372 = vunpack.c.l.b16 %v668
        %v2373 = vunpack.c.h.b16 %v668
        %v2374 = vunpack.c.l.b16 %v669
        %v2375 = vunpack.c.h.b16 %v669
        %v2376 = vunpack.c.l.b16 %v670
        %v2377 = vunpack.c.h.b16 %v670
        %v2378 = vunpack.c.l.b16 %v671
        %v2379 = vunpack.c.h.b16 %v671
        %v2380 = vunpack.c.l.b16 %v672
        %v2381 = vunpack.c.h.b16 %v672
        %v2382 = vunpack.c.l.b16 %v673
        %v2383 = vunpack.c.h.b16 %v673
        %v2384 = vunpack.c.l.b16 %v674
        %v2385 = vunpack.c.h.b16 %v674
        %v2386 = vunpack.c.l.b16 %v675
        %v2387 = vunpack.c.h.b16 %v675
        %v2388 = vunpack.c.l.b16 %v676
        %v2389 = vunpack.c.h.b16 %v676
        %v2390 = vunpack.c.l.b16 %v677
        %v2391 = vunpack.c.h.b16 %v677
        %v2392 = vunpack.c.l.b16 %v678
        %v2393 = vunpack.c.h.b16 %v678
        %v2394 = vunpack.c.l.b16 %v679
        %v2395 = vunpack.c.h.b16 %v679
        %v2396 = vunpack.c.l.b16 %v680
        %v2397 = vunpack.c.h.b16 %v680
        %v2398 = vunpack.c.l.b16 %v681
        %v2399 = vunpack.c.h.b16 %v681
        %v2400 = vunpack.c.l.b16 %v682
        %v2401 = vunpack.c.h.b16 %v682
        %v2402 = vunpack.c.l.b16 %v683
        %v2403 = vunpack.c.h.b16 %v683
        %v2404 = vunpack.c.l.b16 %v684
        %v2405 = vunpack.c.h.b16 %v684
        %v2406 = vunpack.c.l.b16 %v685
        %v2407 = vunpack.c.h.b16 %v685
        %v2408 = vunpack.c.l.b16 %v686
        %v2409 = vunpack.c.h.b16 %v686
        %v2410 = vunpack.c.l.b16 %v687
        %v2411 = vunpack.c.h.b16 %v687
        %v2412 = vunpack.c.l.b16 %v688
        %v2413 = vunpack.c.h.b16 %v688
        %v2414 = vunpack.c.l.b16 %v689
        %v2415 = vunpack.c.h.b16 %v689
        %v2416 = vunpack.c.l.b16 %v690
        %v2417 = vunpack.c.h.b16 %v690
        %v2418 = vunpack.c.l.b16 %v691
        %v2419 = vunpack.c.h.b16 %v691
        %v2420 = vunpack.c.l.b16 %v692
        %v2421 = vunpack.c.h.b16 %v692
        %v2422 = vunpack.c.l.b16 %v693
        %v2423 = vunpack.c.h.b16 %v693
        %v2424 = vunpack.c.l.b16 %v694
        %v2425 = vunpack.c.h.b16 %v694
        %v2426 = vunpack.c.l.b16 %v695
        %v2427 = vunpack.c.h.b16 %v695
        %v2428 = vunpack.c.l.b16 %v696
        %v2429 = vunpack.c.h.b16 %v696
        %v2430 = vunpack.c.l.b16 %v697
        %v2431 = vunpack.c.h.b16 %v697
        %v2432 = vunpack.c.l.b16 %v698
        %v2433 = vunpack.c.h.b16 %v698
        %v2434 = vunpack.c.l.b16 %v699
        %v2435 = vunpack.c.h.b16 %v699
        %v2436 = vunpack.c.l.b16 %v700
        %v2437 = vunpack.c.h.b16 %v700
        %v2438 = vunpack.c.l.b16 %v701
        %v2439 = vunpack.c.h.b16 %v701
        %v2440 = vpack.c.b16 %v2192, %v2184
        %v2441 = vpack.c.b16 %v2193, %v2185
        %v2442 = vpack.c.b16 %v2194, %v2186
        %v2443 = vpack.c.b16 %v2195, %v2187
        %v2444 = vpack.c.b16 %v2196, %v2188
        %v2445 = vpack.c.b16 %v2197, %v2189
        %v2446 = vpack.c.b16 %v2198, %v2190
        %v2447 = vpack.c.b16 %v2199, %v2191
        %v2448 = vpack.c.b16 %v2208, %v2200
        %v2449 = vpack.c.b16 %v2209, %v2201
        %v2450 = vpack.c.b16 %v2210, %v2202
        %v2451 = vpack.c.b16 %v2211, %v2203
        %v2452 = vpack.c.b16 %v2212, %v2204
        %v2453 = vpack.c.b16 %v2213, %v2205
        %v2454 = vpack.c.b16 %v2214, %v2206
        %v2455 = vpack.c.b16 %v2215, %v2207
        %v2456 = vpack.c.b16 %v2224, %v2216
        %v2457 = vpack.c.b16 %v2225, %v2217
        %v2458 = vpack.c.b16 %v2226, %v2218
        %v2459 = vpack.c.b16 %v2227, %v2219
        %v2460 = vpack.c.b16 %v2228, %v2220
        %v2461 = vpack.c.b16 %v2229, %v2221
        %v2462 = vpack.c.b16 %v2230, %v2222
        %v2463 = vpack.c.b16 %v2231, %v2223
        %v2464 = vpack.c.b16 %v2240, %v2232
        %v2465 = vpack.c.b16 %v2241, %v2233
        %v2466 = vpack.c.b16 %v2242, %v2234
        %v2467 = vpack.c.b16 %v2243, %v2235
        %v2468 = vpack.c.b16 %v2244, %v2236
        %v2469 = vpack.c.b16 %v2245, %v2237
        %v2470 = vpack.c.b16 %v2246, %v2238
        %v2471 = vpack.c.b16 %v2247, %v2239
        %v2472 = vpack.c.b16 %v2256, %v2248
        %v2473 = vpack.c.b16 %v2257, %v2249
        %v2474 = vpack.c.b16 %v2258, %v2250
        %v2475 = vpack.c.b16 %v2259, %v2251
        %v2476 = vpack.c.b16 %v2260, %v2252
        %v2477 = vpack.c.b16 %v2261, %v2253
        %v2478 = vpack.c.b16 %v2262, %v2254
        %v2479 = vpack.c.b16 %v2263, %v2255
        %v2480 = vpack.c.b16 %v2272, %v2264
        %v2481 = vpack.c.b16 %v2273, %v2265
        %v2482 = vpack.c.b16 %v2274, %v2266
        %v2483 = vpack.c.b16 %v2275, %v2267
        %v2484 = vpack.c.b16 %v2276, %v2268
        %v2485 = vpack.c.b16 %v2277, %v2269
        %v2486 = vpack.c.b16 %v2278, %v2270
        %v2487 = vpack.c.b16 %v2279, %v2271
        %v2488 = vpack.c.b16 %v2288, %v2280
        %v2489 = vpack.c.b16 %v2289, %v2281
        %v2490 = vpack.c.b16 %v2290, %v2282
        %v2491 = vpack.c.b16 %v2291, %v2283
        %v2492 = vpack.c.b16 %v2292, %v2284
        %v2493 = vpack.c.b16 %v2293, %v2285
        %v2494 = vpack.c.b16 %v2294, %v2286
        %v2495 = vpack.c.b16 %v2295, %v2287
        %v2496 = vpack.c.b16 %v2304, %v2296
        %v2497 = vpack.c.b16 %v2305, %v2297
        %v2498 = vpack.c.b16 %v2306, %v2298
        %v2499 = vpack.c.b16 %v2307, %v2299
        %v2500 = vpack.c.b16 %v2308, %v2300
        %v2501 = vpack.c.b16 %v2309, %v2301
        %v2502 = vpack.c.b16 %v2310, %v2302
        %v2503 = vpack.c.b16 %v2311, %v2303
        %v2504 = vpack.c.b16 %v2320, %v2312
        %v2505 = vpack.c.b16 %v2321, %v2313
        %v2506 = vpack.c.b16 %v2322, %v2314
        %v2507 = vpack.c.b16 %v2323, %v2315
        %v2508 = vpack.c.b16 %v2324, %v2316
        %v2509 = vpack.c.b16 %v2325, %v2317
        %v2510 = vpack.c.b16 %v2326, %v2318
        %v2511 = vpack.c.b16 %v2327, %v2319
        %v2512 = vpack.c.b16 %v2336, %v2328
        %v2513 = vpack.c.b16 %v2337, %v2329
        %v2514 = vpack.c.b16 %v2338, %v2330
        %v2515 = vpack.c.b16 %v2339, %v2331
        %v2516 = vpack.c.b16 %v2340, %v2332
        %v2517 = vpack.c.b16 %v2341, %v2333
        %v2518 = vpack.c.b16 %v2342, %v2334
        %v2519 = vpack.c.b16 %v2343, %v2335
        %v2520 = vpack.c.b16 %v2352, %v2344
        %v2521 = vpack.c.b16 %v2353, %v2345
        %v2522 = vpack.c.b16 %v2354, %v2346
        %v2523 = vpack.c.b16 %v2355, %v2347
        %v2524 = vpack.c.b16 %v2356, %v2348
        %v2525 = vpack.c.b16 %v2357, %v2349
        %v2526 = vpack.c.b16 %v2358, %v2350
        %v2527 = vpack.c.b16 %v2359, %v2351
        %v2528 = vpack.c.b16 %v2368, %v2360
        %v2529 = vpack.c.b16 %v2369, %v2361
        %v2530 = vpack.c.b16 %v2370, %v2362
        %v2531 = vpack.c.b16 %v2371, %v2363
        %v2532 = vpack.c.b16 %v2372, %v2364
        %v2533 = vpack.c.b16 %v2373, %v2365
        %v2534 = vpack.c.b16 %v2374, %v2366
        %v2535 = vpack.c.b16 %v2375, %v2367
        %v2536 = vpack.c.b16 %v2384, %v2376
        %v2537 = vpack.c.b16 %v2385, %v2377
        %v2538 = vpack.c.b16 %v2386, %v2378
        %v2539 = vpack.c.b16 %v2387, %v2379
        %v2540 = vpack.c.b16 %v2388, %v2380
        %v2541 = vpack.c.b16 %v2389, %v2381
        %v2542 = vpack.c.b16 %v2390, %v2382
        %v2543 = vpack.c.b16 %v2391, %v2383
        %v2544 = vpack.c.b16 %v2400, %v2392
        %v2545 = vpack.c.b16 %v2401, %v2393
        %v2546 = vpack.c.b16 %v2402, %v2394
        %v2547 = vpack.c.b16 %v2403, %v2395
        %v2548 = vpack.c.b16 %v2404, %v2396
        %v2549 = vpack.c.b16 %v2405, %v2397
        %v2550 = vpack.c.b16 %v2406, %v2398
        %v2551 = vpack.c.b16 %v2407, %v2399
        %v2552 = vpack.c.b16 %v2416, %v2408
        %v2553 = vpack.c.b16 %v2417, %v2409
        %v2554 = vpack.c.b16 %v2418, %v2410
        %v2555 = vpack.c.b16 %v2419, %v2411
        %v2556 = vpack.c.b16 %v2420, %v2412
        %v2557 = vpack.c.b16 %v2421, %v2413
        %v2558 = vpack.c.b16 %v2422, %v2414
        %v2559 = vpack.c.b16 %v2423, %v2415
        %v2560 = vpack.c.b16 %v2432, %v2424
        %v2561 = vpack.c.b16 %v2433, %v2425
        %v2562 = vpack.c.b16 %v2434, %v2426
        %v2563 = vpack.c.b16 %v2435, %v2427
        %v2564 = vpack.c.b16 %v2436, %v2428
        %v2565 = vpack.c.b16 %v2437, %v2429
        %v2566 = vpack.c.b16 %v2438, %v2430
        %v2567 = vpack.c.b16 %v2439, %v2431
        %2696 = vmatprep.subr.bf16.mxu0 %v2441
        %2697 = vmatpush1.bf16.msra.mxu0 %v2440
        %2698 = vmatprep.subr.bf16.mxu0 %v2449
        %2699 = vmatpush1.bf16.msra.mxu0 %v2448
        %2700 = vmatprep.subr.bf16.mxu0 %v2457
        %2701 = vmatpush1.bf16.msra.mxu0 %v2456
        %2702 = vmatprep.subr.bf16.mxu0 %v2465
        %2703 = vmatpush1.bf16.msra.mxu0 %v2464
        %2704 = vmatprep.subr.bf16.mxu0 %v2473
        %2705 = vmatpush1.bf16.msra.mxu0 %v2472
        %2706 = vmatprep.subr.bf16.mxu0 %v2481
        %2707 = vmatpush1.bf16.msra.mxu0 %v2480
        %2708 = vmatprep.subr.bf16.mxu0 %v2489
        %2709 = vmatpush1.bf16.msra.mxu0 %v2488
        %2710 = vmatprep.subr.bf16.mxu0 %v2497
        %2711 = vmatpush1.bf16.msra.mxu0 %v2496
        %2712 = vmatprep.subr.bf16.mxu0 %v2505
        %2713 = vmatpush1.bf16.msra.mxu0 %v2504
        %2714 = vmatprep.subr.bf16.mxu0 %v2513
        %2715 = vmatpush1.bf16.msra.mxu0 %v2512
        %2716 = vmatprep.subr.bf16.mxu0 %v2521
        %2717 = vmatpush1.bf16.msra.mxu0 %v2520
        %2718 = vmatprep.subr.bf16.mxu0 %v2529
        %2719 = vmatpush1.bf16.msra.mxu0 %v2528
        %2720 = vmatprep.subr.bf16.mxu0 %v2537
        %2721 = vmatpush1.bf16.msra.mxu0 %v2536
        %2722 = vmatprep.subr.bf16.mxu0 %v2545
        %2723 = vmatpush1.bf16.msra.mxu0 %v2544
        %2724 = vmatprep.subr.bf16.mxu0 %v2553
        %2725 = vmatpush1.bf16.msra.mxu0 %v2552
        %2726 = vmatprep.subr.bf16.mxu0 %v2561
        %2727 = vmatpush1.bf16.msra.mxu0 %v2560
        %2728 = vmatprep.mubr.bf16.mxu0 %v2055
        %2729 = vmatmul.mubr.bf16.gmra.mrb[0].mxu0 %v2054
        %v2730 = vpop.f32.mrb[0].mxu0
        %v2731 = vadd.f32 0.0, %v2730
        %v2732 = vpop.f32.mrb[0].mxu0
        %v2733 = vadd.f32 0.0, %v2732
        %v2734 = vpop.f32.mrb[0].mxu0
        %v2735 = vadd.f32 0.0, %v2734
        %v2736 = vpop.f32.mrb[0].mxu0
        %v2737 = vadd.f32 0.0, %v2736
        %2738 = vdwg.mxu0
        %2739 = vmatprep.subr.bf16.mxu0 %v2443
        %2740 = vmatpush1.bf16.msra.mxu0 %v2442
        %2741 = vmatprep.subr.bf16.mxu0 %v2451
        %2742 = vmatpush1.bf16.msra.mxu0 %v2450
        %2743 = vmatprep.subr.bf16.mxu0 %v2459
        %2744 = vmatpush1.bf16.msra.mxu0 %v2458
        %2745 = vmatprep.subr.bf16.mxu0 %v2467
        %2746 = vmatpush1.bf16.msra.mxu0 %v2466
        %2747 = vmatprep.subr.bf16.mxu0 %v2475
        %2748 = vmatpush1.bf16.msra.mxu0 %v2474
        %2749 = vmatprep.subr.bf16.mxu0 %v2483
        %2750 = vmatpush1.bf16.msra.mxu0 %v2482
        %2751 = vmatprep.subr.bf16.mxu0 %v2491
        %2752 = vmatpush1.bf16.msra.mxu0 %v2490
        %2753 = vmatprep.subr.bf16.mxu0 %v2499
        %2754 = vmatpush1.bf16.msra.mxu0 %v2498
        %2755 = vmatprep.subr.bf16.mxu0 %v2507
        %2756 = vmatpush1.bf16.msra.mxu0 %v2506
        %2757 = vmatprep.subr.bf16.mxu0 %v2515
        %2758 = vmatpush1.bf16.msra.mxu0 %v2514
        %2759 = vmatprep.subr.bf16.mxu0 %v2523
        %2760 = vmatpush1.bf16.msra.mxu0 %v2522
        %2761 = vmatprep.subr.bf16.mxu0 %v2531
        %2762 = vmatpush1.bf16.msra.mxu0 %v2530
        %2763 = vmatprep.subr.bf16.mxu0 %v2539
        %2764 = vmatpush1.bf16.msra.mxu0 %v2538
        %2765 = vmatprep.subr.bf16.mxu0 %v2547
        %2766 = vmatpush1.bf16.msra.mxu0 %v2546
        %2767 = vmatprep.subr.bf16.mxu0 %v2555
        %2768 = vmatpush1.bf16.msra.mxu0 %v2554
        %2769 = vmatprep.subr.bf16.mxu0 %v2563
        %2770 = vmatpush1.bf16.msra.mxu0 %v2562
        %2771 = vmatprep.mubr.bf16.mxu0 %v2055
        %2772 = vmatmul.mubr.bf16.gmra.mrb[0].mxu0 %v2054
        %v2773 = vpop.f32.mrb[0].mxu0
        %v2774 = vadd.f32 0.0, %v2773
        %v2775 = vpop.f32.mrb[0].mxu0
        %v2776 = vadd.f32 0.0, %v2775
        %v2777 = vpop.f32.mrb[0].mxu0
        %v2778 = vadd.f32 0.0, %v2777
        %v2779 = vpop.f32.mrb[0].mxu0
        %v2780 = vadd.f32 0.0, %v2779
        %2781 = vdwg.mxu0
        %2782 = vmatprep.subr.bf16.mxu0 %v2445
        %2783 = vmatpush1.bf16.msra.mxu0 %v2444
        %2784 = vmatprep.subr.bf16.mxu0 %v2453
        %2785 = vmatpush1.bf16.msra.mxu0 %v2452
        %2786 = vmatprep.subr.bf16.mxu0 %v2461
        %2787 = vmatpush1.bf16.msra.mxu0 %v2460
        %2788 = vmatprep.subr.bf16.mxu0 %v2469
        %2789 = vmatpush1.bf16.msra.mxu0 %v2468
        %2790 = vmatprep.subr.bf16.mxu0 %v2477
        %2791 = vmatpush1.bf16.msra.mxu0 %v2476
        %2792 = vmatprep.subr.bf16.mxu0 %v2485
        %2793 = vmatpush1.bf16.msra.mxu0 %v2484
        %2794 = vmatprep.subr.bf16.mxu0 %v2493
        %2795 = vmatpush1.bf16.msra.mxu0 %v2492
        %2796 = vmatprep.subr.bf16.mxu0 %v2501
        %2797 = vmatpush1.bf16.msra.mxu0 %v2500
        %2798 = vmatprep.subr.bf16.mxu0 %v2509
        %2799 = vmatpush1.bf16.msra.mxu0 %v2508
        %2800 = vmatprep.subr.bf16.mxu0 %v2517
        %2801 = vmatpush1.bf16.msra.mxu0 %v2516
        %2802 = vmatprep.subr.bf16.mxu0 %v2525
        %2803 = vmatpush1.bf16.msra.mxu0 %v2524
        %2804 = vmatprep.subr.bf16.mxu0 %v2533
        %2805 = vmatpush1.bf16.msra.mxu0 %v2532
        %2806 = vmatprep.subr.bf16.mxu0 %v2541
        %2807 = vmatpush1.bf16.msra.mxu0 %v2540
        %2808 = vmatprep.subr.bf16.mxu0 %v2549
        %2809 = vmatpush1.bf16.msra.mxu0 %v2548
        %2810 = vmatprep.subr.bf16.mxu0 %v2557
        %2811 = vmatpush1.bf16.msra.mxu0 %v2556
        %2812 = vmatprep.subr.bf16.mxu0 %v2565
        %2813 = vmatpush1.bf16.msra.mxu0 %v2564
        %2814 = vmatprep.mubr.bf16.mxu0 %v2055
        %2815 = vmatmul.mubr.bf16.gmra.mrb[0].mxu0 %v2054
        %v2816 = vpop.f32.mrb[0].mxu0
        %v2817 = vadd.f32 0.0, %v2816
        %v2818 = vpop.f32.mrb[0].mxu0
        %v2819 = vadd.f32 0.0, %v2818
        %v2820 = vpop.f32.mrb[0].mxu0
        %v2821 = vadd.f32 0.0, %v2820
        %v2822 = vpop.f32.mrb[0].mxu0
        %v2823 = vadd.f32 0.0, %v2822
        %2824 = vdwg.mxu0
        %2825 = vmatprep.subr.bf16.mxu0 %v2447
        %2826 = vmatpush1.bf16.msra.mxu0 %v2446
        %2827 = vmatprep.subr.bf16.mxu0 %v2455
        %2828 = vmatpush1.bf16.msra.mxu0 %v2454
        %2829 = vmatprep.subr.bf16.mxu0 %v2463
        %2830 = vmatpush1.bf16.msra.mxu0 %v2462
        %2831 = vmatprep.subr.bf16.mxu0 %v2471
        %2832 = vmatpush1.bf16.msra.mxu0 %v2470
        %2833 = vmatprep.subr.bf16.mxu0 %v2479
        %2834 = vmatpush1.bf16.msra.mxu0 %v2478
        %2835 = vmatprep.subr.bf16.mxu0 %v2487
        %2836 = vmatpush1.bf16.msra.mxu0 %v2486
        %2837 = vmatprep.subr.bf16.mxu0 %v2495
        %2838 = vmatpush1.bf16.msra.mxu0 %v2494
        %2839 = vmatprep.subr.bf16.mxu0 %v2503
        %2840 = vmatpush1.bf16.msra.mxu0 %v2502
        %2841 = vmatprep.subr.bf16.mxu0 %v2511
        %2842 = vmatpush1.bf16.msra.mxu0 %v2510
        %2843 = vmatprep.subr.bf16.mxu0 %v2519
        %2844 = vmatpush1.bf16.msra.mxu0 %v2518
        %2845 = vmatprep.subr.bf16.mxu0 %v2527
        %2846 = vmatpush1.bf16.msra.mxu0 %v2526
        %2847 = vmatprep.subr.bf16.mxu0 %v2535
        %2848 = vmatpush1.bf16.msra.mxu0 %v2534
        %2849 = vmatprep.subr.bf16.mxu0 %v2543
        %2850 = vmatpush1.bf16.msra.mxu0 %v2542
        %2851 = vmatprep.subr.bf16.mxu0 %v2551
        %2852 = vmatpush1.bf16.msra.mxu0 %v2550
        %2853 = vmatprep.subr.bf16.mxu0 %v2559
        %2854 = vmatpush1.bf16.msra.mxu0 %v2558
        %2855 = vmatprep.subr.bf16.mxu0 %v2567
        %2856 = vmatpush1.bf16.msra.mxu0 %v2566
        %2857 = vmatprep.mubr.bf16.mxu0 %v2055
        %2858 = vmatmul.mubr.bf16.gmra.mrb[0].mxu0 %v2054
        %v2859 = vpop.f32.mrb[0].mxu0
        %v2860 = vadd.f32 0.0, %v2859
        %v2861 = vpop.f32.mrb[0].mxu0
        %v2862 = vadd.f32 0.0, %v2861
        %v2863 = vpop.f32.mrb[0].mxu0
        %v2864 = vadd.f32 0.0, %v2863
        %v2865 = vpop.f32.mrb[0].mxu0
        %v2866 = vadd.f32 0.0, %v2865
        %2867 = vdwg.mxu0
        %v2868 = vxor.u32 %v2731, 2147483648
        %v2869 = vxor.u32 %v2733, 2147483648
        %v2870 = vxor.u32 %v2774, 2147483648
        %v2871 = vxor.u32 %v2776, 2147483648
        %v2872 = vxor.u32 %v2735, 2147483648
        %v2873 = vxor.u32 %v2737, 2147483648
        %v2874 = vxor.u32 %v2778, 2147483648
        %v2875 = vxor.u32 %v2780, 2147483648
        %v2876 = vmul.f32 %v2868, 1.442695
        %v2877 = vpow.pop %v2876
        %v2878 = vmul.f32 %v2869, 1.442695
        %v2879 = vpow.pop %v2878
        %v2880 = vmul.f32 %v2870, 1.442695
        %v2881 = vpow.pop %v2880
        %v2882 = vmul.f32 %v2871, 1.442695
        %v2883 = vpow.pop %v2882
        %v2884 = vmul.f32 %v2872, 1.442695
        %v2885 = vpow.pop %v2884
        %v2886 = vmul.f32 %v2873, 1.442695
        %v2887 = vpow.pop %v2886
        %v2888 = vmul.f32 %v2874, 1.442695
        %v2889 = vpow.pop %v2888
        %v2890 = vmul.f32 %v2875, 1.442695
        %v2891 = vpow.pop %v2890
        %v2892 = vadd.f32 %v2877, 1.0
        %v2893 = vadd.f32 %v2879, 1.0
        %v2894 = vadd.f32 %v2881, 1.0
        %v2895 = vadd.f32 %v2883, 1.0
        %v2896 = vadd.f32 %v2885, 1.0
        %v2897 = vadd.f32 %v2887, 1.0
        %v2898 = vadd.f32 %v2889, 1.0
        %v2899 = vadd.f32 %v2891, 1.0
        %v2900 = vrcp.pop %v2892
        %v2901 = vmul.f32 1.0, %v2900
        %v2902 = vrcp.pop %v2893
        %v2903 = vmul.f32 1.0, %v2902
        %v2904 = vrcp.pop %v2894
        %v2905 = vmul.f32 1.0, %v2904
        %v2906 = vrcp.pop %v2895
        %v2907 = vmul.f32 1.0, %v2906
        %v2908 = vrcp.pop %v2896
        %v2909 = vmul.f32 1.0, %v2908
        %v2910 = vrcp.pop %v2897
        %v2911 = vmul.f32 1.0, %v2910
        %v2912 = vrcp.pop %v2898
        %v2913 = vmul.f32 1.0, %v2912
        %v2914 = vrcp.pop %v2899
        %v2915 = vmul.f32 1.0, %v2914
        %v2916 = vmul.f32 %v2731, %v2901
        %v2917 = vmul.f32 %v2733, %v2903
        %v2918 = vmul.f32 %v2774, %v2905
        %v2919 = vmul.f32 %v2776, %v2907
        %v2920 = vmul.f32 %v2735, %v2909
        %v2921 = vmul.f32 %v2737, %v2911
        %v2922 = vmul.f32 %v2778, %v2913
        %v2923 = vmul.f32 %v2780, %v2915
        %v2924 = vmul.f32 %v2916, %v2817
        %v2925 = vmul.f32 %v2917, %v2819
        %v2926 = vmul.f32 %v2918, %v2860
        %v2927 = vmul.f32 %v2919, %v2862
        %v2928 = vmul.f32 %v2920, %v2821
        %v2929 = vmul.f32 %v2921, %v2823
        %v2930 = vmul.f32 %v2922, %v2864
        %v2931 = vmul.f32 %v2923, %v2866
        %v2932 = vpack.c.bf16 %v2928, %v2924
        %v2933 = vpack.c.bf16 %v2929, %v2925
        %v2934 = vpack.c.bf16 %v2930, %v2926
        %v2935 = vpack.c.bf16 %v2931, %v2927
        %v3000 = vunpack.c.l.b16 %v702
        %v3001 = vunpack.c.h.b16 %v702
        %v3002 = vunpack.c.l.b16 %v703
        %v3003 = vunpack.c.h.b16 %v703
        %v3004 = vunpack.c.l.b16 %v704
        %v3005 = vunpack.c.h.b16 %v704
        %v3006 = vunpack.c.l.b16 %v705
        %v3007 = vunpack.c.h.b16 %v705
        %v3008 = vunpack.c.l.b16 %v706
        %v3009 = vunpack.c.h.b16 %v706
        %v3010 = vunpack.c.l.b16 %v707
        %v3011 = vunpack.c.h.b16 %v707
        %v3012 = vunpack.c.l.b16 %v708
        %v3013 = vunpack.c.h.b16 %v708
        %v3014 = vunpack.c.l.b16 %v709
        %v3015 = vunpack.c.h.b16 %v709
        %v3016 = vunpack.c.l.b16 %v710
        %v3017 = vunpack.c.h.b16 %v710
        %v3018 = vunpack.c.l.b16 %v711
        %v3019 = vunpack.c.h.b16 %v711
        %v3020 = vunpack.c.l.b16 %v712
        %v3021 = vunpack.c.h.b16 %v712
        %v3022 = vunpack.c.l.b16 %v713
        %v3023 = vunpack.c.h.b16 %v713
        %v3024 = vunpack.c.l.b16 %v714
        %v3025 = vunpack.c.h.b16 %v714
        %v3026 = vunpack.c.l.b16 %v715
        %v3027 = vunpack.c.h.b16 %v715
        %v3028 = vunpack.c.l.b16 %v716
        %v3029 = vunpack.c.h.b16 %v716
        %v3030 = vunpack.c.l.b16 %v717
        %v3031 = vunpack.c.h.b16 %v717
        %v3032 = vunpack.c.l.b16 %v718
        %v3033 = vunpack.c.h.b16 %v718
        %v3034 = vunpack.c.l.b16 %v719
        %v3035 = vunpack.c.h.b16 %v719
        %v3036 = vunpack.c.l.b16 %v720
        %v3037 = vunpack.c.h.b16 %v720
        %v3038 = vunpack.c.l.b16 %v721
        %v3039 = vunpack.c.h.b16 %v721
        %v3040 = vunpack.c.l.b16 %v722
        %v3041 = vunpack.c.h.b16 %v722
        %v3042 = vunpack.c.l.b16 %v723
        %v3043 = vunpack.c.h.b16 %v723
        %v3044 = vunpack.c.l.b16 %v724
        %v3045 = vunpack.c.h.b16 %v724
        %v3046 = vunpack.c.l.b16 %v725
        %v3047 = vunpack.c.h.b16 %v725
        %v3048 = vunpack.c.l.b16 %v726
        %v3049 = vunpack.c.h.b16 %v726
        %v3050 = vunpack.c.l.b16 %v727
        %v3051 = vunpack.c.h.b16 %v727
        %v3052 = vunpack.c.l.b16 %v728
        %v3053 = vunpack.c.h.b16 %v728
        %v3054 = vunpack.c.l.b16 %v729
        %v3055 = vunpack.c.h.b16 %v729
        %v3056 = vunpack.c.l.b16 %v730
        %v3057 = vunpack.c.h.b16 %v730
        %v3058 = vunpack.c.l.b16 %v731
        %v3059 = vunpack.c.h.b16 %v731
        %v3060 = vunpack.c.l.b16 %v732
        %v3061 = vunpack.c.h.b16 %v732
        %v3062 = vunpack.c.l.b16 %v733
        %v3063 = vunpack.c.h.b16 %v733
        %v3064 = vunpack.c.l.b16 %v734
        %v3065 = vunpack.c.h.b16 %v734
        %v3066 = vunpack.c.l.b16 %v735
        %v3067 = vunpack.c.h.b16 %v735
        %v3068 = vunpack.c.l.b16 %v736
        %v3069 = vunpack.c.h.b16 %v736
        %v3070 = vunpack.c.l.b16 %v737
        %v3071 = vunpack.c.h.b16 %v737
        %v3072 = vunpack.c.l.b16 %v738
        %v3073 = vunpack.c.h.b16 %v738
        %v3074 = vunpack.c.l.b16 %v739
        %v3075 = vunpack.c.h.b16 %v739
        %v3076 = vunpack.c.l.b16 %v740
        %v3077 = vunpack.c.h.b16 %v740
        %v3078 = vunpack.c.l.b16 %v741
        %v3079 = vunpack.c.h.b16 %v741
        %v3080 = vunpack.c.l.b16 %v742
        %v3081 = vunpack.c.h.b16 %v742
        %v3082 = vunpack.c.l.b16 %v743
        %v3083 = vunpack.c.h.b16 %v743
        %v3084 = vunpack.c.l.b16 %v744
        %v3085 = vunpack.c.h.b16 %v744
        %v3086 = vunpack.c.l.b16 %v745
        %v3087 = vunpack.c.h.b16 %v745
        %v3088 = vunpack.c.l.b16 %v746
        %v3089 = vunpack.c.h.b16 %v746
        %v3090 = vunpack.c.l.b16 %v747
        %v3091 = vunpack.c.h.b16 %v747
        %v3092 = vunpack.c.l.b16 %v748
        %v3093 = vunpack.c.h.b16 %v748
        %v3094 = vunpack.c.l.b16 %v749
        %v3095 = vunpack.c.h.b16 %v749
        %v3096 = vunpack.c.l.b16 %v750
        %v3097 = vunpack.c.h.b16 %v750
        %v3098 = vunpack.c.l.b16 %v751
        %v3099 = vunpack.c.h.b16 %v751
        %v3100 = vunpack.c.l.b16 %v752
        %v3101 = vunpack.c.h.b16 %v752
        %v3102 = vunpack.c.l.b16 %v753
        %v3103 = vunpack.c.h.b16 %v753
        %v3104 = vunpack.c.l.b16 %v754
        %v3105 = vunpack.c.h.b16 %v754
        %v3106 = vunpack.c.l.b16 %v755
        %v3107 = vunpack.c.h.b16 %v755
        %v3108 = vunpack.c.l.b16 %v756
        %v3109 = vunpack.c.h.b16 %v756
        %v3110 = vunpack.c.l.b16 %v757
        %v3111 = vunpack.c.h.b16 %v757
        %v3112 = vunpack.c.l.b16 %v758
        %v3113 = vunpack.c.h.b16 %v758
        %v3114 = vunpack.c.l.b16 %v759
        %v3115 = vunpack.c.h.b16 %v759
        %v3116 = vunpack.c.l.b16 %v760
        %v3117 = vunpack.c.h.b16 %v760
        %v3118 = vunpack.c.l.b16 %v761
        %v3119 = vunpack.c.h.b16 %v761
        %v3120 = vunpack.c.l.b16 %v762
        %v3121 = vunpack.c.h.b16 %v762
        %v3122 = vunpack.c.l.b16 %v763
        %v3123 = vunpack.c.h.b16 %v763
        %v3124 = vunpack.c.l.b16 %v764
        %v3125 = vunpack.c.h.b16 %v764
        %v3126 = vunpack.c.l.b16 %v765
        %v3127 = vunpack.c.h.b16 %v765
        %v3128 = vpack.c.b16 %v3002, %v3000
        %v3129 = vpack.c.b16 %v3003, %v3001
        %v3130 = vpack.c.b16 %v3006, %v3004
        %v3131 = vpack.c.b16 %v3007, %v3005
        %v3132 = vpack.c.b16 %v3010, %v3008
        %v3133 = vpack.c.b16 %v3011, %v3009
        %v3134 = vpack.c.b16 %v3014, %v3012
        %v3135 = vpack.c.b16 %v3015, %v3013
        %v3136 = vpack.c.b16 %v3018, %v3016
        %v3137 = vpack.c.b16 %v3019, %v3017
        %v3138 = vpack.c.b16 %v3022, %v3020
        %v3139 = vpack.c.b16 %v3023, %v3021
        %v3140 = vpack.c.b16 %v3026, %v3024
        %v3141 = vpack.c.b16 %v3027, %v3025
        %v3142 = vpack.c.b16 %v3030, %v3028
        %v3143 = vpack.c.b16 %v3031, %v3029
        %v3144 = vpack.c.b16 %v3034, %v3032
        %v3145 = vpack.c.b16 %v3035, %v3033
        %v3146 = vpack.c.b16 %v3038, %v3036
        %v3147 = vpack.c.b16 %v3039, %v3037
        %v3148 = vpack.c.b16 %v3042, %v3040
        %v3149 = vpack.c.b16 %v3043, %v3041
        %v3150 = vpack.c.b16 %v3046, %v3044
        %v3151 = vpack.c.b16 %v3047, %v3045
        %v3152 = vpack.c.b16 %v3050, %v3048
        %v3153 = vpack.c.b16 %v3051, %v3049
        %v3154 = vpack.c.b16 %v3054, %v3052
        %v3155 = vpack.c.b16 %v3055, %v3053
        %v3156 = vpack.c.b16 %v3058, %v3056
        %v3157 = vpack.c.b16 %v3059, %v3057
        %v3158 = vpack.c.b16 %v3062, %v3060
        %v3159 = vpack.c.b16 %v3063, %v3061
        %v3160 = vpack.c.b16 %v3066, %v3064
        %v3161 = vpack.c.b16 %v3067, %v3065
        %v3162 = vpack.c.b16 %v3070, %v3068
        %v3163 = vpack.c.b16 %v3071, %v3069
        %v3164 = vpack.c.b16 %v3074, %v3072
        %v3165 = vpack.c.b16 %v3075, %v3073
        %v3166 = vpack.c.b16 %v3078, %v3076
        %v3167 = vpack.c.b16 %v3079, %v3077
        %v3168 = vpack.c.b16 %v3082, %v3080
        %v3169 = vpack.c.b16 %v3083, %v3081
        %v3170 = vpack.c.b16 %v3086, %v3084
        %v3171 = vpack.c.b16 %v3087, %v3085
        %v3172 = vpack.c.b16 %v3090, %v3088
        %v3173 = vpack.c.b16 %v3091, %v3089
        %v3174 = vpack.c.b16 %v3094, %v3092
        %v3175 = vpack.c.b16 %v3095, %v3093
        %v3176 = vpack.c.b16 %v3098, %v3096
        %v3177 = vpack.c.b16 %v3099, %v3097
        %v3178 = vpack.c.b16 %v3102, %v3100
        %v3179 = vpack.c.b16 %v3103, %v3101
        %v3180 = vpack.c.b16 %v3106, %v3104
        %v3181 = vpack.c.b16 %v3107, %v3105
        %v3182 = vpack.c.b16 %v3110, %v3108
        %v3183 = vpack.c.b16 %v3111, %v3109
        %v3184 = vpack.c.b16 %v3114, %v3112
        %v3185 = vpack.c.b16 %v3115, %v3113
        %v3186 = vpack.c.b16 %v3118, %v3116
        %v3187 = vpack.c.b16 %v3119, %v3117
        %v3188 = vpack.c.b16 %v3122, %v3120
        %v3189 = vpack.c.b16 %v3123, %v3121
        %v3190 = vpack.c.b16 %v3126, %v3124
        %v3191 = vpack.c.b16 %v3127, %v3125
        %3256 = vmatprep.subr.bf16.mxu0 %v3129
        %3257 = vmatpush1.bf16.msra.mxu0 %v3128
        %3258 = vmatprep.subr.bf16.mxu0 %v3131
        %3259 = vmatpush1.bf16.msra.mxu0 %v3130
        %3260 = vmatprep.subr.bf16.mxu0 %v3133
        %3261 = vmatpush1.bf16.msra.mxu0 %v3132
        %3262 = vmatprep.subr.bf16.mxu0 %v3135
        %3263 = vmatpush1.bf16.msra.mxu0 %v3134
        %3264 = vmatprep.subr.bf16.mxu0 %v3137
        %3265 = vmatpush1.bf16.msra.mxu0 %v3136
        %3266 = vmatprep.subr.bf16.mxu0 %v3139
        %3267 = vmatpush1.bf16.msra.mxu0 %v3138
        %3268 = vmatprep.subr.bf16.mxu0 %v3141
        %3269 = vmatpush1.bf16.msra.mxu0 %v3140
        %3270 = vmatprep.subr.bf16.mxu0 %v3143
        %3271 = vmatpush1.bf16.msra.mxu0 %v3142
        %3272 = vmatprep.subr.bf16.mxu0 %v3145
        %3273 = vmatpush1.bf16.msra.mxu0 %v3144
        %3274 = vmatprep.subr.bf16.mxu0 %v3147
        %3275 = vmatpush1.bf16.msra.mxu0 %v3146
        %3276 = vmatprep.subr.bf16.mxu0 %v3149
        %3277 = vmatpush1.bf16.msra.mxu0 %v3148
        %3278 = vmatprep.subr.bf16.mxu0 %v3151
        %3279 = vmatpush1.bf16.msra.mxu0 %v3150
        %3280 = vmatprep.subr.bf16.mxu0 %v3153
        %3281 = vmatpush1.bf16.msra.mxu0 %v3152
        %3282 = vmatprep.subr.bf16.mxu0 %v3155
        %3283 = vmatpush1.bf16.msra.mxu0 %v3154
        %3284 = vmatprep.subr.bf16.mxu0 %v3157
        %3285 = vmatpush1.bf16.msra.mxu0 %v3156
        %3286 = vmatprep.subr.bf16.mxu0 %v3159
        %3287 = vmatpush1.bf16.msra.mxu0 %v3158
        %3288 = vmatprep.mubr.bf16.mxu0 %v2933
        %3289 = vmatmul.mubr.bf16.gmra.mrb[0].mxu0 %v2932
        %v3290 = vpop.f32.mrb[0].mxu0
        %v3291 = vadd.f32 0.0, %v3290
        %v3292 = vpop.f32.mrb[0].mxu0
        %v3293 = vadd.f32 0.0, %v3292
        %v3294 = vpop.f32.mrb[0].mxu0
        %v3295 = vadd.f32 0.0, %v3294
        %v3296 = vpop.f32.mrb[0].mxu0
        %v3297 = vadd.f32 0.0, %v3296
        %3298 = vdwg.mxu0
        %3299 = vmatprep.subr.bf16.mxu0 %v3161
        %3300 = vmatpush1.bf16.msra.mxu0 %v3160
        %3301 = vmatprep.subr.bf16.mxu0 %v3163
        %3302 = vmatpush1.bf16.msra.mxu0 %v3162
        %3303 = vmatprep.subr.bf16.mxu0 %v3165
        %3304 = vmatpush1.bf16.msra.mxu0 %v3164
        %3305 = vmatprep.subr.bf16.mxu0 %v3167
        %3306 = vmatpush1.bf16.msra.mxu0 %v3166
        %3307 = vmatprep.subr.bf16.mxu0 %v3169
        %3308 = vmatpush1.bf16.msra.mxu0 %v3168
        %3309 = vmatprep.subr.bf16.mxu0 %v3171
        %3310 = vmatpush1.bf16.msra.mxu0 %v3170
        %3311 = vmatprep.subr.bf16.mxu0 %v3173
        %3312 = vmatpush1.bf16.msra.mxu0 %v3172
        %3313 = vmatprep.subr.bf16.mxu0 %v3175
        %3314 = vmatpush1.bf16.msra.mxu0 %v3174
        %3315 = vmatprep.subr.bf16.mxu0 %v3177
        %3316 = vmatpush1.bf16.msra.mxu0 %v3176
        %3317 = vmatprep.subr.bf16.mxu0 %v3179
        %3318 = vmatpush1.bf16.msra.mxu0 %v3178
        %3319 = vmatprep.subr.bf16.mxu0 %v3181
        %3320 = vmatpush1.bf16.msra.mxu0 %v3180
        %3321 = vmatprep.subr.bf16.mxu0 %v3183
        %3322 = vmatpush1.bf16.msra.mxu0 %v3182
        %3323 = vmatprep.subr.bf16.mxu0 %v3185
        %3324 = vmatpush1.bf16.msra.mxu0 %v3184
        %3325 = vmatprep.subr.bf16.mxu0 %v3187
        %3326 = vmatpush1.bf16.msra.mxu0 %v3186
        %3327 = vmatprep.subr.bf16.mxu0 %v3189
        %3328 = vmatpush1.bf16.msra.mxu0 %v3188
        %3329 = vmatprep.subr.bf16.mxu0 %v3191
        %3330 = vmatpush1.bf16.msra.mxu0 %v3190
        %3331 = vmatprep.mubr.bf16.mxu0 %v2935
        %3332 = vmatmul.mubr.bf16.gmra.mrb[0].mxu0 %v2934
        %v3333 = vpop.f32.mrb[0].mxu0
        %v3334 = vadd.f32 %v3291, %v3333
        %v3335 = vpop.f32.mrb[0].mxu0
        %v3336 = vadd.f32 %v3293, %v3335
        %v3337 = vpop.f32.mrb[0].mxu0
        %v3338 = vadd.f32 %v3295, %v3337
        %v3339 = vpop.f32.mrb[0].mxu0
        %v3340 = vadd.f32 %v3297, %v3339
        %3341 = vdwg.mxu0
        %v3342 = vadd.f32 %v2015, %v3334
        %v3343 = vadd.f32 %v2016, %v3336
        %v3344 = vadd.f32 %v2017, %v3338
        %v3345 = vadd.f32 %v2018, %v3340
        %s3346 = scalar_lea.vmem %s364, 4 [#allocation11]
        %v3347 = vld [vmem:[%s3346] ss:$2 sm:$0x3]
        %s3348 = scalar_lea.vmem %s3346, 1 [#allocation11]
        %v3349 = vld [vmem:[%s3348] ss:$2 sm:$0x3]
        %s3350 = scalar_lea.vmem %s373, 2048 [#allocation12]
        %v3351 = vld [vmem:[%s3350] sm:$0xff]
        %v3352 = vld [vmem:[%s3350 + $0x8] sm:$0xff]
        %v3353 = vld [vmem:[%s3350 + $0x10] sm:$0xff]
        %v3354 = vld [vmem:[%s3350 + $0x40] sm:$0xff]
        %v3355 = vld [vmem:[%s3350 + $0x48] sm:$0xff]
        %v3356 = vld [vmem:[%s3350 + $0x50] sm:$0xff]
        %v3357 = vld [vmem:[%s3350 + $0x80] sm:$0xff]
        %v3358 = vld [vmem:[%s3350 + $0x88] sm:$0xff]
        %v3359 = vld [vmem:[%s3350 + $0x90] sm:$0xff]
        %v3360 = vld [vmem:[%s3350 + $0xc0] sm:$0xff]
        %v3361 = vld [vmem:[%s3350 + $0xc8] sm:$0xff]
        %v3362 = vld [vmem:[%s3350 + $0xd0] sm:$0xff]
        %v3363 = vld [vmem:[%s3350 + $0x100] sm:$0xff]
        %v3364 = vld [vmem:[%s3350 + $0x108] sm:$0xff]
        %v3365 = vld [vmem:[%s3350 + $0x110] sm:$0xff]
        %v3366 = vld [vmem:[%s3350 + $0x140] sm:$0xff]
        %v3367 = vld [vmem:[%s3350 + $0x148] sm:$0xff]
        %v3368 = vld [vmem:[%s3350 + $0x150] sm:$0xff]
        %v3369 = vld [vmem:[%s3350 + $0x180] sm:$0xff]
        %v3370 = vld [vmem:[%s3350 + $0x188] sm:$0xff]
        %v3371 = vld [vmem:[%s3350 + $0x190] sm:$0xff]
        %v3372 = vld [vmem:[%s3350 + $0x1c0] sm:$0xff]
        %v3373 = vld [vmem:[%s3350 + $0x1c8] sm:$0xff]
        %v3374 = vld [vmem:[%s3350 + $0x1d0] sm:$0xff]
        %v3375 = vld [vmem:[%s3350 + $0x200] sm:$0xff]
        %v3376 = vld [vmem:[%s3350 + $0x208] sm:$0xff]
        %v3377 = vld [vmem:[%s3350 + $0x210] sm:$0xff]
        %v3378 = vld [vmem:[%s3350 + $0x240] sm:$0xff]
        %v3379 = vld [vmem:[%s3350 + $0x248] sm:$0xff]
        %v3380 = vld [vmem:[%s3350 + $0x250] sm:$0xff]
        %v3381 = vld [vmem:[%s3350 + $0x280] sm:$0xff]
        %v3382 = vld [vmem:[%s3350 + $0x288] sm:$0xff]
        %v3383 = vld [vmem:[%s3350 + $0x290] sm:$0xff]
        %v3384 = vld [vmem:[%s3350 + $0x2c0] sm:$0xff]
        %v3385 = vld [vmem:[%s3350 + $0x2c8] sm:$0xff]
        %v3386 = vld [vmem:[%s3350 + $0x2d0] sm:$0xff]
        %v3387 = vld [vmem:[%s3350 + $0x300] sm:$0xff]
        %v3388 = vld [vmem:[%s3350 + $0x308] sm:$0xff]
        %v3389 = vld [vmem:[%s3350 + $0x310] sm:$0xff]
        %v3390 = vld [vmem:[%s3350 + $0x340] sm:$0xff]
        %v3391 = vld [vmem:[%s3350 + $0x348] sm:$0xff]
        %v3392 = vld [vmem:[%s3350 + $0x350] sm:$0xff]
        %v3393 = vld [vmem:[%s3350 + $0x380] sm:$0xff]
        %v3394 = vld [vmem:[%s3350 + $0x388] sm:$0xff]
        %v3395 = vld [vmem:[%s3350 + $0x390] sm:$0xff]
        %v3396 = vld [vmem:[%s3350 + $0x3c0] sm:$0xff]
        %v3397 = vld [vmem:[%s3350 + $0x3c8] sm:$0xff]
        %v3398 = vld [vmem:[%s3350 + $0x3d0] sm:$0xff]
        %v3399 = vld [vmem:[%s3350 + $0x400] sm:$0xff]
        %v3400 = vld [vmem:[%s3350 + $0x408] sm:$0xff]
        %v3401 = vld [vmem:[%s3350 + $0x410] sm:$0xff]
        %v3402 = vld [vmem:[%s3350 + $0x440] sm:$0xff]
        %v3403 = vld [vmem:[%s3350 + $0x448] sm:$0xff]
        %v3404 = vld [vmem:[%s3350 + $0x450] sm:$0xff]
        %v3405 = vld [vmem:[%s3350 + $0x480] sm:$0xff]
        %v3406 = vld [vmem:[%s3350 + $0x488] sm:$0xff]
        %v3407 = vld [vmem:[%s3350 + $0x490] sm:$0xff]
        %v3408 = vld [vmem:[%s3350 + $0x4c0] sm:$0xff]
        %v3409 = vld [vmem:[%s3350 + $0x4c8] sm:$0xff]
        %v3410 = vld [vmem:[%s3350 + $0x4d0] sm:$0xff]
        %v3411 = vld [vmem:[%s3350 + $0x500] sm:$0xff]
        %v3412 = vld [vmem:[%s3350 + $0x508] sm:$0xff]
        %v3413 = vld [vmem:[%s3350 + $0x510] sm:$0xff]
        %v3414 = vld [vmem:[%s3350 + $0x540] sm:$0xff]
        %v3415 = vld [vmem:[%s3350 + $0x548] sm:$0xff]
        %v3416 = vld [vmem:[%s3350 + $0x550] sm:$0xff]
        %v3417 = vld [vmem:[%s3350 + $0x580] sm:$0xff]
        %v3418 = vld [vmem:[%s3350 + $0x588] sm:$0xff]
        %v3419 = vld [vmem:[%s3350 + $0x590] sm:$0xff]
        %v3420 = vld [vmem:[%s3350 + $0x5c0] sm:$0xff]
        %v3421 = vld [vmem:[%s3350 + $0x5c8] sm:$0xff]
        %v3422 = vld [vmem:[%s3350 + $0x5d0] sm:$0xff]
        %v3423 = vld [vmem:[%s3350 + $0x600] sm:$0xff]
        %v3424 = vld [vmem:[%s3350 + $0x608] sm:$0xff]
        %v3425 = vld [vmem:[%s3350 + $0x610] sm:$0xff]
        %v3426 = vld [vmem:[%s3350 + $0x640] sm:$0xff]
        %v3427 = vld [vmem:[%s3350 + $0x648] sm:$0xff]
        %v3428 = vld [vmem:[%s3350 + $0x650] sm:$0xff]
        %v3429 = vld [vmem:[%s3350 + $0x680] sm:$0xff]
        %v3430 = vld [vmem:[%s3350 + $0x688] sm:$0xff]
        %v3431 = vld [vmem:[%s3350 + $0x690] sm:$0xff]
        %v3432 = vld [vmem:[%s3350 + $0x6c0] sm:$0xff]
        %v3433 = vld [vmem:[%s3350 + $0x6c8] sm:$0xff]
        %v3434 = vld [vmem:[%s3350 + $0x6d0] sm:$0xff]
        %v3435 = vld [vmem:[%s3350 + $0x700] sm:$0xff]
        %v3436 = vld [vmem:[%s3350 + $0x708] sm:$0xff]
        %v3437 = vld [vmem:[%s3350 + $0x710] sm:$0xff]
        %v3438 = vld [vmem:[%s3350 + $0x740] sm:$0xff]
        %v3439 = vld [vmem:[%s3350 + $0x748] sm:$0xff]
        %v3440 = vld [vmem:[%s3350 + $0x750] sm:$0xff]
        %v3441 = vld [vmem:[%s3350 + $0x780] sm:$0xff]
        %v3442 = vld [vmem:[%s3350 + $0x788] sm:$0xff]
        %v3443 = vld [vmem:[%s3350 + $0x790] sm:$0xff]
        %v3444 = vld [vmem:[%s3350 + $0x7c0] sm:$0xff]
        %v3445 = vld [vmem:[%s3350 + $0x7c8] sm:$0xff]
        %v3446 = vld [vmem:[%s3350 + $0x7d0] sm:$0xff]
        %v3447 = vld [vmem:[%s3350 + $0x18] sm:$0xff]
        %v3448 = vld [vmem:[%s3350 + $0x58] sm:$0xff]
        %v3449 = vld [vmem:[%s3350 + $0x98] sm:$0xff]
        %v3450 = vld [vmem:[%s3350 + $0xd8] sm:$0xff]
        %v3451 = vld [vmem:[%s3350 + $0x118] sm:$0xff]
        %v3452 = vld [vmem:[%s3350 + $0x158] sm:$0xff]
        %v3453 = vld [vmem:[%s3350 + $0x198] sm:$0xff]
        %v3454 = vld [vmem:[%s3350 + $0x1d8] sm:$0xff]
        %v3455 = vld [vmem:[%s3350 + $0x218] sm:$0xff]
        %v3456 = vld [vmem:[%s3350 + $0x258] sm:$0xff]
        %v3457 = vld [vmem:[%s3350 + $0x298] sm:$0xff]
        %v3458 = vld [vmem:[%s3350 + $0x2d8] sm:$0xff]
        %v3459 = vld [vmem:[%s3350 + $0x318] sm:$0xff]
        %v3460 = vld [vmem:[%s3350 + $0x358] sm:$0xff]
        %v3461 = vld [vmem:[%s3350 + $0x398] sm:$0xff]
        %v3462 = vld [vmem:[%s3350 + $0x3d8] sm:$0xff]
        %v3463 = vld [vmem:[%s3350 + $0x418] sm:$0xff]
        %v3464 = vld [vmem:[%s3350 + $0x458] sm:$0xff]
        %v3465 = vld [vmem:[%s3350 + $0x498] sm:$0xff]
        %v3466 = vld [vmem:[%s3350 + $0x4d8] sm:$0xff]
        %v3467 = vld [vmem:[%s3350 + $0x518] sm:$0xff]
        %v3468 = vld [vmem:[%s3350 + $0x558] sm:$0xff]
        %v3469 = vld [vmem:[%s3350 + $0x598] sm:$0xff]
        %v3470 = vld [vmem:[%s3350 + $0x5d8] sm:$0xff]
        %v3471 = vld [vmem:[%s3350 + $0x618] sm:$0xff]
        %v3472 = vld [vmem:[%s3350 + $0x658] sm:$0xff]
        %v3473 = vld [vmem:[%s3350 + $0x698] sm:$0xff]
        %v3474 = vld [vmem:[%s3350 + $0x6d8] sm:$0xff]
        %v3475 = vld [vmem:[%s3350 + $0x718] sm:$0xff]
        %v3476 = vld [vmem:[%s3350 + $0x758] sm:$0xff]
        %v3477 = vld [vmem:[%s3350 + $0x798] sm:$0xff]
        %v3478 = vld [vmem:[%s3350 + $0x7d8] sm:$0xff]
        %v3479 = vld [vmem:[%s3350 + $0x20] sm:$0xff]
        %v3480 = vld [vmem:[%s3350 + $0x28] sm:$0xff]
        %v3481 = vld [vmem:[%s3350 + $0x30] sm:$0xff]
        %v3482 = vld [vmem:[%s3350 + $0x38] sm:$0xff]
        %v3483 = vld [vmem:[%s3350 + $0x60] sm:$0xff]
        %v3484 = vld [vmem:[%s3350 + $0x68] sm:$0xff]
        %v3485 = vld [vmem:[%s3350 + $0x70] sm:$0xff]
        %v3486 = vld [vmem:[%s3350 + $0x78] sm:$0xff]
        %v3487 = vld [vmem:[%s3350 + $0xa0] sm:$0xff]
        %v3488 = vld [vmem:[%s3350 + $0xa8] sm:$0xff]
        %v3489 = vld [vmem:[%s3350 + $0xb0] sm:$0xff]
        %v3490 = vld [vmem:[%s3350 + $0xb8] sm:$0xff]
        %v3491 = vld [vmem:[%s3350 + $0xe0] sm:$0xff]
        %v3492 = vld [vmem:[%s3350 + $0xe8] sm:$0xff]
        %v3493 = vld [vmem:[%s3350 + $0xf0] sm:$0xff]
        %v3494 = vld [vmem:[%s3350 + $0xf8] sm:$0xff]
        %v3495 = vld [vmem:[%s3350 + $0x120] sm:$0xff]
        %v3496 = vld [vmem:[%s3350 + $0x128] sm:$0xff]
        %v3497 = vld [vmem:[%s3350 + $0x130] sm:$0xff]
        %v3498 = vld [vmem:[%s3350 + $0x138] sm:$0xff]
        %v3499 = vld [vmem:[%s3350 + $0x160] sm:$0xff]
        %v3500 = vld [vmem:[%s3350 + $0x168] sm:$0xff]
        %v3501 = vld [vmem:[%s3350 + $0x170] sm:$0xff]
        %v3502 = vld [vmem:[%s3350 + $0x178] sm:$0xff]
        %v3503 = vld [vmem:[%s3350 + $0x1a0] sm:$0xff]
        %v3504 = vld [vmem:[%s3350 + $0x1a8] sm:$0xff]
        %v3505 = vld [vmem:[%s3350 + $0x1b0] sm:$0xff]
        %v3506 = vld [vmem:[%s3350 + $0x1b8] sm:$0xff]
        %v3507 = vld [vmem:[%s3350 + $0x1e0] sm:$0xff]
        %v3508 = vld [vmem:[%s3350 + $0x1e8] sm:$0xff]
        %v3509 = vld [vmem:[%s3350 + $0x1f0] sm:$0xff]
        %v3510 = vld [vmem:[%s3350 + $0x1f8] sm:$0xff]
        %v3511 = vld [vmem:[%s3350 + $0x220] sm:$0xff]
        %v3512 = vld [vmem:[%s3350 + $0x228] sm:$0xff]
        %v3513 = vld [vmem:[%s3350 + $0x230] sm:$0xff]
        %v3514 = vld [vmem:[%s3350 + $0x238] sm:$0xff]
        %v3515 = vld [vmem:[%s3350 + $0x260] sm:$0xff]
        %v3516 = vld [vmem:[%s3350 + $0x268] sm:$0xff]
        %v3517 = vld [vmem:[%s3350 + $0x270] sm:$0xff]
        %v3518 = vld [vmem:[%s3350 + $0x278] sm:$0xff]
        %v3519 = vld [vmem:[%s3350 + $0x2a0] sm:$0xff]
        %v3520 = vld [vmem:[%s3350 + $0x2a8] sm:$0xff]
        %v3521 = vld [vmem:[%s3350 + $0x2b0] sm:$0xff]
        %v3522 = vld [vmem:[%s3350 + $0x2b8] sm:$0xff]
        %v3523 = vld [vmem:[%s3350 + $0x2e0] sm:$0xff]
        %v3524 = vld [vmem:[%s3350 + $0x2e8] sm:$0xff]
        %v3525 = vld [vmem:[%s3350 + $0x2f0] sm:$0xff]
        %v3526 = vld [vmem:[%s3350 + $0x2f8] sm:$0xff]
        %v3527 = vld [vmem:[%s3350 + $0x320] sm:$0xff]
        %v3528 = vld [vmem:[%s3350 + $0x328] sm:$0xff]
        %v3529 = vld [vmem:[%s3350 + $0x330] sm:$0xff]
        %v3530 = vld [vmem:[%s3350 + $0x338] sm:$0xff]
        %v3531 = vld [vmem:[%s3350 + $0x360] sm:$0xff]
        %v3532 = vld [vmem:[%s3350 + $0x368] sm:$0xff]
        %v3533 = vld [vmem:[%s3350 + $0x370] sm:$0xff]
        %v3534 = vld [vmem:[%s3350 + $0x378] sm:$0xff]
        %v3535 = vld [vmem:[%s3350 + $0x3a0] sm:$0xff]
        %v3536 = vld [vmem:[%s3350 + $0x3a8] sm:$0xff]
        %v3537 = vld [vmem:[%s3350 + $0x3b0] sm:$0xff]
        %v3538 = vld [vmem:[%s3350 + $0x3b8] sm:$0xff]
        %v3539 = vld [vmem:[%s3350 + $0x3e0] sm:$0xff]
        %v3540 = vld [vmem:[%s3350 + $0x3e8] sm:$0xff]
        %v3541 = vld [vmem:[%s3350 + $0x3f0] sm:$0xff]
        %v3542 = vld [vmem:[%s3350 + $0x3f8] sm:$0xff]
        %v3543 = vld [vmem:[%s3350 + $0x420] sm:$0xff]
        %v3544 = vld [vmem:[%s3350 + $0x428] sm:$0xff]
        %v3545 = vld [vmem:[%s3350 + $0x430] sm:$0xff]
        %v3546 = vld [vmem:[%s3350 + $0x438] sm:$0xff]
        %v3547 = vld [vmem:[%s3350 + $0x460] sm:$0xff]
        %v3548 = vld [vmem:[%s3350 + $0x468] sm:$0xff]
        %v3549 = vld [vmem:[%s3350 + $0x470] sm:$0xff]
        %v3550 = vld [vmem:[%s3350 + $0x478] sm:$0xff]
        %v3551 = vld [vmem:[%s3350 + $0x4a0] sm:$0xff]
        %v3552 = vld [vmem:[%s3350 + $0x4a8] sm:$0xff]
        %v3553 = vld [vmem:[%s3350 + $0x4b0] sm:$0xff]
        %v3554 = vld [vmem:[%s3350 + $0x4b8] sm:$0xff]
        %v3555 = vld [vmem:[%s3350 + $0x4e0] sm:$0xff]
        %v3556 = vld [vmem:[%s3350 + $0x4e8] sm:$0xff]
        %v3557 = vld [vmem:[%s3350 + $0x4f0] sm:$0xff]
        %v3558 = vld [vmem:[%s3350 + $0x4f8] sm:$0xff]
        %v3559 = vld [vmem:[%s3350 + $0x520] sm:$0xff]
        %v3560 = vld [vmem:[%s3350 + $0x528] sm:$0xff]
        %v3561 = vld [vmem:[%s3350 + $0x530] sm:$0xff]
        %v3562 = vld [vmem:[%s3350 + $0x538] sm:$0xff]
        %v3563 = vld [vmem:[%s3350 + $0x560] sm:$0xff]
        %v3564 = vld [vmem:[%s3350 + $0x568] sm:$0xff]
        %v3565 = vld [vmem:[%s3350 + $0x570] sm:$0xff]
        %v3566 = vld [vmem:[%s3350 + $0x578] sm:$0xff]
        %v3567 = vld [vmem:[%s3350 + $0x5a0] sm:$0xff]
        %v3568 = vld [vmem:[%s3350 + $0x5a8] sm:$0xff]
        %v3569 = vld [vmem:[%s3350 + $0x5b0] sm:$0xff]
        %v3570 = vld [vmem:[%s3350 + $0x5b8] sm:$0xff]
        %v3571 = vld [vmem:[%s3350 + $0x5e0] sm:$0xff]
        %v3572 = vld [vmem:[%s3350 + $0x5e8] sm:$0xff]
        %v3573 = vld [vmem:[%s3350 + $0x5f0] sm:$0xff]
        %v3574 = vld [vmem:[%s3350 + $0x5f8] sm:$0xff]
        %v3575 = vld [vmem:[%s3350 + $0x620] sm:$0xff]
        %v3576 = vld [vmem:[%s3350 + $0x628] sm:$0xff]
        %v3577 = vld [vmem:[%s3350 + $0x630] sm:$0xff]
        %v3578 = vld [vmem:[%s3350 + $0x638] sm:$0xff]
        %v3579 = vld [vmem:[%s3350 + $0x660] sm:$0xff]
        %v3580 = vld [vmem:[%s3350 + $0x668] sm:$0xff]
        %v3581 = vld [vmem:[%s3350 + $0x670] sm:$0xff]
        %v3582 = vld [vmem:[%s3350 + $0x678] sm:$0xff]
        %v3583 = vld [vmem:[%s3350 + $0x6a0] sm:$0xff]
        %v3584 = vld [vmem:[%s3350 + $0x6a8] sm:$0xff]
        %v3585 = vld [vmem:[%s3350 + $0x6b0] sm:$0xff]
        %v3586 = vld [vmem:[%s3350 + $0x6b8] sm:$0xff]
        %v3587 = vld [vmem:[%s3350 + $0x6e0] sm:$0xff]
        %v3588 = vld [vmem:[%s3350 + $0x6e8] sm:$0xff]
        %v3589 = vld [vmem:[%s3350 + $0x6f0] sm:$0xff]
        %v3590 = vld [vmem:[%s3350 + $0x6f8] sm:$0xff]
        %v3591 = vld [vmem:[%s3350 + $0x720] sm:$0xff]
        %v3592 = vld [vmem:[%s3350 + $0x728] sm:$0xff]
        %v3593 = vld [vmem:[%s3350 + $0x730] sm:$0xff]
        %v3594 = vld [vmem:[%s3350 + $0x738] sm:$0xff]
        %v3595 = vld [vmem:[%s3350 + $0x760] sm:$0xff]
        %v3596 = vld [vmem:[%s3350 + $0x768] sm:$0xff]
        %v3597 = vld [vmem:[%s3350 + $0x770] sm:$0xff]
        %v3598 = vld [vmem:[%s3350 + $0x778] sm:$0xff]
        %v3599 = vld [vmem:[%s3350 + $0x7a0] sm:$0xff]
        %v3600 = vld [vmem:[%s3350 + $0x7a8] sm:$0xff]
        %v3601 = vld [vmem:[%s3350 + $0x7b0] sm:$0xff]
        %v3602 = vld [vmem:[%s3350 + $0x7b8] sm:$0xff]
        %v3603 = vld [vmem:[%s3350 + $0x7e0] sm:$0xff]
        %v3604 = vld [vmem:[%s3350 + $0x7e8] sm:$0xff]
        %v3605 = vld [vmem:[%s3350 + $0x7f0] sm:$0xff]
        %v3606 = vld [vmem:[%s3350 + $0x7f8] sm:$0xff]
        %s3607 = scalar_lea.vmem %s382, 512 [#allocation13]
        %v3608 = vld [vmem:[%s3607] sm:$0xff]
        %v3609 = vld [vmem:[%s3607 + $0x8] sm:$0xff]
        %v3610 = vld [vmem:[%s3607 + $0x10] sm:$0xff]
        %v3611 = vld [vmem:[%s3607 + $0x18] sm:$0xff]
        %v3612 = vld [vmem:[%s3607 + $0x20] sm:$0xff]
        %v3613 = vld [vmem:[%s3607 + $0x28] sm:$0xff]
        %v3614 = vld [vmem:[%s3607 + $0x30] sm:$0xff]
        %v3615 = vld [vmem:[%s3607 + $0x38] sm:$0xff]
        %v3616 = vld [vmem:[%s3607 + $0x40] sm:$0xff]
        %v3617 = vld [vmem:[%s3607 + $0x48] sm:$0xff]
        %v3618 = vld [vmem:[%s3607 + $0x50] sm:$0xff]
        %v3619 = vld [vmem:[%s3607 + $0x58] sm:$0xff]
        %v3620 = vld [vmem:[%s3607 + $0x60] sm:$0xff]
        %v3621 = vld [vmem:[%s3607 + $0x68] sm:$0xff]
        %v3622 = vld [vmem:[%s3607 + $0x70] sm:$0xff]
        %v3623 = vld [vmem:[%s3607 + $0x78] sm:$0xff]
        %v3624 = vld [vmem:[%s3607 + $0x80] sm:$0xff]
        %v3625 = vld [vmem:[%s3607 + $0x88] sm:$0xff]
        %v3626 = vld [vmem:[%s3607 + $0x90] sm:$0xff]
        %v3627 = vld [vmem:[%s3607 + $0x98] sm:$0xff]
        %v3628 = vld [vmem:[%s3607 + $0xa0] sm:$0xff]
        %v3629 = vld [vmem:[%s3607 + $0xa8] sm:$0xff]
        %v3630 = vld [vmem:[%s3607 + $0xb0] sm:$0xff]
        %v3631 = vld [vmem:[%s3607 + $0xb8] sm:$0xff]
        %v3632 = vld [vmem:[%s3607 + $0xc0] sm:$0xff]
        %v3633 = vld [vmem:[%s3607 + $0xc8] sm:$0xff]
        %v3634 = vld [vmem:[%s3607 + $0xd0] sm:$0xff]
        %v3635 = vld [vmem:[%s3607 + $0xd8] sm:$0xff]
        %v3636 = vld [vmem:[%s3607 + $0xe0] sm:$0xff]
        %v3637 = vld [vmem:[%s3607 + $0xe8] sm:$0xff]
        %v3638 = vld [vmem:[%s3607 + $0xf0] sm:$0xff]
        %v3639 = vld [vmem:[%s3607 + $0xf8] sm:$0xff]
        %v3640 = vld [vmem:[%s3607 + $0x100] sm:$0xff]
        %v3641 = vld [vmem:[%s3607 + $0x108] sm:$0xff]
        %v3642 = vld [vmem:[%s3607 + $0x110] sm:$0xff]
        %v3643 = vld [vmem:[%s3607 + $0x118] sm:$0xff]
        %v3644 = vld [vmem:[%s3607 + $0x120] sm:$0xff]
        %v3645 = vld [vmem:[%s3607 + $0x128] sm:$0xff]
        %v3646 = vld [vmem:[%s3607 + $0x130] sm:$0xff]
        %v3647 = vld [vmem:[%s3607 + $0x138] sm:$0xff]
        %v3648 = vld [vmem:[%s3607 + $0x140] sm:$0xff]
        %v3649 = vld [vmem:[%s3607 + $0x148] sm:$0xff]
        %v3650 = vld [vmem:[%s3607 + $0x150] sm:$0xff]
        %v3651 = vld [vmem:[%s3607 + $0x158] sm:$0xff]
        %v3652 = vld [vmem:[%s3607 + $0x160] sm:$0xff]
        %v3653 = vld [vmem:[%s3607 + $0x168] sm:$0xff]
        %v3654 = vld [vmem:[%s3607 + $0x170] sm:$0xff]
        %v3655 = vld [vmem:[%s3607 + $0x178] sm:$0xff]
        %v3656 = vld [vmem:[%s3607 + $0x180] sm:$0xff]
        %v3657 = vld [vmem:[%s3607 + $0x188] sm:$0xff]
        %v3658 = vld [vmem:[%s3607 + $0x190] sm:$0xff]
        %v3659 = vld [vmem:[%s3607 + $0x198] sm:$0xff]
        %v3660 = vld [vmem:[%s3607 + $0x1a0] sm:$0xff]
        %v3661 = vld [vmem:[%s3607 + $0x1a8] sm:$0xff]
        %v3662 = vld [vmem:[%s3607 + $0x1b0] sm:$0xff]
        %v3663 = vld [vmem:[%s3607 + $0x1b8] sm:$0xff]
        %v3664 = vld [vmem:[%s3607 + $0x1c0] sm:$0xff]
        %v3665 = vld [vmem:[%s3607 + $0x1c8] sm:$0xff]
        %v3666 = vld [vmem:[%s3607 + $0x1d0] sm:$0xff]
        %v3667 = vld [vmem:[%s3607 + $0x1d8] sm:$0xff]
        %v3668 = vld [vmem:[%s3607 + $0x1e0] sm:$0xff]
        %v3669 = vld [vmem:[%s3607 + $0x1e8] sm:$0xff]
        %v3670 = vld [vmem:[%s3607 + $0x1f0] sm:$0xff]
        %v3671 = vld [vmem:[%s3607 + $0x1f8] sm:$0xff]
        %v3672 = vmul.f32 %v3342, %v3342
        %v3673 = vmul.f32 %v3343, %v3343
        %v3674 = vmul.f32 %v3344, %v3344
        %v3675 = vmul.f32 %v3345, %v3345
        %v3676 = vadd.f32 %v3672, %v3673
        %3677 = vadd.xlane.f32.xlu0 %v3676
        %v3678 = vpop.xlane.xlu0 %3677
        %v3679 = vadd.f32 %v3674, %v3675
        %3680 = vadd.xlane.f32.xlu0 %v3679
        %v3681 = vpop.xlane.xlu0 %3680
        %v3682 = vmul.f32 %v3678, %v776
        %v3683 = vmul.f32 %v3681, %v776
        %v3684 = vadd.f32 %v3682, 1e-06
        %v3685 = vadd.f32 %v3683, 1e-06
        %v3686 = vrsqrt.pop %v3684
        %v3687 = vrsqrt.pop %v3685
        %v3688 = vmul.f32 %v3342, %v3686
        %v3689 = vmul.f32 %v3343, %v3686
        %v3690 = vmul.f32 %v3344, %v3687
        %v3691 = vmul.f32 %v3345, %v3687
        %v3693 = vlaneseq
        %v3694 = vshrl.u32 %v3693, 7
        %v3695 = vsub.s32 0, %v3694
        %v3696 = vrot.slane %v3347, %v3695
        %v3697 = vlaneseq
        %v3698 = vshrl.u32 %v3697, 7
        %v3699 = vsub.s32 1, %v3698
        %v3700 = vrot.slane %v3347, %v3699
        %v3703 = vmul.f32 %v3688, %v3696
        %v3704 = vmul.f32 %v3689, %v3700
        %v3705 = vmul.f32 %v3690, %v3696
        %v3706 = vmul.f32 %v3691, %v3700
        %v3707 = vpack.c.bf16 %v3705, %v3703
        %v3708 = vpack.c.bf16 %v3706, %v3704
        %v3805 = vunpack.c.l.b16 %v3351
        %v3806 = vunpack.c.h.b16 %v3351
        %v3807 = vunpack.c.l.b16 %v3352
        %v3808 = vunpack.c.h.b16 %v3352
        %v3809 = vunpack.c.l.b16 %v3353
        %v3810 = vunpack.c.h.b16 %v3353
        %v3811 = vunpack.c.l.b16 %v3354
        %v3812 = vunpack.c.h.b16 %v3354
        %v3813 = vunpack.c.l.b16 %v3355
        %v3814 = vunpack.c.h.b16 %v3355
        %v3815 = vunpack.c.l.b16 %v3356
        %v3816 = vunpack.c.h.b16 %v3356
        %v3817 = vunpack.c.l.b16 %v3357
        %v3818 = vunpack.c.h.b16 %v3357
        %v3819 = vunpack.c.l.b16 %v3358
        %v3820 = vunpack.c.h.b16 %v3358
        %v3821 = vunpack.c.l.b16 %v3359
        %v3822 = vunpack.c.h.b16 %v3359
        %v3823 = vunpack.c.l.b16 %v3360
        %v3824 = vunpack.c.h.b16 %v3360
        %v3825 = vunpack.c.l.b16 %v3361
        %v3826 = vunpack.c.h.b16 %v3361
        %v3827 = vunpack.c.l.b16 %v3362
        %v3828 = vunpack.c.h.b16 %v3362
        %v3829 = vunpack.c.l.b16 %v3363
        %v3830 = vunpack.c.h.b16 %v3363
        %v3831 = vunpack.c.l.b16 %v3364
        %v3832 = vunpack.c.h.b16 %v3364
        %v3833 = vunpack.c.l.b16 %v3365
        %v3834 = vunpack.c.h.b16 %v3365
        %v3835 = vunpack.c.l.b16 %v3366
        %v3836 = vunpack.c.h.b16 %v3366
        %v3837 = vunpack.c.l.b16 %v3367
        %v3838 = vunpack.c.h.b16 %v3367
        %v3839 = vunpack.c.l.b16 %v3368
        %v3840 = vunpack.c.h.b16 %v3368
        %v3841 = vunpack.c.l.b16 %v3369
        %v3842 = vunpack.c.h.b16 %v3369
        %v3843 = vunpack.c.l.b16 %v3370
        %v3844 = vunpack.c.h.b16 %v3370
        %v3845 = vunpack.c.l.b16 %v3371
        %v3846 = vunpack.c.h.b16 %v3371
        %v3847 = vunpack.c.l.b16 %v3372
        %v3848 = vunpack.c.h.b16 %v3372
        %v3849 = vunpack.c.l.b16 %v3373
        %v3850 = vunpack.c.h.b16 %v3373
        %v3851 = vunpack.c.l.b16 %v3374
        %v3852 = vunpack.c.h.b16 %v3374
        %v3853 = vunpack.c.l.b16 %v3375
        %v3854 = vunpack.c.h.b16 %v3375
        %v3855 = vunpack.c.l.b16 %v3376
        %v3856 = vunpack.c.h.b16 %v3376
        %v3857 = vunpack.c.l.b16 %v3377
        %v3858 = vunpack.c.h.b16 %v3377
        %v3859 = vunpack.c.l.b16 %v3378
        %v3860 = vunpack.c.h.b16 %v3378
        %v3861 = vunpack.c.l.b16 %v3379
        %v3862 = vunpack.c.h.b16 %v3379
        %v3863 = vunpack.c.l.b16 %v3380
        %v3864 = vunpack.c.h.b16 %v3380
        %v3865 = vunpack.c.l.b16 %v3381
        %v3866 = vunpack.c.h.b16 %v3381
        %v3867 = vunpack.c.l.b16 %v3382
        %v3868 = vunpack.c.h.b16 %v3382
        %v3869 = vunpack.c.l.b16 %v3383
        %v3870 = vunpack.c.h.b16 %v3383
        %v3871 = vunpack.c.l.b16 %v3384
        %v3872 = vunpack.c.h.b16 %v3384
        %v3873 = vunpack.c.l.b16 %v3385
        %v3874 = vunpack.c.h.b16 %v3385
        %v3875 = vunpack.c.l.b16 %v3386
        %v3876 = vunpack.c.h.b16 %v3386
        %v3877 = vunpack.c.l.b16 %v3387
        %v3878 = vunpack.c.h.b16 %v3387
        %v3879 = vunpack.c.l.b16 %v3388
        %v3880 = vunpack.c.h.b16 %v3388
        %v3881 = vunpack.c.l.b16 %v3389
        %v3882 = vunpack.c.h.b16 %v3389
        %v3883 = vunpack.c.l.b16 %v3390
        %v3884 = vunpack.c.h.b16 %v3390
        %v3885 = vunpack.c.l.b16 %v3391
        %v3886 = vunpack.c.h.b16 %v3391
        %v3887 = vunpack.c.l.b16 %v3392
        %v3888 = vunpack.c.h.b16 %v3392
        %v3889 = vunpack.c.l.b16 %v3393
        %v3890 = vunpack.c.h.b16 %v3393
        %v3891 = vunpack.c.l.b16 %v3394
        %v3892 = vunpack.c.h.b16 %v3394
        %v3893 = vunpack.c.l.b16 %v3395
        %v3894 = vunpack.c.h.b16 %v3395
        %v3895 = vunpack.c.l.b16 %v3396
        %v3896 = vunpack.c.h.b16 %v3396
        %v3897 = vunpack.c.l.b16 %v3397
        %v3898 = vunpack.c.h.b16 %v3397
        %v3899 = vunpack.c.l.b16 %v3398
        %v3900 = vunpack.c.h.b16 %v3398
        %v3901 = vunpack.c.l.b16 %v3399
        %v3902 = vunpack.c.h.b16 %v3399
        %v3903 = vunpack.c.l.b16 %v3400
        %v3904 = vunpack.c.h.b16 %v3400
        %v3905 = vunpack.c.l.b16 %v3401
        %v3906 = vunpack.c.h.b16 %v3401
        %v3907 = vunpack.c.l.b16 %v3402
        %v3908 = vunpack.c.h.b16 %v3402
        %v3909 = vunpack.c.l.b16 %v3403
        %v3910 = vunpack.c.h.b16 %v3403
        %v3911 = vunpack.c.l.b16 %v3404
        %v3912 = vunpack.c.h.b16 %v3404
        %v3913 = vunpack.c.l.b16 %v3405
        %v3914 = vunpack.c.h.b16 %v3405
        %v3915 = vunpack.c.l.b16 %v3406
        %v3916 = vunpack.c.h.b16 %v3406
        %v3917 = vunpack.c.l.b16 %v3407
        %v3918 = vunpack.c.h.b16 %v3407
        %v3919 = vunpack.c.l.b16 %v3408
        %v3920 = vunpack.c.h.b16 %v3408
        %v3921 = vunpack.c.l.b16 %v3409
        %v3922 = vunpack.c.h.b16 %v3409
        %v3923 = vunpack.c.l.b16 %v3410
        %v3924 = vunpack.c.h.b16 %v3410
        %v3925 = vunpack.c.l.b16 %v3411
        %v3926 = vunpack.c.h.b16 %v3411
        %v3927 = vunpack.c.l.b16 %v3412
        %v3928 = vunpack.c.h.b16 %v3412
        %v3929 = vunpack.c.l.b16 %v3413
        %v3930 = vunpack.c.h.b16 %v3413
        %v3931 = vunpack.c.l.b16 %v3414
        %v3932 = vunpack.c.h.b16 %v3414
        %v3933 = vunpack.c.l.b16 %v3415
        %v3934 = vunpack.c.h.b16 %v3415
        %v3935 = vunpack.c.l.b16 %v3416
        %v3936 = vunpack.c.h.b16 %v3416
        %v3937 = vunpack.c.l.b16 %v3417
        %v3938 = vunpack.c.h.b16 %v3417
        %v3939 = vunpack.c.l.b16 %v3418
        %v3940 = vunpack.c.h.b16 %v3418
        %v3941 = vunpack.c.l.b16 %v3419
        %v3942 = vunpack.c.h.b16 %v3419
        %v3943 = vunpack.c.l.b16 %v3420
        %v3944 = vunpack.c.h.b16 %v3420
        %v3945 = vunpack.c.l.b16 %v3421
        %v3946 = vunpack.c.h.b16 %v3421
        %v3947 = vunpack.c.l.b16 %v3422
        %v3948 = vunpack.c.h.b16 %v3422
        %v3949 = vunpack.c.l.b16 %v3423
        %v3950 = vunpack.c.h.b16 %v3423
        %v3951 = vunpack.c.l.b16 %v3424
        %v3952 = vunpack.c.h.b16 %v3424
        %v3953 = vunpack.c.l.b16 %v3425
        %v3954 = vunpack.c.h.b16 %v3425
        %v3955 = vunpack.c.l.b16 %v3426
        %v3956 = vunpack.c.h.b16 %v3426
        %v3957 = vunpack.c.l.b16 %v3427
        %v3958 = vunpack.c.h.b16 %v3427
        %v3959 = vunpack.c.l.b16 %v3428
        %v3960 = vunpack.c.h.b16 %v3428
        %v3961 = vunpack.c.l.b16 %v3429
        %v3962 = vunpack.c.h.b16 %v3429
        %v3963 = vunpack.c.l.b16 %v3430
        %v3964 = vunpack.c.h.b16 %v3430
        %v3965 = vunpack.c.l.b16 %v3431
        %v3966 = vunpack.c.h.b16 %v3431
        %v3967 = vunpack.c.l.b16 %v3432
        %v3968 = vunpack.c.h.b16 %v3432
        %v3969 = vunpack.c.l.b16 %v3433
        %v3970 = vunpack.c.h.b16 %v3433
        %v3971 = vunpack.c.l.b16 %v3434
        %v3972 = vunpack.c.h.b16 %v3434
        %v3973 = vunpack.c.l.b16 %v3435
        %v3974 = vunpack.c.h.b16 %v3435
        %v3975 = vunpack.c.l.b16 %v3436
        %v3976 = vunpack.c.h.b16 %v3436
        %v3977 = vunpack.c.l.b16 %v3437
        %v3978 = vunpack.c.h.b16 %v3437
        %v3979 = vunpack.c.l.b16 %v3438
        %v3980 = vunpack.c.h.b16 %v3438
        %v3981 = vunpack.c.l.b16 %v3439
        %v3982 = vunpack.c.h.b16 %v3439
        %v3983 = vunpack.c.l.b16 %v3440
        %v3984 = vunpack.c.h.b16 %v3440
        %v3985 = vunpack.c.l.b16 %v3441
        %v3986 = vunpack.c.h.b16 %v3441
        %v3987 = vunpack.c.l.b16 %v3442
        %v3988 = vunpack.c.h.b16 %v3442
        %v3989 = vunpack.c.l.b16 %v3443
        %v3990 = vunpack.c.h.b16 %v3443
        %v3991 = vunpack.c.l.b16 %v3444
        %v3992 = vunpack.c.h.b16 %v3444
        %v3993 = vunpack.c.l.b16 %v3445
        %v3994 = vunpack.c.h.b16 %v3445
        %v3995 = vunpack.c.l.b16 %v3446
        %v3996 = vunpack.c.h.b16 %v3446
        %v3997 = vpack.c.b16 %v3811, %v3805
        %v3998 = vpack.c.b16 %v3812, %v3806
        %v3999 = vpack.c.b16 %v3813, %v3807
        %v4000 = vpack.c.b16 %v3814, %v3808
        %v4001 = vpack.c.b16 %v3815, %v3809
        %v4002 = vpack.c.b16 %v3816, %v3810
        %v4003 = vpack.c.b16 %v3823, %v3817
        %v4004 = vpack.c.b16 %v3824, %v3818
        %v4005 = vpack.c.b16 %v3825, %v3819
        %v4006 = vpack.c.b16 %v3826, %v3820
        %v4007 = vpack.c.b16 %v3827, %v3821
        %v4008 = vpack.c.b16 %v3828, %v3822
        %v4009 = vpack.c.b16 %v3835, %v3829
        %v4010 = vpack.c.b16 %v3836, %v3830
        %v4011 = vpack.c.b16 %v3837, %v3831
        %v4012 = vpack.c.b16 %v3838, %v3832
        %v4013 = vpack.c.b16 %v3839, %v3833
        %v4014 = vpack.c.b16 %v3840, %v3834
        %v4015 = vpack.c.b16 %v3847, %v3841
        %v4016 = vpack.c.b16 %v3848, %v3842
        %v4017 = vpack.c.b16 %v3849, %v3843
        %v4018 = vpack.c.b16 %v3850, %v3844
        %v4019 = vpack.c.b16 %v3851, %v3845
        %v4020 = vpack.c.b16 %v3852, %v3846
        %v4021 = vpack.c.b16 %v3859, %v3853
        %v4022 = vpack.c.b16 %v3860, %v3854
        %v4023 = vpack.c.b16 %v3861, %v3855
        %v4024 = vpack.c.b16 %v3862, %v3856
        %v4025 = vpack.c.b16 %v3863, %v3857
        %v4026 = vpack.c.b16 %v3864, %v3858
        %v4027 = vpack.c.b16 %v3871, %v3865
        %v4028 = vpack.c.b16 %v3872, %v3866
        %v4029 = vpack.c.b16 %v3873, %v3867
        %v4030 = vpack.c.b16 %v3874, %v3868
        %v4031 = vpack.c.b16 %v3875, %v3869
        %v4032 = vpack.c.b16 %v3876, %v3870
        %v4033 = vpack.c.b16 %v3883, %v3877
        %v4034 = vpack.c.b16 %v3884, %v3878
        %v4035 = vpack.c.b16 %v3885, %v3879
        %v4036 = vpack.c.b16 %v3886, %v3880
        %v4037 = vpack.c.b16 %v3887, %v3881
        %v4038 = vpack.c.b16 %v3888, %v3882
        %v4039 = vpack.c.b16 %v3895, %v3889
        %v4040 = vpack.c.b16 %v3896, %v3890
        %v4041 = vpack.c.b16 %v3897, %v3891
        %v4042 = vpack.c.b16 %v3898, %v3892
        %v4043 = vpack.c.b16 %v3899, %v3893
        %v4044 = vpack.c.b16 %v3900, %v3894
        %v4045 = vpack.c.b16 %v3907, %v3901
        %v4046 = vpack.c.b16 %v3908, %v3902
        %v4047 = vpack.c.b16 %v3909, %v3903
        %v4048 = vpack.c.b16 %v3910, %v3904
        %v4049 = vpack.c.b16 %v3911, %v3905
        %v4050 = vpack.c.b16 %v3912, %v3906
        %v4051 = vpack.c.b16 %v3919, %v3913
        %v4052 = vpack.c.b16 %v3920, %v3914
        %v4053 = vpack.c.b16 %v3921, %v3915
        %v4054 = vpack.c.b16 %v3922, %v3916
        %v4055 = vpack.c.b16 %v3923, %v3917
        %v4056 = vpack.c.b16 %v3924, %v3918
        %v4057 = vpack.c.b16 %v3931, %v3925
        %v4058 = vpack.c.b16 %v3932, %v3926
        %v4059 = vpack.c.b16 %v3933, %v3927
        %v4060 = vpack.c.b16 %v3934, %v3928
        %v4061 = vpack.c.b16 %v3935, %v3929
        %v4062 = vpack.c.b16 %v3936, %v3930
        %v4063 = vpack.c.b16 %v3943, %v3937
        %v4064 = vpack.c.b16 %v3944, %v3938
        %v4065 = vpack.c.b16 %v3945, %v3939
        %v4066 = vpack.c.b16 %v3946, %v3940
        %v4067 = vpack.c.b16 %v3947, %v3941
        %v4068 = vpack.c.b16 %v3948, %v3942
        %v4069 = vpack.c.b16 %v3955, %v3949
        %v4070 = vpack.c.b16 %v3956, %v3950
        %v4071 = vpack.c.b16 %v3957, %v3951
        %v4072 = vpack.c.b16 %v3958, %v3952
        %v4073 = vpack.c.b16 %v3959, %v3953
        %v4074 = vpack.c.b16 %v3960, %v3954
        %v4075 = vpack.c.b16 %v3967, %v3961
        %v4076 = vpack.c.b16 %v3968, %v3962
        %v4077 = vpack.c.b16 %v3969, %v3963
        %v4078 = vpack.c.b16 %v3970, %v3964
        %v4079 = vpack.c.b16 %v3971, %v3965
        %v4080 = vpack.c.b16 %v3972, %v3966
        %v4081 = vpack.c.b16 %v3979, %v3973
        %v4082 = vpack.c.b16 %v3980, %v3974
        %v4083 = vpack.c.b16 %v3981, %v3975
        %v4084 = vpack.c.b16 %v3982, %v3976
        %v4085 = vpack.c.b16 %v3983, %v3977
        %v4086 = vpack.c.b16 %v3984, %v3978
        %v4087 = vpack.c.b16 %v3991, %v3985
        %v4088 = vpack.c.b16 %v3992, %v3986
        %v4089 = vpack.c.b16 %v3993, %v3987
        %v4090 = vpack.c.b16 %v3994, %v3988
        %v4091 = vpack.c.b16 %v3995, %v3989
        %v4092 = vpack.c.b16 %v3996, %v3990
        %4189 = vmatprep.subr.bf16.mxu0 %v3998
        %4190 = vmatpush1.bf16.msra.mxu0 %v3997
        %4191 = vmatprep.subr.bf16.mxu0 %v4004
        %4192 = vmatpush1.bf16.msra.mxu0 %v4003
        %4193 = vmatprep.subr.bf16.mxu0 %v4010
        %4194 = vmatpush1.bf16.msra.mxu0 %v4009
        %4195 = vmatprep.subr.bf16.mxu0 %v4016
        %4196 = vmatpush1.bf16.msra.mxu0 %v4015
        %4197 = vmatprep.subr.bf16.mxu0 %v4022
        %4198 = vmatpush1.bf16.msra.mxu0 %v4021
        %4199 = vmatprep.subr.bf16.mxu0 %v4028
        %4200 = vmatpush1.bf16.msra.mxu0 %v4027
        %4201 = vmatprep.subr.bf16.mxu0 %v4034
        %4202 = vmatpush1.bf16.msra.mxu0 %v4033
        %4203 = vmatprep.subr.bf16.mxu0 %v4040
        %4204 = vmatpush1.bf16.msra.mxu0 %v4039
        %4205 = vmatprep.subr.bf16.mxu0 %v4046
        %4206 = vmatpush1.bf16.msra.mxu0 %v4045
        %4207 = vmatprep.subr.bf16.mxu0 %v4052
        %4208 = vmatpush1.bf16.msra.mxu0 %v4051
        %4209 = vmatprep.subr.bf16.mxu0 %v4058
        %4210 = vmatpush1.bf16.msra.mxu0 %v4057
        %4211 = vmatprep.subr.bf16.mxu0 %v4064
        %4212 = vmatpush1.bf16.msra.mxu0 %v4063
        %4213 = vmatprep.subr.bf16.mxu0 %v4070
        %4214 = vmatpush1.bf16.msra.mxu0 %v4069
        %4215 = vmatprep.subr.bf16.mxu0 %v4076
        %4216 = vmatpush1.bf16.msra.mxu0 %v4075
        %4217 = vmatprep.subr.bf16.mxu0 %v4082
        %4218 = vmatpush1.bf16.msra.mxu0 %v4081
        %4219 = vmatprep.subr.bf16.mxu0 %v4088
        %4220 = vmatpush1.bf16.msra.mxu0 %v4087
        %4221 = vmatprep.mubr.bf16.mxu0 %v3708
        %4222 = vmatmul.mubr.bf16.gmra.mrb[0].mxu0 %v3707
        %v4223 = vpop.f32.mrb[0].mxu0
        %v4224 = vadd.f32 0.0, %v4223
        %v4225 = vpop.f32.mrb[0].mxu0
        %v4226 = vadd.f32 0.0, %v4225
        %v4227 = vpop.f32.mrb[0].mxu0
        %v4228 = vadd.f32 0.0, %v4227
        %v4229 = vpop.f32.mrb[0].mxu0
        %v4230 = vadd.f32 0.0, %v4229
        %4231 = vdwg.mxu0
        %4232 = vmatprep.subr.bf16.mxu0 %v4000
        %4233 = vmatpush1.bf16.msra.mxu0 %v3999
        %4234 = vmatprep.subr.bf16.mxu0 %v4006
        %4235 = vmatpush1.bf16.msra.mxu0 %v4005
        %4236 = vmatprep.subr.bf16.mxu0 %v4012
        %4237 = vmatpush1.bf16.msra.mxu0 %v4011
        %4238 = vmatprep.subr.bf16.mxu0 %v4018
        %4239 = vmatpush1.bf16.msra.mxu0 %v4017
        %4240 = vmatprep.subr.bf16.mxu0 %v4024
        %4241 = vmatpush1.bf16.msra.mxu0 %v4023
        %4242 = vmatprep.subr.bf16.mxu0 %v4030
        %4243 = vmatpush1.bf16.msra.mxu0 %v4029
        %4244 = vmatprep.subr.bf16.mxu0 %v4036
        %4245 = vmatpush1.bf16.msra.mxu0 %v4035
        %4246 = vmatprep.subr.bf16.mxu0 %v4042
        %4247 = vmatpush1.bf16.msra.mxu0 %v4041
        %4248 = vmatprep.subr.bf16.mxu0 %v4048
        %4249 = vmatpush1.bf16.msra.mxu0 %v4047
        %4250 = vmatprep.subr.bf16.mxu0 %v4054
        %4251 = vmatpush1.bf16.msra.mxu0 %v4053
        %4252 = vmatprep.subr.bf16.mxu0 %v4060
        %4253 = vmatpush1.bf16.msra.mxu0 %v4059
        %4254 = vmatprep.subr.bf16.mxu0 %v4066
        %4255 = vmatpush1.bf16.msra.mxu0 %v4065
        %4256 = vmatprep.subr.bf16.mxu0 %v4072
        %4257 = vmatpush1.bf16.msra.mxu0 %v4071
        %4258 = vmatprep.subr.bf16.mxu0 %v4078
        %4259 = vmatpush1.bf16.msra.mxu0 %v4077
        %4260 = vmatprep.subr.bf16.mxu0 %v4084
        %4261 = vmatpush1.bf16.msra.mxu0 %v4083
        %4262 = vmatprep.subr.bf16.mxu0 %v4090
        %4263 = vmatpush1.bf16.msra.mxu0 %v4089
        %4264 = vmatprep.mubr.bf16.mxu0 %v3708
        %4265 = vmatmul.mubr.bf16.gmra.mrb[0].mxu0 %v3707
        %v4266 = vpop.f32.mrb[0].mxu0
        %v4267 = vadd.f32 0.0, %v4266
        %v4268 = vpop.f32.mrb[0].mxu0
        %v4269 = vadd.f32 0.0, %v4268
        %v4270 = vpop.f32.mrb[0].mxu0
        %v4271 = vadd.f32 0.0, %v4270
        %v4272 = vpop.f32.mrb[0].mxu0
        %v4273 = vadd.f32 0.0, %v4272
        %4274 = vdwg.mxu0
        %4275 = vmatprep.subr.bf16.mxu0 %v4002
        %4276 = vmatpush1.bf16.msra.mxu0 %v4001
        %4277 = vmatprep.subr.bf16.mxu0 %v4008
        %4278 = vmatpush1.bf16.msra.mxu0 %v4007
        %4279 = vmatprep.subr.bf16.mxu0 %v4014
        %4280 = vmatpush1.bf16.msra.mxu0 %v4013
        %4281 = vmatprep.subr.bf16.mxu0 %v4020
        %4282 = vmatpush1.bf16.msra.mxu0 %v4019
        %4283 = vmatprep.subr.bf16.mxu0 %v4026
        %4284 = vmatpush1.bf16.msra.mxu0 %v4025
        %4285 = vmatprep.subr.bf16.mxu0 %v4032
        %4286 = vmatpush1.bf16.msra.mxu0 %v4031
        %4287 = vmatprep.subr.bf16.mxu0 %v4038
        %4288 = vmatpush1.bf16.msra.mxu0 %v4037
        %4289 = vmatprep.subr.bf16.mxu0 %v4044
        %4290 = vmatpush1.bf16.msra.mxu0 %v4043
        %4291 = vmatprep.subr.bf16.mxu0 %v4050
        %4292 = vmatpush1.bf16.msra.mxu0 %v4049
        %4293 = vmatprep.subr.bf16.mxu0 %v4056
        %4294 = vmatpush1.bf16.msra.mxu0 %v4055
        %4295 = vmatprep.subr.bf16.mxu0 %v4062
        %4296 = vmatpush1.bf16.msra.mxu0 %v4061
        %4297 = vmatprep.subr.bf16.mxu0 %v4068
        %4298 = vmatpush1.bf16.msra.mxu0 %v4067
        %4299 = vmatprep.subr.bf16.mxu0 %v4074
        %4300 = vmatpush1.bf16.msra.mxu0 %v4073
        %4301 = vmatprep.subr.bf16.mxu0 %v4080
        %4302 = vmatpush1.bf16.msra.mxu0 %v4079
        %4303 = vmatprep.subr.bf16.mxu0 %v4086
        %4304 = vmatpush1.bf16.msra.mxu0 %v4085
        %4305 = vmatprep.subr.bf16.mxu0 %v4092
        %4306 = vmatpush1.bf16.msra.mxu0 %v4091
        %4307 = vmatprep.mubr.bf16.mxu0 %v3708
        %4308 = vmatmul.mubr.bf16.gmra.mrb[0].mxu0 %v3707
        %v4309 = vpop.f32.mrb[0].mxu0
        %v4310 = vadd.f32 0.0, %v4309
        %v4311 = vpop.f32.mrb[0].mxu0
        %v4312 = vadd.f32 0.0, %v4311
        %v4313 = vpop.f32.mrb[0].mxu0
        %v4314 = vadd.f32 0.0, %v4313
        %v4315 = vpop.f32.mrb[0].mxu0
        %v4316 = vadd.f32 0.0, %v4315
        %4317 = vdwg.mxu0
        %v4318 = vmul.f32 %v4224, %v433
        %v4319 = vmul.f32 %v4228, %v434
        %4320 = vrot.lane.b32.xlu0 %v4224, 64
        %v4321 = vpop.permute.xlu0 %4320
        %4322 = vrot.lane.b32.xlu0 %v4228, 64
        %v4323 = vpop.permute.xlu0 %4322
        %v4324 = vmul.f32 %v4321, %v435
        %v4325 = vmul.f32 %v4323, %v436
        %v4326 = vadd.f32 %v4318, %v4324
        %v4327 = vadd.f32 %v4319, %v4325
        %v4328 = vmul.f32 %v4267, %v433
        %v4329 = vmul.f32 %v4271, %v434
        %4330 = vrot.lane.b32.xlu0 %v4267, 64
        %v4331 = vpop.permute.xlu0 %4330
        %4332 = vrot.lane.b32.xlu0 %v4271, 64
        %v4333 = vpop.permute.xlu0 %4332
        %v4334 = vmul.f32 %v4331, %v435
        %v4335 = vmul.f32 %v4333, %v436
        %v4336 = vadd.f32 %v4328, %v4334
        %v4337 = vadd.f32 %v4329, %v4335
        %4338 = vmatprep.subr.mxu0 0.0
        %4339 = vmatpush1.xpose.msra.mxu0 %v4336
        %4340 = vmatprep.subr.mxu0 0.0
        %4341 = vmatpush1.xpose.msra.mxu0 %v4337
        %4342 = vmatprep.subr.mxu0 0.0
        %4343 = vmatpush1.xpose.msra.mxu0 0.0
        %4344 = vmatprep.subr.mxu0 0.0
        %4345 = vmatpush1.xpose.msra.mxu0 0.0
        %4346 = vmatprep.subr.mxu0 0.0
        %4347 = vmatpush1.xpose.msra.mxu0 0.0
        %4348 = vmatprep.subr.mxu0 0.0
        %4349 = vmatpush1.xpose.msra.mxu0 0.0
        %4350 = vmatprep.subr.mxu0 0.0
        %4351 = vmatpush1.xpose.msra.mxu0 0.0
        %4352 = vmatprep.subr.mxu0 0.0
        %4353 = vmatpush1.xpose.msra.mxu0 0.0
        %4354 = vmatprep.subr.mxu0 0.0
        %4355 = vmatpush1.xpose.msra.mxu0 0.0
        %4356 = vmatprep.subr.mxu0 0.0
        %4357 = vmatpush1.xpose.msra.mxu0 0.0
        %4358 = vmatprep.subr.mxu0 0.0
        %4359 = vmatpush1.xpose.msra.mxu0 0.0
        %4360 = vmatprep.subr.mxu0 0.0
        %4361 = vmatpush1.xpose.msra.mxu0 0.0
        %4362 = vmatprep.subr.mxu0 0.0
        %4363 = vmatpush1.xpose.msra.mxu0 0.0
        %4364 = vmatprep.subr.mxu0 0.0
        %4365 = vmatpush1.xpose.msra.mxu0 0.0
        %4366 = vmatprep.subr.mxu0 0.0
        %4367 = vmatpush1.xpose.msra.mxu0 0.0
        %4368 = vmatprep.subr.mxu0 0.0
        %4369 = vmatpush1.xpose.msra.mxu0 0.0
        %4370 = vmatprep.subr.mxu0 0.0
        %4371 = vmatpush1.xpose.msra.mxu0 0.0
        %4372 = vmatprep.subr.mxu0 0.0
        %4373 = vmatpush1.xpose.msra.mxu0 0.0
        %4374 = vmatprep.subr.mxu0 0.0
        %4375 = vmatpush1.xpose.msra.mxu0 0.0
        %4376 = vmatprep.subr.mxu0 0.0
        %4377 = vmatpush1.xpose.msra.mxu0 0.0
        %4378 = vmatprep.subr.mxu0 0.0
        %4379 = vmatpush1.xpose.msra.mxu0 0.0
        %4380 = vmatprep.subr.mxu0 0.0
        %4381 = vmatpush1.xpose.msra.mxu0 0.0
        %4382 = vmatprep.subr.mxu0 0.0
        %4383 = vmatpush1.xpose.msra.mxu0 0.0
        %4384 = vmatprep.subr.mxu0 0.0
        %4385 = vmatpush1.xpose.msra.mxu0 0.0
        %4386 = vmatprep.subr.mxu0 0.0
        %4387 = vmatpush1.xpose.msra.mxu0 0.0
        %4388 = vmatprep.subr.mxu0 0.0
        %4389 = vmatpush1.xpose.msra.mxu0 0.0
        %4390 = vmatprep.subr.mxu0 0.0
        %4391 = vmatpush1.xpose.msra.mxu0 0.0
        %4392 = vmatprep.subr.mxu0 0.0
        %4393 = vmatpush1.xpose.msra.mxu0 0.0
        %4394 = vmatprep.subr.mxu0 0.0
        %4395 = vmatpush1.xpose.msra.mxu0 0.0
        %4396 = vmatprep.subr.mxu0 0.0
        %4397 = vmatpush1.xpose.msra.mxu0 0.0
        %4398 = vmatprep.subr.mxu0 0.0
        %4399 = vmatpush1.xpose.msra.mxu0 0.0
        %4400 = vmatprep.subr.mxu0 0.0
        %4401 = vmatpush1.xpose.msra.mxu0 0.0
        %4402 = vmatprep.mubr.f32.mxu0 0.0
        %4403 = vmatmul.mubr.f32.gmra.mrb[0].mxu0 %v4326
        %v4404 = vpop.f32.mrb[0].mxu0
        %v4405 = vadd.f32 %v437, %v4404
        %v4406 = vpop.f32.mrb[0].mxu0
        %4407 = vmatprep.mubr.f32.mxu0 0.0
        %4408 = vmatmul.mubr.f32.gmra.mrb[0].mxu0 %v4327
        %v4409 = vpop.f32.mrb[0].mxu0
        %v4410 = vadd.f32 %v438, %v4409
        %v4411 = vpop.f32.mrb[0].mxu0
        %4412 = vdwg.mxu0
        %v4413 = vsel %vm1508, %v4405, -inf
        %4414 = vmax.xlane.f32.xlu0 %v4413
        %v4415 = vpop.xlane.xlu0 %4414
        %v4416 = vsel %vm1508, %v4410, -inf
        %4417 = vmax.xlane.f32.xlu0 %v4416
        %v4418 = vpop.xlane.xlu0 %4417
        %v4419 = vsub.f32 %v4405, %v4415
        %v4420 = vsub.f32 %v4410, %v4418
        %v4421 = vmul.f32 %v4419, 1.442695
        %v4422 = vpow.pop %v4421
        %v4423 = vmul.f32 %v4420, 1.442695
        %v4424 = vpow.pop %v4423
        %v4425 = vsel %vm1508, %v4422, 0.0
        %4426 = vadd.xlane.f32.xlu0 %v4425
        %v4427 = vpop.xlane.xlu0 %4426
        %v4428 = vsel %vm1508, %v4424, 0.0
        %4429 = vadd.xlane.f32.xlu0 %v4428
        %v4430 = vpop.xlane.xlu0 %4429
        %v4431 = vrcp.pop %v4427
        %v4432 = vrcp.pop %v4430
        %v4433 = vmul.f32 %v4422, %v4431
        %v4434 = vmul.f32 %v4424, %v4432
        %v4436 = vsel %vm1508, %v4433, 0
        %v4439 = vsel %vm1508, %v4434, 0
        %4441 = vmatprep.subr.mxu0 0.0
        %4442 = vmatpush1.msra.mxu0 %v4310
        %4443 = vmatprep.subr.mxu0 0.0
        %4444 = vmatpush1.msra.mxu0 %v4314
        %4445 = vmatprep.subr.mxu0 0.0
        %4446 = vmatpush1.msra.mxu0 0.0
        %4447 = vmatprep.subr.mxu0 0.0
        %4448 = vmatpush1.msra.mxu0 0.0
        %4449 = vmatprep.subr.mxu0 0.0
        %4450 = vmatpush1.msra.mxu0 0.0
        %4451 = vmatprep.subr.mxu0 0.0
        %4452 = vmatpush1.msra.mxu0 0.0
        %4453 = vmatprep.subr.mxu0 0.0
        %4454 = vmatpush1.msra.mxu0 0.0
        %4455 = vmatprep.subr.mxu0 0.0
        %4456 = vmatpush1.msra.mxu0 0.0
        %4457 = vmatprep.subr.mxu0 0.0
        %4458 = vmatpush1.msra.mxu0 0.0
        %4459 = vmatprep.subr.mxu0 0.0
        %4460 = vmatpush1.msra.mxu0 0.0
        %4461 = vmatprep.subr.mxu0 0.0
        %4462 = vmatpush1.msra.mxu0 0.0
        %4463 = vmatprep.subr.mxu0 0.0
        %4464 = vmatpush1.msra.mxu0 0.0
        %4465 = vmatprep.subr.mxu0 0.0
        %4466 = vmatpush1.msra.mxu0 0.0
        %4467 = vmatprep.subr.mxu0 0.0
        %4468 = vmatpush1.msra.mxu0 0.0
        %4469 = vmatprep.subr.mxu0 0.0
        %4470 = vmatpush1.msra.mxu0 0.0
        %4471 = vmatprep.subr.mxu0 0.0
        %4472 = vmatpush1.msra.mxu0 0.0
        %4473 = vmatprep.subr.mxu0 0.0
        %4474 = vmatpush1.msra.mxu0 0.0
        %4475 = vmatprep.subr.mxu0 0.0
        %4476 = vmatpush1.msra.mxu0 0.0
        %4477 = vmatprep.subr.mxu0 0.0
        %4478 = vmatpush1.msra.mxu0 0.0
        %4479 = vmatprep.subr.mxu0 0.0
        %4480 = vmatpush1.msra.mxu0 0.0
        %4481 = vmatprep.subr.mxu0 0.0
        %4482 = vmatpush1.msra.mxu0 0.0
        %4483 = vmatprep.subr.mxu0 0.0
        %4484 = vmatpush1.msra.mxu0 0.0
        %4485 = vmatprep.subr.mxu0 0.0
        %4486 = vmatpush1.msra.mxu0 0.0
        %4487 = vmatprep.subr.mxu0 0.0
        %4488 = vmatpush1.msra.mxu0 0.0
        %4489 = vmatprep.subr.mxu0 0.0
        %4490 = vmatpush1.msra.mxu0 0.0
        %4491 = vmatprep.subr.mxu0 0.0
        %4492 = vmatpush1.msra.mxu0 0.0
        %4493 = vmatprep.subr.mxu0 0.0
        %4494 = vmatpush1.msra.mxu0 0.0
        %4495 = vmatprep.subr.mxu0 0.0
        %4496 = vmatpush1.msra.mxu0 0.0
        %4497 = vmatprep.subr.mxu0 0.0
        %4498 = vmatpush1.msra.mxu0 0.0
        %4499 = vmatprep.subr.mxu0 0.0
        %4500 = vmatpush1.msra.mxu0 0.0
        %4501 = vmatprep.subr.mxu0 0.0
        %4502 = vmatpush1.msra.mxu0 0.0
        %4503 = vmatprep.subr.mxu0 0.0
        %4504 = vmatpush1.msra.mxu0 0.0
        %4505 = vmatprep.mubr.f32.mxu0 0.0
        %4506 = vmatmul.mubr.f32.gmra.mrb[0].mxu0 %v4436
        %v4507 = vpop.f32.mrb[0].mxu0
        %v4508 = vadd.f32 0.0, %v4507
        %v4509 = vpop.f32.mrb[0].mxu0
        %4510 = vmatprep.mubr.f32.mxu0 0.0
        %4511 = vmatmul.mubr.f32.gmra.mrb[0].mxu0 %v4439
        %v4512 = vpop.f32.mrb[0].mxu0
        %v4513 = vadd.f32 0.0, %v4512
        %v4514 = vpop.f32.mrb[0].mxu0
        %4515 = vdwg.mxu0
        %v4516 = vmul.f32 %v4226, %v433
        %v4517 = vmul.f32 %v4230, %v434
        %4518 = vrot.lane.b32.xlu0 %v4226, 64
        %v4519 = vpop.permute.xlu0 %4518
        %4520 = vrot.lane.b32.xlu0 %v4230, 64
        %v4521 = vpop.permute.xlu0 %4520
        %v4522 = vmul.f32 %v4519, %v435
        %v4523 = vmul.f32 %v4521, %v436
        %v4524 = vadd.f32 %v4516, %v4522
        %v4525 = vadd.f32 %v4517, %v4523
        %v4526 = vmul.f32 %v4269, %v433
        %v4527 = vmul.f32 %v4273, %v434
        %4528 = vrot.lane.b32.xlu0 %v4269, 64
        %v4529 = vpop.permute.xlu0 %4528
        %4530 = vrot.lane.b32.xlu0 %v4273, 64
        %v4531 = vpop.permute.xlu0 %4530
        %v4532 = vmul.f32 %v4529, %v435
        %v4533 = vmul.f32 %v4531, %v436
        %v4534 = vadd.f32 %v4526, %v4532
        %v4535 = vadd.f32 %v4527, %v4533
        %4536 = vmatprep.subr.mxu0 0.0
        %4537 = vmatpush1.xpose.msra.mxu0 %v4534
        %4538 = vmatprep.subr.mxu0 0.0
        %4539 = vmatpush1.xpose.msra.mxu0 %v4535
        %4540 = vmatprep.subr.mxu0 0.0
        %4541 = vmatpush1.xpose.msra.mxu0 0.0
        %4542 = vmatprep.subr.mxu0 0.0
        %4543 = vmatpush1.xpose.msra.mxu0 0.0
        %4544 = vmatprep.subr.mxu0 0.0
        %4545 = vmatpush1.xpose.msra.mxu0 0.0
        %4546 = vmatprep.subr.mxu0 0.0
        %4547 = vmatpush1.xpose.msra.mxu0 0.0
        %4548 = vmatprep.subr.mxu0 0.0
        %4549 = vmatpush1.xpose.msra.mxu0 0.0
        %4550 = vmatprep.subr.mxu0 0.0
        %4551 = vmatpush1.xpose.msra.mxu0 0.0
        %4552 = vmatprep.subr.mxu0 0.0
        %4553 = vmatpush1.xpose.msra.mxu0 0.0
        %4554 = vmatprep.subr.mxu0 0.0
        %4555 = vmatpush1.xpose.msra.mxu0 0.0
        %4556 = vmatprep.subr.mxu0 0.0
        %4557 = vmatpush1.xpose.msra.mxu0 0.0
        %4558 = vmatprep.subr.mxu0 0.0
        %4559 = vmatpush1.xpose.msra.mxu0 0.0
        %4560 = vmatprep.subr.mxu0 0.0
        %4561 = vmatpush1.xpose.msra.mxu0 0.0
        %4562 = vmatprep.subr.mxu0 0.0
        %4563 = vmatpush1.xpose.msra.mxu0 0.0
        %4564 = vmatprep.subr.mxu0 0.0
        %4565 = vmatpush1.xpose.msra.mxu0 0.0
        %4566 = vmatprep.subr.mxu0 0.0
        %4567 = vmatpush1.xpose.msra.mxu0 0.0
        %4568 = vmatprep.subr.mxu0 0.0
        %4569 = vmatpush1.xpose.msra.mxu0 0.0
        %4570 = vmatprep.subr.mxu0 0.0
        %4571 = vmatpush1.xpose.msra.mxu0 0.0
        %4572 = vmatprep.subr.mxu0 0.0
        %4573 = vmatpush1.xpose.msra.mxu0 0.0
        %4574 = vmatprep.subr.mxu0 0.0
        %4575 = vmatpush1.xpose.msra.mxu0 0.0
        %4576 = vmatprep.subr.mxu0 0.0
        %4577 = vmatpush1.xpose.msra.mxu0 0.0
        %4578 = vmatprep.subr.mxu0 0.0
        %4579 = vmatpush1.xpose.msra.mxu0 0.0
        %4580 = vmatprep.subr.mxu0 0.0
        %4581 = vmatpush1.xpose.msra.mxu0 0.0
        %4582 = vmatprep.subr.mxu0 0.0
        %4583 = vmatpush1.xpose.msra.mxu0 0.0
        %4584 = vmatprep.subr.mxu0 0.0
        %4585 = vmatpush1.xpose.msra.mxu0 0.0
        %4586 = vmatprep.subr.mxu0 0.0
        %4587 = vmatpush1.xpose.msra.mxu0 0.0
        %4588 = vmatprep.subr.mxu0 0.0
        %4589 = vmatpush1.xpose.msra.mxu0 0.0
        %4590 = vmatprep.subr.mxu0 0.0
        %4591 = vmatpush1.xpose.msra.mxu0 0.0
        %4592 = vmatprep.subr.mxu0 0.0
        %4593 = vmatpush1.xpose.msra.mxu0 0.0
        %4594 = vmatprep.subr.mxu0 0.0
        %4595 = vmatpush1.xpose.msra.mxu0 0.0
        %4596 = vmatprep.subr.mxu0 0.0
        %4597 = vmatpush1.xpose.msra.mxu0 0.0
        %4598 = vmatprep.subr.mxu0 0.0
        %4599 = vmatpush1.xpose.msra.mxu0 0.0
        %4600 = vmatprep.mubr.f32.mxu0 0.0
        %4601 = vmatmul.mubr.f32.gmra.mrb[0].mxu0 %v4524
        %v4602 = vpop.f32.mrb[0].mxu0
        %v4603 = vadd.f32 %v437, %v4602
        %v4604 = vpop.f32.mrb[0].mxu0
        %4605 = vmatprep.mubr.f32.mxu0 0.0
        %4606 = vmatmul.mubr.f32.gmra.mrb[0].mxu0 %v4525
        %v4607 = vpop.f32.mrb[0].mxu0
        %v4608 = vadd.f32 %v438, %v4607
        %v4609 = vpop.f32.mrb[0].mxu0
        %4610 = vdwg.mxu0
        %v4611 = vsel %vm1508, %v4603, -inf
        %4612 = vmax.xlane.f32.xlu0 %v4611
        %v4613 = vpop.xlane.xlu0 %4612
        %v4614 = vsel %vm1508, %v4608, -inf
        %4615 = vmax.xlane.f32.xlu0 %v4614
        %v4616 = vpop.xlane.xlu0 %4615
        %v4617 = vsub.f32 %v4603, %v4613
        %v4618 = vsub.f32 %v4608, %v4616
        %v4619 = vmul.f32 %v4617, 1.442695
        %v4620 = vpow.pop %v4619
        %v4621 = vmul.f32 %v4618, 1.442695
        %v4622 = vpow.pop %v4621
        %v4623 = vsel %vm1508, %v4620, 0.0
        %4624 = vadd.xlane.f32.xlu0 %v4623
        %v4625 = vpop.xlane.xlu0 %4624
        %v4626 = vsel %vm1508, %v4622, 0.0
        %4627 = vadd.xlane.f32.xlu0 %v4626
        %v4628 = vpop.xlane.xlu0 %4627
        %v4629 = vrcp.pop %v4625
        %v4630 = vrcp.pop %v4628
        %v4631 = vmul.f32 %v4620, %v4629
        %v4632 = vmul.f32 %v4622, %v4630
        %v4634 = vsel %vm1508, %v4631, 0
        %v4637 = vsel %vm1508, %v4632, 0
        %4639 = vmatprep.subr.mxu0 0.0
        %4640 = vmatpush1.msra.mxu0 %v4312
        %4641 = vmatprep.subr.mxu0 0.0
        %4642 = vmatpush1.msra.mxu0 %v4316
        %4643 = vmatprep.subr.mxu0 0.0
        %4644 = vmatpush1.msra.mxu0 0.0
        %4645 = vmatprep.subr.mxu0 0.0
        %4646 = vmatpush1.msra.mxu0 0.0
        %4647 = vmatprep.subr.mxu0 0.0
        %4648 = vmatpush1.msra.mxu0 0.0
        %4649 = vmatprep.subr.mxu0 0.0
        %4650 = vmatpush1.msra.mxu0 0.0
        %4651 = vmatprep.subr.mxu0 0.0
        %4652 = vmatpush1.msra.mxu0 0.0
        %4653 = vmatprep.subr.mxu0 0.0
        %4654 = vmatpush1.msra.mxu0 0.0
        %4655 = vmatprep.subr.mxu0 0.0
        %4656 = vmatpush1.msra.mxu0 0.0
        %4657 = vmatprep.subr.mxu0 0.0
        %4658 = vmatpush1.msra.mxu0 0.0
        %4659 = vmatprep.subr.mxu0 0.0
        %4660 = vmatpush1.msra.mxu0 0.0
        %4661 = vmatprep.subr.mxu0 0.0
        %4662 = vmatpush1.msra.mxu0 0.0
        %4663 = vmatprep.subr.mxu0 0.0
        %4664 = vmatpush1.msra.mxu0 0.0
        %4665 = vmatprep.subr.mxu0 0.0
        %4666 = vmatpush1.msra.mxu0 0.0
        %4667 = vmatprep.subr.mxu0 0.0
        %4668 = vmatpush1.msra.mxu0 0.0
        %4669 = vmatprep.subr.mxu0 0.0
        %4670 = vmatpush1.msra.mxu0 0.0
        %4671 = vmatprep.subr.mxu0 0.0
        %4672 = vmatpush1.msra.mxu0 0.0
        %4673 = vmatprep.subr.mxu0 0.0
        %4674 = vmatpush1.msra.mxu0 0.0
        %4675 = vmatprep.subr.mxu0 0.0
        %4676 = vmatpush1.msra.mxu0 0.0
        %4677 = vmatprep.subr.mxu0 0.0
        %4678 = vmatpush1.msra.mxu0 0.0
        %4679 = vmatprep.subr.mxu0 0.0
        %4680 = vmatpush1.msra.mxu0 0.0
        %4681 = vmatprep.subr.mxu0 0.0
        %4682 = vmatpush1.msra.mxu0 0.0
        %4683 = vmatprep.subr.mxu0 0.0
        %4684 = vmatpush1.msra.mxu0 0.0
        %4685 = vmatprep.subr.mxu0 0.0
        %4686 = vmatpush1.msra.mxu0 0.0
        %4687 = vmatprep.subr.mxu0 0.0
        %4688 = vmatpush1.msra.mxu0 0.0
        %4689 = vmatprep.subr.mxu0 0.0
        %4690 = vmatpush1.msra.mxu0 0.0
        %4691 = vmatprep.subr.mxu0 0.0
        %4692 = vmatpush1.msra.mxu0 0.0
        %4693 = vmatprep.subr.mxu0 0.0
        %4694 = vmatpush1.msra.mxu0 0.0
        %4695 = vmatprep.subr.mxu0 0.0
        %4696 = vmatpush1.msra.mxu0 0.0
        %4697 = vmatprep.subr.mxu0 0.0
        %4698 = vmatpush1.msra.mxu0 0.0
        %4699 = vmatprep.subr.mxu0 0.0
        %4700 = vmatpush1.msra.mxu0 0.0
        %4701 = vmatprep.subr.mxu0 0.0
        %4702 = vmatpush1.msra.mxu0 0.0
        %4703 = vmatprep.mubr.f32.mxu0 0.0
        %4704 = vmatmul.mubr.f32.gmra.mrb[0].mxu0 %v4634
        %v4705 = vpop.f32.mrb[0].mxu0
        %v4706 = vadd.f32 0.0, %v4705
        %v4707 = vpop.f32.mrb[0].mxu0
        %4708 = vmatprep.mubr.f32.mxu0 0.0
        %4709 = vmatmul.mubr.f32.gmra.mrb[0].mxu0 %v4637
        %v4710 = vpop.f32.mrb[0].mxu0
        %v4711 = vadd.f32 0.0, %v4710
        %v4712 = vpop.f32.mrb[0].mxu0
        %4713 = vdwg.mxu0
        %v4714 = vpack.c.bf16 %v4513, %v4508
        %v4715 = vpack.c.bf16 %v4711, %v4706
        %v4748 = vunpack.c.l.b16 %v3447
        %v4749 = vunpack.c.h.b16 %v3447
        %v4750 = vunpack.c.l.b16 %v3448
        %v4751 = vunpack.c.h.b16 %v3448
        %v4752 = vunpack.c.l.b16 %v3449
        %v4753 = vunpack.c.h.b16 %v3449
        %v4754 = vunpack.c.l.b16 %v3450
        %v4755 = vunpack.c.h.b16 %v3450
        %v4756 = vunpack.c.l.b16 %v3451
        %v4757 = vunpack.c.h.b16 %v3451
        %v4758 = vunpack.c.l.b16 %v3452
        %v4759 = vunpack.c.h.b16 %v3452
        %v4760 = vunpack.c.l.b16 %v3453
        %v4761 = vunpack.c.h.b16 %v3453
        %v4762 = vunpack.c.l.b16 %v3454
        %v4763 = vunpack.c.h.b16 %v3454
        %v4764 = vunpack.c.l.b16 %v3455
        %v4765 = vunpack.c.h.b16 %v3455
        %v4766 = vunpack.c.l.b16 %v3456
        %v4767 = vunpack.c.h.b16 %v3456
        %v4768 = vunpack.c.l.b16 %v3457
        %v4769 = vunpack.c.h.b16 %v3457
        %v4770 = vunpack.c.l.b16 %v3458
        %v4771 = vunpack.c.h.b16 %v3458
        %v4772 = vunpack.c.l.b16 %v3459
        %v4773 = vunpack.c.h.b16 %v3459
        %v4774 = vunpack.c.l.b16 %v3460
        %v4775 = vunpack.c.h.b16 %v3460
        %v4776 = vunpack.c.l.b16 %v3461
        %v4777 = vunpack.c.h.b16 %v3461
        %v4778 = vunpack.c.l.b16 %v3462
        %v4779 = vunpack.c.h.b16 %v3462
        %v4780 = vunpack.c.l.b16 %v3463
        %v4781 = vunpack.c.h.b16 %v3463
        %v4782 = vunpack.c.l.b16 %v3464
        %v4783 = vunpack.c.h.b16 %v3464
        %v4784 = vunpack.c.l.b16 %v3465
        %v4785 = vunpack.c.h.b16 %v3465
        %v4786 = vunpack.c.l.b16 %v3466
        %v4787 = vunpack.c.h.b16 %v3466
        %v4788 = vunpack.c.l.b16 %v3467
        %v4789 = vunpack.c.h.b16 %v3467
        %v4790 = vunpack.c.l.b16 %v3468
        %v4791 = vunpack.c.h.b16 %v3468
        %v4792 = vunpack.c.l.b16 %v3469
        %v4793 = vunpack.c.h.b16 %v3469
        %v4794 = vunpack.c.l.b16 %v3470
        %v4795 = vunpack.c.h.b16 %v3470
        %v4796 = vunpack.c.l.b16 %v3471
        %v4797 = vunpack.c.h.b16 %v3471
        %v4798 = vunpack.c.l.b16 %v3472
        %v4799 = vunpack.c.h.b16 %v3472
        %v4800 = vunpack.c.l.b16 %v3473
        %v4801 = vunpack.c.h.b16 %v3473
        %v4802 = vunpack.c.l.b16 %v3474
        %v4803 = vunpack.c.h.b16 %v3474
        %v4804 = vunpack.c.l.b16 %v3475
        %v4805 = vunpack.c.h.b16 %v3475
        %v4806 = vunpack.c.l.b16 %v3476
        %v4807 = vunpack.c.h.b16 %v3476
        %v4808 = vunpack.c.l.b16 %v3477
        %v4809 = vunpack.c.h.b16 %v3477
        %v4810 = vunpack.c.l.b16 %v3478
        %v4811 = vunpack.c.h.b16 %v3478
        %v4812 = vpack.c.b16 %v4750, %v4748
        %v4813 = vpack.c.b16 %v4751, %v4749
        %v4814 = vpack.c.b16 %v4754, %v4752
        %v4815 = vpack.c.b16 %v4755, %v4753
        %v4816 = vpack.c.b16 %v4758, %v4756
        %v4817 = vpack.c.b16 %v4759, %v4757
        %v4818 = vpack.c.b16 %v4762, %v4760
        %v4819 = vpack.c.b16 %v4763, %v4761
        %v4820 = vpack.c.b16 %v4766, %v4764
        %v4821 = vpack.c.b16 %v4767, %v4765
        %v4822 = vpack.c.b16 %v4770, %v4768
        %v4823 = vpack.c.b16 %v4771, %v4769
        %v4824 = vpack.c.b16 %v4774, %v4772
        %v4825 = vpack.c.b16 %v4775, %v4773
        %v4826 = vpack.c.b16 %v4778, %v4776
        %v4827 = vpack.c.b16 %v4779, %v4777
        %v4828 = vpack.c.b16 %v4782, %v4780
        %v4829 = vpack.c.b16 %v4783, %v4781
        %v4830 = vpack.c.b16 %v4786, %v4784
        %v4831 = vpack.c.b16 %v4787, %v4785
        %v4832 = vpack.c.b16 %v4790, %v4788
        %v4833 = vpack.c.b16 %v4791, %v4789
        %v4834 = vpack.c.b16 %v4794, %v4792
        %v4835 = vpack.c.b16 %v4795, %v4793
        %v4836 = vpack.c.b16 %v4798, %v4796
        %v4837 = vpack.c.b16 %v4799, %v4797
        %v4838 = vpack.c.b16 %v4802, %v4800
        %v4839 = vpack.c.b16 %v4803, %v4801
        %v4840 = vpack.c.b16 %v4806, %v4804
        %v4841 = vpack.c.b16 %v4807, %v4805
        %v4842 = vpack.c.b16 %v4810, %v4808
        %v4843 = vpack.c.b16 %v4811, %v4809
        %4876 = vmatprep.subr.bf16.mxu0 %v4813
        %4877 = vmatpush1.bf16.msra.mxu0 %v4812
        %4878 = vmatprep.subr.bf16.mxu0 %v4815
        %4879 = vmatpush1.bf16.msra.mxu0 %v4814
        %4880 = vmatprep.subr.bf16.mxu0 %v4817
        %4881 = vmatpush1.bf16.msra.mxu0 %v4816
        %4882 = vmatprep.subr.bf16.mxu0 %v4819
        %4883 = vmatpush1.bf16.msra.mxu0 %v4818
        %4884 = vmatprep.subr.bf16.mxu0 %v4821
        %4885 = vmatpush1.bf16.msra.mxu0 %v4820
        %4886 = vmatprep.subr.bf16.mxu0 %v4823
        %4887 = vmatpush1.bf16.msra.mxu0 %v4822
        %4888 = vmatprep.subr.bf16.mxu0 %v4825
        %4889 = vmatpush1.bf16.msra.mxu0 %v4824
        %4890 = vmatprep.subr.bf16.mxu0 %v4827
        %4891 = vmatpush1.bf16.msra.mxu0 %v4826
        %4892 = vmatprep.subr.bf16.mxu0 %v4829
        %4893 = vmatpush1.bf16.msra.mxu0 %v4828
        %4894 = vmatprep.subr.bf16.mxu0 %v4831
        %4895 = vmatpush1.bf16.msra.mxu0 %v4830
        %4896 = vmatprep.subr.bf16.mxu0 %v4833
        %4897 = vmatpush1.bf16.msra.mxu0 %v4832
        %4898 = vmatprep.subr.bf16.mxu0 %v4835
        %4899 = vmatpush1.bf16.msra.mxu0 %v4834
        %4900 = vmatprep.subr.bf16.mxu0 %v4837
        %4901 = vmatpush1.bf16.msra.mxu0 %v4836
        %4902 = vmatprep.subr.bf16.mxu0 %v4839
        %4903 = vmatpush1.bf16.msra.mxu0 %v4838
        %4904 = vmatprep.subr.bf16.mxu0 %v4841
        %4905 = vmatpush1.bf16.msra.mxu0 %v4840
        %4906 = vmatprep.subr.bf16.mxu0 %v4843
        %4907 = vmatpush1.bf16.msra.mxu0 %v4842
        %4908 = vmatprep.mubr.bf16.mxu0 %v4715
        %4909 = vmatmul.mubr.bf16.gmra.mrb[0].mxu0 %v4714
        %v4910 = vpop.f32.mrb[0].mxu0
        %v4911 = vadd.f32 0.0, %v4910
        %v4912 = vpop.f32.mrb[0].mxu0
        %v4913 = vadd.f32 0.0, %v4912
        %v4914 = vpop.f32.mrb[0].mxu0
        %v4915 = vadd.f32 0.0, %v4914
        %v4916 = vpop.f32.mrb[0].mxu0
        %v4917 = vadd.f32 0.0, %v4916
        %4918 = vdwg.mxu0
        %v4919 = vadd.f32 %v3342, %v4911
        %v4920 = vadd.f32 %v3343, %v4913
        %v4921 = vadd.f32 %v3344, %v4915
        %v4922 = vadd.f32 %v3345, %v4917
        %v4923 = vmul.f32 %v4919, %v4919
        %v4924 = vmul.f32 %v4920, %v4920
        %v4925 = vmul.f32 %v4921, %v4921
        %v4926 = vmul.f32 %v4922, %v4922
        %v4927 = vadd.f32 %v4923, %v4924
        %4928 = vadd.xlane.f32.xlu0 %v4927
        %v4929 = vpop.xlane.xlu0 %4928
        %v4930 = vadd.f32 %v4925, %v4926
        %4931 = vadd.xlane.f32.xlu0 %v4930
        %v4932 = vpop.xlane.xlu0 %4931
        %v4933 = vmul.f32 %v4929, %v776
        %v4934 = vmul.f32 %v4932, %v776
        %v4935 = vadd.f32 %v4933, 1e-06
        %v4936 = vadd.f32 %v4934, 1e-06
        %v4937 = vrsqrt.pop %v4935
        %v4938 = vrsqrt.pop %v4936
        %v4939 = vmul.f32 %v4919, %v4937
        %v4940 = vmul.f32 %v4920, %v4937
        %v4941 = vmul.f32 %v4921, %v4938
        %v4942 = vmul.f32 %v4922, %v4938
        %v4944 = vlaneseq
        %v4945 = vshrl.u32 %v4944, 7
        %v4946 = vsub.s32 0, %v4945
        %v4947 = vrot.slane %v3349, %v4946
        %v4948 = vlaneseq
        %v4949 = vshrl.u32 %v4948, 7
        %v4950 = vsub.s32 1, %v4949
        %v4951 = vrot.slane %v3349, %v4950
        %v4954 = vmul.f32 %v4939, %v4947
        %v4955 = vmul.f32 %v4940, %v4951
        %v4956 = vmul.f32 %v4941, %v4947
        %v4957 = vmul.f32 %v4942, %v4951
        %v4958 = vpack.c.bf16 %v4956, %v4954
        %v4959 = vpack.c.bf16 %v4957, %v4955
        %v5088 = vunpack.c.l.b16 %v3479
        %v5089 = vunpack.c.h.b16 %v3479
        %v5090 = vunpack.c.l.b16 %v3480
        %v5091 = vunpack.c.h.b16 %v3480
        %v5092 = vunpack.c.l.b16 %v3481
        %v5093 = vunpack.c.h.b16 %v3481
        %v5094 = vunpack.c.l.b16 %v3482
        %v5095 = vunpack.c.h.b16 %v3482
        %v5096 = vunpack.c.l.b16 %v3483
        %v5097 = vunpack.c.h.b16 %v3483
        %v5098 = vunpack.c.l.b16 %v3484
        %v5099 = vunpack.c.h.b16 %v3484
        %v5100 = vunpack.c.l.b16 %v3485
        %v5101 = vunpack.c.h.b16 %v3485
        %v5102 = vunpack.c.l.b16 %v3486
        %v5103 = vunpack.c.h.b16 %v3486
        %v5104 = vunpack.c.l.b16 %v3487
        %v5105 = vunpack.c.h.b16 %v3487
        %v5106 = vunpack.c.l.b16 %v3488
        %v5107 = vunpack.c.h.b16 %v3488
        %v5108 = vunpack.c.l.b16 %v3489
        %v5109 = vunpack.c.h.b16 %v3489
        %v5110 = vunpack.c.l.b16 %v3490
        %v5111 = vunpack.c.h.b16 %v3490
        %v5112 = vunpack.c.l.b16 %v3491
        %v5113 = vunpack.c.h.b16 %v3491
        %v5114 = vunpack.c.l.b16 %v3492
        %v5115 = vunpack.c.h.b16 %v3492
        %v5116 = vunpack.c.l.b16 %v3493
        %v5117 = vunpack.c.h.b16 %v3493
        %v5118 = vunpack.c.l.b16 %v3494
        %v5119 = vunpack.c.h.b16 %v3494
        %v5120 = vunpack.c.l.b16 %v3495
        %v5121 = vunpack.c.h.b16 %v3495
        %v5122 = vunpack.c.l.b16 %v3496
        %v5123 = vunpack.c.h.b16 %v3496
        %v5124 = vunpack.c.l.b16 %v3497
        %v5125 = vunpack.c.h.b16 %v3497
        %v5126 = vunpack.c.l.b16 %v3498
        %v5127 = vunpack.c.h.b16 %v3498
        %v5128 = vunpack.c.l.b16 %v3499
        %v5129 = vunpack.c.h.b16 %v3499
        %v5130 = vunpack.c.l.b16 %v3500
        %v5131 = vunpack.c.h.b16 %v3500
        %v5132 = vunpack.c.l.b16 %v3501
        %v5133 = vunpack.c.h.b16 %v3501
        %v5134 = vunpack.c.l.b16 %v3502
        %v5135 = vunpack.c.h.b16 %v3502
        %v5136 = vunpack.c.l.b16 %v3503
        %v5137 = vunpack.c.h.b16 %v3503
        %v5138 = vunpack.c.l.b16 %v3504
        %v5139 = vunpack.c.h.b16 %v3504
        %v5140 = vunpack.c.l.b16 %v3505
        %v5141 = vunpack.c.h.b16 %v3505
        %v5142 = vunpack.c.l.b16 %v3506
        %v5143 = vunpack.c.h.b16 %v3506
        %v5144 = vunpack.c.l.b16 %v3507
        %v5145 = vunpack.c.h.b16 %v3507
        %v5146 = vunpack.c.l.b16 %v3508
        %v5147 = vunpack.c.h.b16 %v3508
        %v5148 = vunpack.c.l.b16 %v3509
        %v5149 = vunpack.c.h.b16 %v3509
        %v5150 = vunpack.c.l.b16 %v3510
        %v5151 = vunpack.c.h.b16 %v3510
        %v5152 = vunpack.c.l.b16 %v3511
        %v5153 = vunpack.c.h.b16 %v3511
        %v5154 = vunpack.c.l.b16 %v3512
        %v5155 = vunpack.c.h.b16 %v3512
        %v5156 = vunpack.c.l.b16 %v3513
        %v5157 = vunpack.c.h.b16 %v3513
        %v5158 = vunpack.c.l.b16 %v3514
        %v5159 = vunpack.c.h.b16 %v3514
        %v5160 = vunpack.c.l.b16 %v3515
        %v5161 = vunpack.c.h.b16 %v3515
        %v5162 = vunpack.c.l.b16 %v3516
        %v5163 = vunpack.c.h.b16 %v3516
        %v5164 = vunpack.c.l.b16 %v3517
        %v5165 = vunpack.c.h.b16 %v3517
        %v5166 = vunpack.c.l.b16 %v3518
        %v5167 = vunpack.c.h.b16 %v3518
        %v5168 = vunpack.c.l.b16 %v3519
        %v5169 = vunpack.c.h.b16 %v3519
        %v5170 = vunpack.c.l.b16 %v3520
        %v5171 = vunpack.c.h.b16 %v3520
        %v5172 = vunpack.c.l.b16 %v3521
        %v5173 = vunpack.c.h.b16 %v3521
        %v5174 = vunpack.c.l.b16 %v3522
        %v5175 = vunpack.c.h.b16 %v3522
        %v5176 = vunpack.c.l.b16 %v3523
        %v5177 = vunpack.c.h.b16 %v3523
        %v5178 = vunpack.c.l.b16 %v3524
        %v5179 = vunpack.c.h.b16 %v3524
        %v5180 = vunpack.c.l.b16 %v3525
        %v5181 = vunpack.c.h.b16 %v3525
        %v5182 = vunpack.c.l.b16 %v3526
        %v5183 = vunpack.c.h.b16 %v3526
        %v5184 = vunpack.c.l.b16 %v3527
        %v5185 = vunpack.c.h.b16 %v3527
        %v5186 = vunpack.c.l.b16 %v3528
        %v5187 = vunpack.c.h.b16 %v3528
        %v5188 = vunpack.c.l.b16 %v3529
        %v5189 = vunpack.c.h.b16 %v3529
        %v5190 = vunpack.c.l.b16 %v3530
        %v5191 = vunpack.c.h.b16 %v3530
        %v5192 = vunpack.c.l.b16 %v3531
        %v5193 = vunpack.c.h.b16 %v3531
        %v5194 = vunpack.c.l.b16 %v3532
        %v5195 = vunpack.c.h.b16 %v3532
        %v5196 = vunpack.c.l.b16 %v3533
        %v5197 = vunpack.c.h.b16 %v3533
        %v5198 = vunpack.c.l.b16 %v3534
        %v5199 = vunpack.c.h.b16 %v3534
        %v5200 = vunpack.c.l.b16 %v3535
        %v5201 = vunpack.c.h.b16 %v3535
        %v5202 = vunpack.c.l.b16 %v3536
        %v5203 = vunpack.c.h.b16 %v3536
        %v5204 = vunpack.c.l.b16 %v3537
        %v5205 = vunpack.c.h.b16 %v3537
        %v5206 = vunpack.c.l.b16 %v3538
        %v5207 = vunpack.c.h.b16 %v3538
        %v5208 = vunpack.c.l.b16 %v3539
        %v5209 = vunpack.c.h.b16 %v3539
        %v5210 = vunpack.c.l.b16 %v3540
        %v5211 = vunpack.c.h.b16 %v3540
        %v5212 = vunpack.c.l.b16 %v3541
        %v5213 = vunpack.c.h.b16 %v3541
        %v5214 = vunpack.c.l.b16 %v3542
        %v5215 = vunpack.c.h.b16 %v3542
        %v5216 = vunpack.c.l.b16 %v3543
        %v5217 = vunpack.c.h.b16 %v3543
        %v5218 = vunpack.c.l.b16 %v3544
        %v5219 = vunpack.c.h.b16 %v3544
        %v5220 = vunpack.c.l.b16 %v3545
        %v5221 = vunpack.c.h.b16 %v3545
        %v5222 = vunpack.c.l.b16 %v3546
        %v5223 = vunpack.c.h.b16 %v3546
        %v5224 = vunpack.c.l.b16 %v3547
        %v5225 = vunpack.c.h.b16 %v3547
        %v5226 = vunpack.c.l.b16 %v3548
        %v5227 = vunpack.c.h.b16 %v3548
        %v5228 = vunpack.c.l.b16 %v3549
        %v5229 = vunpack.c.h.b16 %v3549
        %v5230 = vunpack.c.l.b16 %v3550
        %v5231 = vunpack.c.h.b16 %v3550
        %v5232 = vunpack.c.l.b16 %v3551
        %v5233 = vunpack.c.h.b16 %v3551
        %v5234 = vunpack.c.l.b16 %v3552
        %v5235 = vunpack.c.h.b16 %v3552
        %v5236 = vunpack.c.l.b16 %v3553
        %v5237 = vunpack.c.h.b16 %v3553
        %v5238 = vunpack.c.l.b16 %v3554
        %v5239 = vunpack.c.h.b16 %v3554
        %v5240 = vunpack.c.l.b16 %v3555
        %v5241 = vunpack.c.h.b16 %v3555
        %v5242 = vunpack.c.l.b16 %v3556
        %v5243 = vunpack.c.h.b16 %v3556
        %v5244 = vunpack.c.l.b16 %v3557
        %v5245 = vunpack.c.h.b16 %v3557
        %v5246 = vunpack.c.l.b16 %v3558
        %v5247 = vunpack.c.h.b16 %v3558
        %v5248 = vunpack.c.l.b16 %v3559
        %v5249 = vunpack.c.h.b16 %v3559
        %v5250 = vunpack.c.l.b16 %v3560
        %v5251 = vunpack.c.h.b16 %v3560
        %v5252 = vunpack.c.l.b16 %v3561
        %v5253 = vunpack.c.h.b16 %v3561
        %v5254 = vunpack.c.l.b16 %v3562
        %v5255 = vunpack.c.h.b16 %v3562
        %v5256 = vunpack.c.l.b16 %v3563
        %v5257 = vunpack.c.h.b16 %v3563
        %v5258 = vunpack.c.l.b16 %v3564
        %v5259 = vunpack.c.h.b16 %v3564
        %v5260 = vunpack.c.l.b16 %v3565
        %v5261 = vunpack.c.h.b16 %v3565
        %v5262 = vunpack.c.l.b16 %v3566
        %v5263 = vunpack.c.h.b16 %v3566
        %v5264 = vunpack.c.l.b16 %v3567
        %v5265 = vunpack.c.h.b16 %v3567
        %v5266 = vunpack.c.l.b16 %v3568
        %v5267 = vunpack.c.h.b16 %v3568
        %v5268 = vunpack.c.l.b16 %v3569
        %v5269 = vunpack.c.h.b16 %v3569
        %v5270 = vunpack.c.l.b16 %v3570
        %v5271 = vunpack.c.h.b16 %v3570
        %v5272 = vunpack.c.l.b16 %v3571
        %v5273 = vunpack.c.h.b16 %v3571
        %v5274 = vunpack.c.l.b16 %v3572
        %v5275 = vunpack.c.h.b16 %v3572
        %v5276 = vunpack.c.l.b16 %v3573
        %v5277 = vunpack.c.h.b16 %v3573
        %v5278 = vunpack.c.l.b16 %v3574
        %v5279 = vunpack.c.h.b16 %v3574
        %v5280 = vunpack.c.l.b16 %v3575
        %v5281 = vunpack.c.h.b16 %v3575
        %v5282 = vunpack.c.l.b16 %v3576
        %v5283 = vunpack.c.h.b16 %v3576
        %v5284 = vunpack.c.l.b16 %v3577
        %v5285 = vunpack.c.h.b16 %v3577
        %v5286 = vunpack.c.l.b16 %v3578
        %v5287 = vunpack.c.h.b16 %v3578
        %v5288 = vunpack.c.l.b16 %v3579
        %v5289 = vunpack.c.h.b16 %v3579
        %v5290 = vunpack.c.l.b16 %v3580
        %v5291 = vunpack.c.h.b16 %v3580
        %v5292 = vunpack.c.l.b16 %v3581
        %v5293 = vunpack.c.h.b16 %v3581
        %v5294 = vunpack.c.l.b16 %v3582
        %v5295 = vunpack.c.h.b16 %v3582
        %v5296 = vunpack.c.l.b16 %v3583
        %v5297 = vunpack.c.h.b16 %v3583
        %v5298 = vunpack.c.l.b16 %v3584
        %v5299 = vunpack.c.h.b16 %v3584
        %v5300 = vunpack.c.l.b16 %v3585
        %v5301 = vunpack.c.h.b16 %v3585
        %v5302 = vunpack.c.l.b16 %v3586
        %v5303 = vunpack.c.h.b16 %v3586
        %v5304 = vunpack.c.l.b16 %v3587
        %v5305 = vunpack.c.h.b16 %v3587
        %v5306 = vunpack.c.l.b16 %v3588
        %v5307 = vunpack.c.h.b16 %v3588
        %v5308 = vunpack.c.l.b16 %v3589
        %v5309 = vunpack.c.h.b16 %v3589
        %v5310 = vunpack.c.l.b16 %v3590
        %v5311 = vunpack.c.h.b16 %v3590
        %v5312 = vunpack.c.l.b16 %v3591
        %v5313 = vunpack.c.h.b16 %v3591
        %v5314 = vunpack.c.l.b16 %v3592
        %v5315 = vunpack.c.h.b16 %v3592
        %v5316 = vunpack.c.l.b16 %v3593
        %v5317 = vunpack.c.h.b16 %v3593
        %v5318 = vunpack.c.l.b16 %v3594
        %v5319 = vunpack.c.h.b16 %v3594
        %v5320 = vunpack.c.l.b16 %v3595
        %v5321 = vunpack.c.h.b16 %v3595
        %v5322 = vunpack.c.l.b16 %v3596
        %v5323 = vunpack.c.h.b16 %v3596
        %v5324 = vunpack.c.l.b16 %v3597
        %v5325 = vunpack.c.h.b16 %v3597
        %v5326 = vunpack.c.l.b16 %v3598
        %v5327 = vunpack.c.h.b16 %v3598
        %v5328 = vunpack.c.l.b16 %v3599
        %v5329 = vunpack.c.h.b16 %v3599
        %v5330 = vunpack.c.l.b16 %v3600
        %v5331 = vunpack.c.h.b16 %v3600
        %v5332 = vunpack.c.l.b16 %v3601
        %v5333 = vunpack.c.h.b16 %v3601
        %v5334 = vunpack.c.l.b16 %v3602
        %v5335 = vunpack.c.h.b16 %v3602
        %v5336 = vunpack.c.l.b16 %v3603
        %v5337 = vunpack.c.h.b16 %v3603
        %v5338 = vunpack.c.l.b16 %v3604
        %v5339 = vunpack.c.h.b16 %v3604
        %v5340 = vunpack.c.l.b16 %v3605
        %v5341 = vunpack.c.h.b16 %v3605
        %v5342 = vunpack.c.l.b16 %v3606
        %v5343 = vunpack.c.h.b16 %v3606
        %v5344 = vpack.c.b16 %v5096, %v5088
        %v5345 = vpack.c.b16 %v5097, %v5089
        %v5346 = vpack.c.b16 %v5098, %v5090
        %v5347 = vpack.c.b16 %v5099, %v5091
        %v5348 = vpack.c.b16 %v5100, %v5092
        %v5349 = vpack.c.b16 %v5101, %v5093
        %v5350 = vpack.c.b16 %v5102, %v5094
        %v5351 = vpack.c.b16 %v5103, %v5095
        %v5352 = vpack.c.b16 %v5112, %v5104
        %v5353 = vpack.c.b16 %v5113, %v5105
        %v5354 = vpack.c.b16 %v5114, %v5106
        %v5355 = vpack.c.b16 %v5115, %v5107
        %v5356 = vpack.c.b16 %v5116, %v5108
        %v5357 = vpack.c.b16 %v5117, %v5109
        %v5358 = vpack.c.b16 %v5118, %v5110
        %v5359 = vpack.c.b16 %v5119, %v5111
        %v5360 = vpack.c.b16 %v5128, %v5120
        %v5361 = vpack.c.b16 %v5129, %v5121
        %v5362 = vpack.c.b16 %v5130, %v5122
        %v5363 = vpack.c.b16 %v5131, %v5123
        %v5364 = vpack.c.b16 %v5132, %v5124
        %v5365 = vpack.c.b16 %v5133, %v5125
        %v5366 = vpack.c.b16 %v5134, %v5126
        %v5367 = vpack.c.b16 %v5135, %v5127
        %v5368 = vpack.c.b16 %v5144, %v5136
        %v5369 = vpack.c.b16 %v5145, %v5137
        %v5370 = vpack.c.b16 %v5146, %v5138
        %v5371 = vpack.c.b16 %v5147, %v5139
        %v5372 = vpack.c.b16 %v5148, %v5140
        %v5373 = vpack.c.b16 %v5149, %v5141
        %v5374 = vpack.c.b16 %v5150, %v5142
        %v5375 = vpack.c.b16 %v5151, %v5143
        %v5376 = vpack.c.b16 %v5160, %v5152
        %v5377 = vpack.c.b16 %v5161, %v5153
        %v5378 = vpack.c.b16 %v5162, %v5154
        %v5379 = vpack.c.b16 %v5163, %v5155
        %v5380 = vpack.c.b16 %v5164, %v5156
        %v5381 = vpack.c.b16 %v5165, %v5157
        %v5382 = vpack.c.b16 %v5166, %v5158
        %v5383 = vpack.c.b16 %v5167, %v5159
        %v5384 = vpack.c.b16 %v5176, %v5168
        %v5385 = vpack.c.b16 %v5177, %v5169
        %v5386 = vpack.c.b16 %v5178, %v5170
        %v5387 = vpack.c.b16 %v5179, %v5171
        %v5388 = vpack.c.b16 %v5180, %v5172
        %v5389 = vpack.c.b16 %v5181, %v5173
        %v5390 = vpack.c.b16 %v5182, %v5174
        %v5391 = vpack.c.b16 %v5183, %v5175
        %v5392 = vpack.c.b16 %v5192, %v5184
        %v5393 = vpack.c.b16 %v5193, %v5185
        %v5394 = vpack.c.b16 %v5194, %v5186
        %v5395 = vpack.c.b16 %v5195, %v5187
        %v5396 = vpack.c.b16 %v5196, %v5188
        %v5397 = vpack.c.b16 %v5197, %v5189
        %v5398 = vpack.c.b16 %v5198, %v5190
        %v5399 = vpack.c.b16 %v5199, %v5191
        %v5400 = vpack.c.b16 %v5208, %v5200
        %v5401 = vpack.c.b16 %v5209, %v5201
        %v5402 = vpack.c.b16 %v5210, %v5202
        %v5403 = vpack.c.b16 %v5211, %v5203
        %v5404 = vpack.c.b16 %v5212, %v5204
        %v5405 = vpack.c.b16 %v5213, %v5205
        %v5406 = vpack.c.b16 %v5214, %v5206
        %v5407 = vpack.c.b16 %v5215, %v5207
        %v5408 = vpack.c.b16 %v5224, %v5216
        %v5409 = vpack.c.b16 %v5225, %v5217
        %v5410 = vpack.c.b16 %v5226, %v5218
        %v5411 = vpack.c.b16 %v5227, %v5219
        %v5412 = vpack.c.b16 %v5228, %v5220
        %v5413 = vpack.c.b16 %v5229, %v5221
        %v5414 = vpack.c.b16 %v5230, %v5222
        %v5415 = vpack.c.b16 %v5231, %v5223
        %v5416 = vpack.c.b16 %v5240, %v5232
        %v5417 = vpack.c.b16 %v5241, %v5233
        %v5418 = vpack.c.b16 %v5242, %v5234
        %v5419 = vpack.c.b16 %v5243, %v5235
        %v5420 = vpack.c.b16 %v5244, %v5236
        %v5421 = vpack.c.b16 %v5245, %v5237
        %v5422 = vpack.c.b16 %v5246, %v5238
        %v5423 = vpack.c.b16 %v5247, %v5239
        %v5424 = vpack.c.b16 %v5256, %v5248
        %v5425 = vpack.c.b16 %v5257, %v5249
        %v5426 = vpack.c.b16 %v5258, %v5250
        %v5427 = vpack.c.b16 %v5259, %v5251
        %v5428 = vpack.c.b16 %v5260, %v5252
        %v5429 = vpack.c.b16 %v5261, %v5253
        %v5430 = vpack.c.b16 %v5262, %v5254
        %v5431 = vpack.c.b16 %v5263, %v5255
        %v5432 = vpack.c.b16 %v5272, %v5264
        %v5433 = vpack.c.b16 %v5273, %v5265
        %v5434 = vpack.c.b16 %v5274, %v5266
        %v5435 = vpack.c.b16 %v5275, %v5267
        %v5436 = vpack.c.b16 %v5276, %v5268
        %v5437 = vpack.c.b16 %v5277, %v5269
        %v5438 = vpack.c.b16 %v5278, %v5270
        %v5439 = vpack.c.b16 %v5279, %v5271
        %v5440 = vpack.c.b16 %v5288, %v5280
        %v5441 = vpack.c.b16 %v5289, %v5281
        %v5442 = vpack.c.b16 %v5290, %v5282
        %v5443 = vpack.c.b16 %v5291, %v5283
        %v5444 = vpack.c.b16 %v5292, %v5284
        %v5445 = vpack.c.b16 %v5293, %v5285
        %v5446 = vpack.c.b16 %v5294, %v5286
        %v5447 = vpack.c.b16 %v5295, %v5287
        %v5448 = vpack.c.b16 %v5304, %v5296
        %v5449 = vpack.c.b16 %v5305, %v5297
        %v5450 = vpack.c.b16 %v5306, %v5298
        %v5451 = vpack.c.b16 %v5307, %v5299
        %v5452 = vpack.c.b16 %v5308, %v5300
        %v5453 = vpack.c.b16 %v5309, %v5301
        %v5454 = vpack.c.b16 %v5310, %v5302
        %v5455 = vpack.c.b16 %v5311, %v5303
        %v5456 = vpack.c.b16 %v5320, %v5312
        %v5457 = vpack.c.b16 %v5321, %v5313
        %v5458 = vpack.c.b16 %v5322, %v5314
        %v5459 = vpack.c.b16 %v5323, %v5315
        %v5460 = vpack.c.b16 %v5324, %v5316
        %v5461 = vpack.c.b16 %v5325, %v5317
        %v5462 = vpack.c.b16 %v5326, %v5318
        %v5463 = vpack.c.b16 %v5327, %v5319
        %v5464 = vpack.c.b16 %v5336, %v5328
        %v5465 = vpack.c.b16 %v5337, %v5329
        %v5466 = vpack.c.b16 %v5338, %v5330
        %v5467 = vpack.c.b16 %v5339, %v5331
        %v5468 = vpack.c.b16 %v5340, %v5332
        %v5469 = vpack.c.b16 %v5341, %v5333
        %v5470 = vpack.c.b16 %v5342, %v5334
        %v5471 = vpack.c.b16 %v5343, %v5335
        %5600 = vmatprep.subr.bf16.mxu0 %v5345
        %5601 = vmatpush1.bf16.msra.mxu0 %v5344
        %5602 = vmatprep.subr.bf16.mxu0 %v5353
        %5603 = vmatpush1.bf16.msra.mxu0 %v5352
        %5604 = vmatprep.subr.bf16.mxu0 %v5361
        %5605 = vmatpush1.bf16.msra.mxu0 %v5360
        %5606 = vmatprep.subr.bf16.mxu0 %v5369
        %5607 = vmatpush1.bf16.msra.mxu0 %v5368
        %5608 = vmatprep.subr.bf16.mxu0 %v5377
        %5609 = vmatpush1.bf16.msra.mxu0 %v5376
        %5610 = vmatprep.subr.bf16.mxu0 %v5385
        %5611 = vmatpush1.bf16.msra.mxu0 %v5384
        %5612 = vmatprep.subr.bf16.mxu0 %v5393
        %5613 = vmatpush1.bf16.msra.mxu0 %v5392
        %5614 = vmatprep.subr.bf16.mxu0 %v5401
        %5615 = vmatpush1.bf16.msra.mxu0 %v5400
        %5616 = vmatprep.subr.bf16.mxu0 %v5409
        %5617 = vmatpush1.bf16.msra.mxu0 %v5408
        %5618 = vmatprep.subr.bf16.mxu0 %v5417
        %5619 = vmatpush1.bf16.msra.mxu0 %v5416
        %5620 = vmatprep.subr.bf16.mxu0 %v5425
        %5621 = vmatpush1.bf16.msra.mxu0 %v5424
        %5622 = vmatprep.subr.bf16.mxu0 %v5433
        %5623 = vmatpush1.bf16.msra.mxu0 %v5432
        %5624 = vmatprep.subr.bf16.mxu0 %v5441
        %5625 = vmatpush1.bf16.msra.mxu0 %v5440
        %5626 = vmatprep.subr.bf16.mxu0 %v5449
        %5627 = vmatpush1.bf16.msra.mxu0 %v5448
        %5628 = vmatprep.subr.bf16.mxu0 %v5457
        %5629 = vmatpush1.bf16.msra.mxu0 %v5456
        %5630 = vmatprep.subr.bf16.mxu0 %v5465
        %5631 = vmatpush1.bf16.msra.mxu0 %v5464
        %5632 = vmatprep.mubr.bf16.mxu0 %v4959
        %5633 = vmatmul.mubr.bf16.gmra.mrb[0].mxu0 %v4958
        %v5634 = vpop.f32.mrb[0].mxu0
        %v5635 = vadd.f32 0.0, %v5634
        %v5636 = vpop.f32.mrb[0].mxu0
        %v5637 = vadd.f32 0.0, %v5636
        %v5638 = vpop.f32.mrb[0].mxu0
        %v5639 = vadd.f32 0.0, %v5638
        %v5640 = vpop.f32.mrb[0].mxu0
        %v5641 = vadd.f32 0.0, %v5640
        %5642 = vdwg.mxu0
        %5643 = vmatprep.subr.bf16.mxu0 %v5347
        %5644 = vmatpush1.bf16.msra.mxu0 %v5346
        %5645 = vmatprep.subr.bf16.mxu0 %v5355
        %5646 = vmatpush1.bf16.msra.mxu0 %v5354
        %5647 = vmatprep.subr.bf16.mxu0 %v5363
        %5648 = vmatpush1.bf16.msra.mxu0 %v5362
        %5649 = vmatprep.subr.bf16.mxu0 %v5371
        %5650 = vmatpush1.bf16.msra.mxu0 %v5370
        %5651 = vmatprep.subr.bf16.mxu0 %v5379
        %5652 = vmatpush1.bf16.msra.mxu0 %v5378
        %5653 = vmatprep.subr.bf16.mxu0 %v5387
        %5654 = vmatpush1.bf16.msra.mxu0 %v5386
        %5655 = vmatprep.subr.bf16.mxu0 %v5395
        %5656 = vmatpush1.bf16.msra.mxu0 %v5394
        %5657 = vmatprep.subr.bf16.mxu0 %v5403
        %5658 = vmatpush1.bf16.msra.mxu0 %v5402
        %5659 = vmatprep.subr.bf16.mxu0 %v5411
        %5660 = vmatpush1.bf16.msra.mxu0 %v5410
        %5661 = vmatprep.subr.bf16.mxu0 %v5419
        %5662 = vmatpush1.bf16.msra.mxu0 %v5418
        %5663 = vmatprep.subr.bf16.mxu0 %v5427
        %5664 = vmatpush1.bf16.msra.mxu0 %v5426
        %5665 = vmatprep.subr.bf16.mxu0 %v5435
        %5666 = vmatpush1.bf16.msra.mxu0 %v5434
        %5667 = vmatprep.subr.bf16.mxu0 %v5443
        %5668 = vmatpush1.bf16.msra.mxu0 %v5442
        %5669 = vmatprep.subr.bf16.mxu0 %v5451
        %5670 = vmatpush1.bf16.msra.mxu0 %v5450
        %5671 = vmatprep.subr.bf16.mxu0 %v5459
        %5672 = vmatpush1.bf16.msra.mxu0 %v5458
        %5673 = vmatprep.subr.bf16.mxu0 %v5467
        %5674 = vmatpush1.bf16.msra.mxu0 %v5466
        %5675 = vmatprep.mubr.bf16.mxu0 %v4959
        %5676 = vmatmul.mubr.bf16.gmra.mrb[0].mxu0 %v4958
        %v5677 = vpop.f32.mrb[0].mxu0
        %v5678 = vadd.f32 0.0, %v5677
        %v5679 = vpop.f32.mrb[0].mxu0
        %v5680 = vadd.f32 0.0, %v5679
        %v5681 = vpop.f32.mrb[0].mxu0
        %v5682 = vadd.f32 0.0, %v5681
        %v5683 = vpop.f32.mrb[0].mxu0
        %v5684 = vadd.f32 0.0, %v5683
        %5685 = vdwg.mxu0
        %5686 = vmatprep.subr.bf16.mxu0 %v5349
        %5687 = vmatpush1.bf16.msra.mxu0 %v5348
        %5688 = vmatprep.subr.bf16.mxu0 %v5357
        %5689 = vmatpush1.bf16.msra.mxu0 %v5356
        %5690 = vmatprep.subr.bf16.mxu0 %v5365
        %5691 = vmatpush1.bf16.msra.mxu0 %v5364
        %5692 = vmatprep.subr.bf16.mxu0 %v5373
        %5693 = vmatpush1.bf16.msra.mxu0 %v5372
        %5694 = vmatprep.subr.bf16.mxu0 %v5381
        %5695 = vmatpush1.bf16.msra.mxu0 %v5380
        %5696 = vmatprep.subr.bf16.mxu0 %v5389
        %5697 = vmatpush1.bf16.msra.mxu0 %v5388
        %5698 = vmatprep.subr.bf16.mxu0 %v5397
        %5699 = vmatpush1.bf16.msra.mxu0 %v5396
        %5700 = vmatprep.subr.bf16.mxu0 %v5405
        %5701 = vmatpush1.bf16.msra.mxu0 %v5404
        %5702 = vmatprep.subr.bf16.mxu0 %v5413
        %5703 = vmatpush1.bf16.msra.mxu0 %v5412
        %5704 = vmatprep.subr.bf16.mxu0 %v5421
        %5705 = vmatpush1.bf16.msra.mxu0 %v5420
        %5706 = vmatprep.subr.bf16.mxu0 %v5429
        %5707 = vmatpush1.bf16.msra.mxu0 %v5428
        %5708 = vmatprep.subr.bf16.mxu0 %v5437
        %5709 = vmatpush1.bf16.msra.mxu0 %v5436
        %5710 = vmatprep.subr.bf16.mxu0 %v5445
        %5711 = vmatpush1.bf16.msra.mxu0 %v5444
        %5712 = vmatprep.subr.bf16.mxu0 %v5453
        %5713 = vmatpush1.bf16.msra.mxu0 %v5452
        %5714 = vmatprep.subr.bf16.mxu0 %v5461
        %5715 = vmatpush1.bf16.msra.mxu0 %v5460
        %5716 = vmatprep.subr.bf16.mxu0 %v5469
        %5717 = vmatpush1.bf16.msra.mxu0 %v5468
        %5718 = vmatprep.mubr.bf16.mxu0 %v4959
        %5719 = vmatmul.mubr.bf16.gmra.mrb[0].mxu0 %v4958
        %v5720 = vpop.f32.mrb[0].mxu0
        %v5721 = vadd.f32 0.0, %v5720
        %v5722 = vpop.f32.mrb[0].mxu0
        %v5723 = vadd.f32 0.0, %v5722
        %v5724 = vpop.f32.mrb[0].mxu0
        %v5725 = vadd.f32 0.0, %v5724
        %v5726 = vpop.f32.mrb[0].mxu0
        %v5727 = vadd.f32 0.0, %v5726
        %5728 = vdwg.mxu0
        %5729 = vmatprep.subr.bf16.mxu0 %v5351
        %5730 = vmatpush1.bf16.msra.mxu0 %v5350
        %5731 = vmatprep.subr.bf16.mxu0 %v5359
        %5732 = vmatpush1.bf16.msra.mxu0 %v5358
        %5733 = vmatprep.subr.bf16.mxu0 %v5367
        %5734 = vmatpush1.bf16.msra.mxu0 %v5366
        %5735 = vmatprep.subr.bf16.mxu0 %v5375
        %5736 = vmatpush1.bf16.msra.mxu0 %v5374
        %5737 = vmatprep.subr.bf16.mxu0 %v5383
        %5738 = vmatpush1.bf16.msra.mxu0 %v5382
        %5739 = vmatprep.subr.bf16.mxu0 %v5391
        %5740 = vmatpush1.bf16.msra.mxu0 %v5390
        %5741 = vmatprep.subr.bf16.mxu0 %v5399
        %5742 = vmatpush1.bf16.msra.mxu0 %v5398
        %5743 = vmatprep.subr.bf16.mxu0 %v5407
        %5744 = vmatpush1.bf16.msra.mxu0 %v5406
        %5745 = vmatprep.subr.bf16.mxu0 %v5415
        %5746 = vmatpush1.bf16.msra.mxu0 %v5414
        %5747 = vmatprep.subr.bf16.mxu0 %v5423
        %5748 = vmatpush1.bf16.msra.mxu0 %v5422
        %5749 = vmatprep.subr.bf16.mxu0 %v5431
        %5750 = vmatpush1.bf16.msra.mxu0 %v5430
        %5751 = vmatprep.subr.bf16.mxu0 %v5439
        %5752 = vmatpush1.bf16.msra.mxu0 %v5438
        %5753 = vmatprep.subr.bf16.mxu0 %v5447
        %5754 = vmatpush1.bf16.msra.mxu0 %v5446
        %5755 = vmatprep.subr.bf16.mxu0 %v5455
        %5756 = vmatpush1.bf16.msra.mxu0 %v5454
        %5757 = vmatprep.subr.bf16.mxu0 %v5463
        %5758 = vmatpush1.bf16.msra.mxu0 %v5462
        %5759 = vmatprep.subr.bf16.mxu0 %v5471
        %5760 = vmatpush1.bf16.msra.mxu0 %v5470
        %5761 = vmatprep.mubr.bf16.mxu0 %v4959
        %5762 = vmatmul.mubr.bf16.gmra.mrb[0].mxu0 %v4958
        %v5763 = vpop.f32.mrb[0].mxu0
        %v5764 = vadd.f32 0.0, %v5763
        %v5765 = vpop.f32.mrb[0].mxu0
        %v5766 = vadd.f32 0.0, %v5765
        %v5767 = vpop.f32.mrb[0].mxu0
        %v5768 = vadd.f32 0.0, %v5767
        %v5769 = vpop.f32.mrb[0].mxu0
        %v5770 = vadd.f32 0.0, %v5769
        %5771 = vdwg.mxu0
        %v5772 = vxor.u32 %v5635, 2147483648
        %v5773 = vxor.u32 %v5637, 2147483648
        %v5774 = vxor.u32 %v5678, 2147483648
        %v5775 = vxor.u32 %v5680, 2147483648
        %v5776 = vxor.u32 %v5639, 2147483648
        %v5777 = vxor.u32 %v5641, 2147483648
        %v5778 = vxor.u32 %v5682, 2147483648
        %v5779 = vxor.u32 %v5684, 2147483648
        %v5780 = vmul.f32 %v5772, 1.442695
        %v5781 = vpow.pop %v5780
        %v5782 = vmul.f32 %v5773, 1.442695
        %v5783 = vpow.pop %v5782
        %v5784 = vmul.f32 %v5774, 1.442695
        %v5785 = vpow.pop %v5784
        %v5786 = vmul.f32 %v5775, 1.442695
        %v5787 = vpow.pop %v5786
        %v5788 = vmul.f32 %v5776, 1.442695
        %v5789 = vpow.pop %v5788
        %v5790 = vmul.f32 %v5777, 1.442695
        %v5791 = vpow.pop %v5790
        %v5792 = vmul.f32 %v5778, 1.442695
        %v5793 = vpow.pop %v5792
        %v5794 = vmul.f32 %v5779, 1.442695
        %v5795 = vpow.pop %v5794
        %v5796 = vadd.f32 %v5781, 1.0
        %v5797 = vadd.f32 %v5783, 1.0
        %v5798 = vadd.f32 %v5785, 1.0
        %v5799 = vadd.f32 %v5787, 1.0
        %v5800 = vadd.f32 %v5789, 1.0
        %v5801 = vadd.f32 %v5791, 1.0
        %v5802 = vadd.f32 %v5793, 1.0
        %v5803 = vadd.f32 %v5795, 1.0
        %v5804 = vrcp.pop %v5796
        %v5805 = vmul.f32 1.0, %v5804
        %v5806 = vrcp.pop %v5797
        %v5807 = vmul.f32 1.0, %v5806
        %v5808 = vrcp.pop %v5798
        %v5809 = vmul.f32 1.0, %v5808
        %v5810 = vrcp.pop %v5799
        %v5811 = vmul.f32 1.0, %v5810
        %v5812 = vrcp.pop %v5800
        %v5813 = vmul.f32 1.0, %v5812
        %v5814 = vrcp.pop %v5801
        %v5815 = vmul.f32 1.0, %v5814
        %v5816 = vrcp.pop %v5802
        %v5817 = vmul.f32 1.0, %v5816
        %v5818 = vrcp.pop %v5803
        %v5819 = vmul.f32 1.0, %v5818
        %v5820 = vmul.f32 %v5635, %v5805
        %v5821 = vmul.f32 %v5637, %v5807
        %v5822 = vmul.f32 %v5678, %v5809
        %v5823 = vmul.f32 %v5680, %v5811
        %v5824 = vmul.f32 %v5639, %v5813
        %v5825 = vmul.f32 %v5641, %v5815
        %v5826 = vmul.f32 %v5682, %v5817
        %v5827 = vmul.f32 %v5684, %v5819
        %v5828 = vmul.f32 %v5820, %v5721
        %v5829 = vmul.f32 %v5821, %v5723
        %v5830 = vmul.f32 %v5822, %v5764
        %v5831 = vmul.f32 %v5823, %v5766
        %v5832 = vmul.f32 %v5824, %v5725
        %v5833 = vmul.f32 %v5825, %v5727
        %v5834 = vmul.f32 %v5826, %v5768
        %v5835 = vmul.f32 %v5827, %v5770
        %v5836 = vpack.c.bf16 %v5832, %v5828
        %v5837 = vpack.c.bf16 %v5833, %v5829
        %v5838 = vpack.c.bf16 %v5834, %v5830
        %v5839 = vpack.c.bf16 %v5835, %v5831
        %v5904 = vunpack.c.l.b16 %v3608
        %v5905 = vunpack.c.h.b16 %v3608
        %v5906 = vunpack.c.l.b16 %v3609
        %v5907 = vunpack.c.h.b16 %v3609
        %v5908 = vunpack.c.l.b16 %v3610
        %v5909 = vunpack.c.h.b16 %v3610
        %v5910 = vunpack.c.l.b16 %v3611
        %v5911 = vunpack.c.h.b16 %v3611
        %v5912 = vunpack.c.l.b16 %v3612
        %v5913 = vunpack.c.h.b16 %v3612
        %v5914 = vunpack.c.l.b16 %v3613
        %v5915 = vunpack.c.h.b16 %v3613
        %v5916 = vunpack.c.l.b16 %v3614
        %v5917 = vunpack.c.h.b16 %v3614
        %v5918 = vunpack.c.l.b16 %v3615
        %v5919 = vunpack.c.h.b16 %v3615
        %v5920 = vunpack.c.l.b16 %v3616
        %v5921 = vunpack.c.h.b16 %v3616
        %v5922 = vunpack.c.l.b16 %v3617
        %v5923 = vunpack.c.h.b16 %v3617
        %v5924 = vunpack.c.l.b16 %v3618
        %v5925 = vunpack.c.h.b16 %v3618
        %v5926 = vunpack.c.l.b16 %v3619
        %v5927 = vunpack.c.h.b16 %v3619
        %v5928 = vunpack.c.l.b16 %v3620
        %v5929 = vunpack.c.h.b16 %v3620
        %v5930 = vunpack.c.l.b16 %v3621
        %v5931 = vunpack.c.h.b16 %v3621
        %v5932 = vunpack.c.l.b16 %v3622
        %v5933 = vunpack.c.h.b16 %v3622
        %v5934 = vunpack.c.l.b16 %v3623
        %v5935 = vunpack.c.h.b16 %v3623
        %v5936 = vunpack.c.l.b16 %v3624
        %v5937 = vunpack.c.h.b16 %v3624
        %v5938 = vunpack.c.l.b16 %v3625
        %v5939 = vunpack.c.h.b16 %v3625
        %v5940 = vunpack.c.l.b16 %v3626
        %v5941 = vunpack.c.h.b16 %v3626
        %v5942 = vunpack.c.l.b16 %v3627
        %v5943 = vunpack.c.h.b16 %v3627
        %v5944 = vunpack.c.l.b16 %v3628
        %v5945 = vunpack.c.h.b16 %v3628
        %v5946 = vunpack.c.l.b16 %v3629
        %v5947 = vunpack.c.h.b16 %v3629
        %v5948 = vunpack.c.l.b16 %v3630
        %v5949 = vunpack.c.h.b16 %v3630
        %v5950 = vunpack.c.l.b16 %v3631
        %v5951 = vunpack.c.h.b16 %v3631
        %v5952 = vunpack.c.l.b16 %v3632
        %v5953 = vunpack.c.h.b16 %v3632
        %v5954 = vunpack.c.l.b16 %v3633
        %v5955 = vunpack.c.h.b16 %v3633
        %v5956 = vunpack.c.l.b16 %v3634
        %v5957 = vunpack.c.h.b16 %v3634
        %v5958 = vunpack.c.l.b16 %v3635
        %v5959 = vunpack.c.h.b16 %v3635
        %v5960 = vunpack.c.l.b16 %v3636
        %v5961 = vunpack.c.h.b16 %v3636
        %v5962 = vunpack.c.l.b16 %v3637
        %v5963 = vunpack.c.h.b16 %v3637
        %v5964 = vunpack.c.l.b16 %v3638
        %v5965 = vunpack.c.h.b16 %v3638
        %v5966 = vunpack.c.l.b16 %v3639
        %v5967 = vunpack.c.h.b16 %v3639
        %v5968 = vunpack.c.l.b16 %v3640
        %v5969 = vunpack.c.h.b16 %v3640
        %v5970 = vunpack.c.l.b16 %v3641
        %v5971 = vunpack.c.h.b16 %v3641
        %v5972 = vunpack.c.l.b16 %v3642
        %v5973 = vunpack.c.h.b16 %v3642
        %v5974 = vunpack.c.l.b16 %v3643
        %v5975 = vunpack.c.h.b16 %v3643
        %v5976 = vunpack.c.l.b16 %v3644
        %v5977 = vunpack.c.h.b16 %v3644
        %v5978 = vunpack.c.l.b16 %v3645
        %v5979 = vunpack.c.h.b16 %v3645
        %v5980 = vunpack.c.l.b16 %v3646
        %v5981 = vunpack.c.h.b16 %v3646
        %v5982 = vunpack.c.l.b16 %v3647
        %v5983 = vunpack.c.h.b16 %v3647
        %v5984 = vunpack.c.l.b16 %v3648
        %v5985 = vunpack.c.h.b16 %v3648
        %v5986 = vunpack.c.l.b16 %v3649
        %v5987 = vunpack.c.h.b16 %v3649
        %v5988 = vunpack.c.l.b16 %v3650
        %v5989 = vunpack.c.h.b16 %v3650
        %v5990 = vunpack.c.l.b16 %v3651
        %v5991 = vunpack.c.h.b16 %v3651
        %v5992 = vunpack.c.l.b16 %v3652
        %v5993 = vunpack.c.h.b16 %v3652
        %v5994 = vunpack.c.l.b16 %v3653
        %v5995 = vunpack.c.h.b16 %v3653
        %v5996 = vunpack.c.l.b16 %v3654
        %v5997 = vunpack.c.h.b16 %v3654
        %v5998 = vunpack.c.l.b16 %v3655
        %v5999 = vunpack.c.h.b16 %v3655
        %v6000 = vunpack.c.l.b16 %v3656
        %v6001 = vunpack.c.h.b16 %v3656
        %v6002 = vunpack.c.l.b16 %v3657
        %v6003 = vunpack.c.h.b16 %v3657
        %v6004 = vunpack.c.l.b16 %v3658
        %v6005 = vunpack.c.h.b16 %v3658
        %v6006 = vunpack.c.l.b16 %v3659
        %v6007 = vunpack.c.h.b16 %v3659
        %v6008 = vunpack.c.l.b16 %v3660
        %v6009 = vunpack.c.h.b16 %v3660
        %v6010 = vunpack.c.l.b16 %v3661
        %v6011 = vunpack.c.h.b16 %v3661
        %v6012 = vunpack.c.l.b16 %v3662
        %v6013 = vunpack.c.h.b16 %v3662
        %v6014 = vunpack.c.l.b16 %v3663
        %v6015 = vunpack.c.h.b16 %v3663
        %v6016 = vunpack.c.l.b16 %v3664
        %v6017 = vunpack.c.h.b16 %v3664
        %v6018 = vunpack.c.l.b16 %v3665
        %v6019 = vunpack.c.h.b16 %v3665
        %v6020 = vunpack.c.l.b16 %v3666
        %v6021 = vunpack.c.h.b16 %v3666
        %v6022 = vunpack.c.l.b16 %v3667
        %v6023 = vunpack.c.h.b16 %v3667
        %v6024 = vunpack.c.l.b16 %v3668
        %v6025 = vunpack.c.h.b16 %v3668
        %v6026 = vunpack.c.l.b16 %v3669
        %v6027 = vunpack.c.h.b16 %v3669
        %v6028 = vunpack.c.l.b16 %v3670
        %v6029 = vunpack.c.h.b16 %v3670
        %v6030 = vunpack.c.l.b16 %v3671
        %v6031 = vunpack.c.h.b16 %v3671
        %v6032 = vpack.c.b16 %v5906, %v5904
        %v6033 = vpack.c.b16 %v5907, %v5905
        %v6034 = vpack.c.b16 %v5910, %v5908
        %v6035 = vpack.c.b16 %v5911, %v5909
        %v6036 = vpack.c.b16 %v5914, %v5912
        %v6037 = vpack.c.b16 %v5915, %v5913
        %v6038 = vpack.c.b16 %v5918, %v5916
        %v6039 = vpack.c.b16 %v5919, %v5917
        %v6040 = vpack.c.b16 %v5922, %v5920
        %v6041 = vpack.c.b16 %v5923, %v5921
        %v6042 = vpack.c.b16 %v5926, %v5924
        %v6043 = vpack.c.b16 %v5927, %v5925
        %v6044 = vpack.c.b16 %v5930, %v5928
        %v6045 = vpack.c.b16 %v5931, %v5929
        %v6046 = vpack.c.b16 %v5934, %v5932
        %v6047 = vpack.c.b16 %v5935, %v5933
        %v6048 = vpack.c.b16 %v5938, %v5936
        %v6049 = vpack.c.b16 %v5939, %v5937
        %v6050 = vpack.c.b16 %v5942, %v5940
        %v6051 = vpack.c.b16 %v5943, %v5941
        %v6052 = vpack.c.b16 %v5946, %v5944
        %v6053 = vpack.c.b16 %v5947, %v5945
        %v6054 = vpack.c.b16 %v5950, %v5948
        %v6055 = vpack.c.b16 %v5951, %v5949
        %v6056 = vpack.c.b16 %v5954, %v5952
        %v6057 = vpack.c.b16 %v5955, %v5953
        %v6058 = vpack.c.b16 %v5958, %v5956
        %v6059 = vpack.c.b16 %v5959, %v5957
        %v6060 = vpack.c.b16 %v5962, %v5960
        %v6061 = vpack.c.b16 %v5963, %v5961
        %v6062 = vpack.c.b16 %v5966, %v5964
        %v6063 = vpack.c.b16 %v5967, %v5965
        %v6064 = vpack.c.b16 %v5970, %v5968
        %v6065 = vpack.c.b16 %v5971, %v5969
        %v6066 = vpack.c.b16 %v5974, %v5972
        %v6067 = vpack.c.b16 %v5975, %v5973
        %v6068 = vpack.c.b16 %v5978, %v5976
        %v6069 = vpack.c.b16 %v5979, %v5977
        %v6070 = vpack.c.b16 %v5982, %v5980
        %v6071 = vpack.c.b16 %v5983, %v5981
        %v6072 = vpack.c.b16 %v5986, %v5984
        %v6073 = vpack.c.b16 %v5987, %v5985
        %v6074 = vpack.c.b16 %v5990, %v5988
        %v6075 = vpack.c.b16 %v5991, %v5989
        %v6076 = vpack.c.b16 %v5994, %v5992
        %v6077 = vpack.c.b16 %v5995, %v5993
        %v6078 = vpack.c.b16 %v5998, %v5996
        %v6079 = vpack.c.b16 %v5999, %v5997
        %v6080 = vpack.c.b16 %v6002, %v6000
        %v6081 = vpack.c.b16 %v6003, %v6001
        %v6082 = vpack.c.b16 %v6006, %v6004
        %v6083 = vpack.c.b16 %v6007, %v6005
        %v6084 = vpack.c.b16 %v6010, %v6008
        %v6085 = vpack.c.b16 %v6011, %v6009
        %v6086 = vpack.c.b16 %v6014, %v6012
        %v6087 = vpack.c.b16 %v6015, %v6013
        %v6088 = vpack.c.b16 %v6018, %v6016
        %v6089 = vpack.c.b16 %v6019, %v6017
        %v6090 = vpack.c.b16 %v6022, %v6020
        %v6091 = vpack.c.b16 %v6023, %v6021
        %v6092 = vpack.c.b16 %v6026, %v6024
        %v6093 = vpack.c.b16 %v6027, %v6025
        %v6094 = vpack.c.b16 %v6030, %v6028
        %v6095 = vpack.c.b16 %v6031, %v6029
        %6160 = vmatprep.subr.bf16.mxu0 %v6033
        %6161 = vmatpush1.bf16.msra.mxu0 %v6032
        %6162 = vmatprep.subr.bf16.mxu0 %v6035
        %6163 = vmatpush1.bf16.msra.mxu0 %v6034
        %6164 = vmatprep.subr.bf16.mxu0 %v6037
        %6165 = vmatpush1.bf16.msra.mxu0 %v6036
        %6166 = vmatprep.subr.bf16.mxu0 %v6039
        %6167 = vmatpush1.bf16.msra.mxu0 %v6038
        %6168 = vmatprep.subr.bf16.mxu0 %v6041
        %6169 = vmatpush1.bf16.msra.mxu0 %v6040
        %6170 = vmatprep.subr.bf16.mxu0 %v6043
        %6171 = vmatpush1.bf16.msra.mxu0 %v6042
        %6172 = vmatprep.subr.bf16.mxu0 %v6045
        %6173 = vmatpush1.bf16.msra.mxu0 %v6044
        %6174 = vmatprep.subr.bf16.mxu0 %v6047
        %6175 = vmatpush1.bf16.msra.mxu0 %v6046
        %6176 = vmatprep.subr.bf16.mxu0 %v6049
        %6177 = vmatpush1.bf16.msra.mxu0 %v6048
        %6178 = vmatprep.subr.bf16.mxu0 %v6051
        %6179 = vmatpush1.bf16.msra.mxu0 %v6050
        %6180 = vmatprep.subr.bf16.mxu0 %v6053
        %6181 = vmatpush1.bf16.msra.mxu0 %v6052
        %6182 = vmatprep.subr.bf16.mxu0 %v6055
        %6183 = vmatpush1.bf16.msra.mxu0 %v6054
        %6184 = vmatprep.subr.bf16.mxu0 %v6057
        %6185 = vmatpush1.bf16.msra.mxu0 %v6056
        %6186 = vmatprep.subr.bf16.mxu0 %v6059
        %6187 = vmatpush1.bf16.msra.mxu0 %v6058
        %6188 = vmatprep.subr.bf16.mxu0 %v6061
        %6189 = vmatpush1.bf16.msra.mxu0 %v6060
        %6190 = vmatprep.subr.bf16.mxu0 %v6063
        %6191 = vmatpush1.bf16.msra.mxu0 %v6062
        %6192 = vmatprep.mubr.bf16.mxu0 %v5837
        %6193 = vmatmul.mubr.bf16.gmra.mrb[0].mxu0 %v5836
        %v6194 = vpop.f32.mrb[0].mxu0
        %v6195 = vadd.f32 0.0, %v6194
        %v6196 = vpop.f32.mrb[0].mxu0
        %v6197 = vadd.f32 0.0, %v6196
        %v6198 = vpop.f32.mrb[0].mxu0
        %v6199 = vadd.f32 0.0, %v6198
        %v6200 = vpop.f32.mrb[0].mxu0
        %v6201 = vadd.f32 0.0, %v6200
        %6202 = vdwg.mxu0
        %6203 = vmatprep.subr.bf16.mxu0 %v6065
        %6204 = vmatpush1.bf16.msra.mxu0 %v6064
        %6205 = vmatprep.subr.bf16.mxu0 %v6067
        %6206 = vmatpush1.bf16.msra.mxu0 %v6066
        %6207 = vmatprep.subr.bf16.mxu0 %v6069
        %6208 = vmatpush1.bf16.msra.mxu0 %v6068
        %6209 = vmatprep.subr.bf16.mxu0 %v6071
        %6210 = vmatpush1.bf16.msra.mxu0 %v6070
        %6211 = vmatprep.subr.bf16.mxu0 %v6073
        %6212 = vmatpush1.bf16.msra.mxu0 %v6072
        %6213 = vmatprep.subr.bf16.mxu0 %v6075
        %6214 = vmatpush1.bf16.msra.mxu0 %v6074
        %6215 = vmatprep.subr.bf16.mxu0 %v6077
        %6216 = vmatpush1.bf16.msra.mxu0 %v6076
        %6217 = vmatprep.subr.bf16.mxu0 %v6079
        %6218 = vmatpush1.bf16.msra.mxu0 %v6078
        %6219 = vmatprep.subr.bf16.mxu0 %v6081
        %6220 = vmatpush1.bf16.msra.mxu0 %v6080
        %6221 = vmatprep.subr.bf16.mxu0 %v6083
        %6222 = vmatpush1.bf16.msra.mxu0 %v6082
        %6223 = vmatprep.subr.bf16.mxu0 %v6085
        %6224 = vmatpush1.bf16.msra.mxu0 %v6084
        %6225 = vmatprep.subr.bf16.mxu0 %v6087
        %6226 = vmatpush1.bf16.msra.mxu0 %v6086
        %6227 = vmatprep.subr.bf16.mxu0 %v6089
        %6228 = vmatpush1.bf16.msra.mxu0 %v6088
        %6229 = vmatprep.subr.bf16.mxu0 %v6091
        %6230 = vmatpush1.bf16.msra.mxu0 %v6090
        %6231 = vmatprep.subr.bf16.mxu0 %v6093
        %6232 = vmatpush1.bf16.msra.mxu0 %v6092
        %6233 = vmatprep.subr.bf16.mxu0 %v6095
        %6234 = vmatpush1.bf16.msra.mxu0 %v6094
        %6235 = vmatprep.mubr.bf16.mxu0 %v5839
        %6236 = vmatmul.mubr.bf16.gmra.mrb[0].mxu0 %v5838
        %v6237 = vpop.f32.mrb[0].mxu0
        %v6238 = vadd.f32 %v6195, %v6237
        %v6239 = vpop.f32.mrb[0].mxu0
        %v6240 = vadd.f32 %v6197, %v6239
        %v6241 = vpop.f32.mrb[0].mxu0
        %v6242 = vadd.f32 %v6199, %v6241
        %v6243 = vpop.f32.mrb[0].mxu0
        %v6244 = vadd.f32 %v6201, %v6243
        %6245 = vdwg.mxu0
        %v6246 = vadd.f32 %v4919, %v6238
        %v6247 = vadd.f32 %v4920, %v6240
        %v6248 = vadd.f32 %v4921, %v6242
        %v6249 = vadd.f32 %v4922, %v6244
        %6250 = vst [vmem:[#allocation2] sm:$0xff] %v6246
        %6251 = vst [vmem:[#allocation2 + $0x8] sm:$0xff] %v6247
        %6252 = vst [vmem:[#allocation2 + $0x10] sm:$0xff] %v6248
        %6253 = vst [vmem:[#allocation2 + $0x18] sm:$0xff] %v6249
        %p6254 = scmp.eq.s32.totalorder %s22, 6
        // Predicated region
        $region81: #{fwd.1} parent=47 // pred_check
          %p6255 = pneg %p6254
        $region82: #{fwd.1} parent=47 // pred_check_branch
          %6257 = sbr.rel (%p6255) target = $region84
        $region83: #{fwd.1} parent=47 // pred_region
          %6258 = vst [vmem:[#allocation14] sm:$0xff] %v6246
          %6259 = vst [vmem:[#allocation14 + $0x8] sm:$0xff] %v6247
          %6260 = vst [vmem:[#allocation14 + $0x10] sm:$0xff] %v6248
          %6261 = vst [vmem:[#allocation14 + $0x18] sm:$0xff] %v6249
        $region84: #{fwd.1} parent=47 // pred_fallthru
          _
        // Predicated region
        $region85: #{fwd.1} parent=47 // pred_check
          %p6262 = pneg %p197
        $region86: #{fwd.1} parent=47 // pred_check_branch
          %6264 = sbr.rel (%p6262) target = $region88
        $region87: #{fwd.1} parent=47 // pred_region
          %s6266 = ssub.s32 512, 512
          %6267 = vsyncadd [#allocation5], %s6266
          %s6268 = sshll.u32 [#allocation14], 4
          %s6269 = int_to_ptr.vmem [resolvable:$true] %s6268
          %6274 = dma.vmem_to_hbm [thread:$0]  %s6269, 512, %s7, [#allocation5], 256, 256, 16
        $region88: #{fwd.1} parent=47 // pred_fallthru
          _
        // Predicated region
        $region89: #{fwd.1} parent=47 // pred_check
          %p6275 = pneg %p197
        $region90: #{fwd.1} parent=47 // pred_check_branch
          %6277 = sbr.rel (%p6275) target = $region92
        $region91: #{fwd.1} parent=47 // pred_region
          %6278 = dma.done [#allocation5], 512
        $region92: #{fwd.1} parent=47 // pred_fallthru
          _
      $region48: #{fwd.1} parent=5 // pred_fallthru
        _
      %p6279 = scmp.le.s32.totalorder 2, %s17
      // Predicated region
      $region93: #{fwd.1} parent=5 // pred_check
        %p6280 = pneg %p6279
      $region94: #{fwd.1} parent=5 // pred_check_branch
        %6282 = sbr.rel (%p6280) target = $region96
      $region95: #{fwd.1} parent=5 // pred_region
        %s6283 = ssub.s32 %s17, 2
      $region96: #{fwd.1} parent=5 // pred_fallthru
        _
    $region6: #{fwd.1} parent=1 // loop_footer
      %s21 = sadd.s32 1, %s17
    $region7: #{fwd.1} parent=1 // loop_footer_branch
      %16 = sbr.rel target = $region3
    $region8: #{fwd.1} parent=1 // loop_exit
      _
    %6284 = vsyncpa [#allocation4], 1
    %s6285 = scalar_lea.sflag [#allocation4], 1
    %6286 = vsyncpa %s6285, 1
    %6287 = vsyncpa [#allocation7], 1
    %6288 = vsyncpa [#allocation10], 1
    %6289 = vsyncpa [#allocation5], 1
    %s6290 = scalar_lea.sflag [#allocation5], 1
    %6291 = vsyncpa %s6290, 1

</llo_original>
